<compile_context>
chip_gen: v7x
topology: tpu7x:2x2x1
jax: 0.10.0
libtpu: 0.0.40
codegen_flags: <defaults>
</compile_context>

<pallas_src>
import functools

import numpy as np
import jax
import jax.numpy as jnp
from jax.experimental import pallas as pl
from jax.experimental.pallas import tpu as pltpu


# ---------------------------------------------------------------------------
# Fused kernel: y = x @ W, per-voxel max/min over points, per-tile (sum, sum^2)
# ---------------------------------------------------------------------------
def _pfn_fused_kernel(x_ref, w_ref, minmax_ref, stats_ref, *, fast_matmul):
    x = x_ref[...]                                    # (tv, P, Cin)
    tv, p, cin = x.shape
    xf = x.reshape(tv * p, cin)
    w = w_ref[...]                                    # (Cin, Cout)
    if fast_matmul:
        xf = xf.astype(jnp.bfloat16)
        w = w.astype(jnp.bfloat16)
    y = jnp.dot(xf, w, preferred_element_type=jnp.float32)   # (tv*P, Cout) on the MXU
    cout = y.shape[1]

    # Per-voxel extrema over the point axis (needed for the fused relu/max finish).
    y3 = y.reshape(tv, p, cout)
    ymax = jnp.max(y3, axis=1)                        # (tv, Cout)
    ymin = jnp.min(y3, axis=1)                        # (tv, Cout)
    minmax_ref[...] = jnp.concatenate([ymax, ymin], axis=-1)   # (tv, 2*Cout) lane-dense

    # Per-tile partial BatchNorm statistics (padded voxels contribute exactly 0).
    psum = jnp.sum(y, axis=0, keepdims=True)          # (1, Cout)
    pssq = jnp.sum(y * y, axis=0, keepdims=True)      # (1, Cout)
    stats_ref[...] = jnp.concatenate([psum, pssq], axis=-1)[None]   # (1, 1, 2*Cout)


# ---------------------------------------------------------------------------
# Wrapper
# ---------------------------------------------------------------------------
def pfn_layer4_chanl(inputs, params, *, tile_voxels=256, eps=1e-3,
                     fast_matmul=False, x_buffer_count=None,
                     vmem_limit_bytes=32 * 1024 * 1024):
    """inputs: (N, P, Cin) float32.  Returns x_max: (N, 1, Cout) float32."""
    N, P, Cin = inputs.shape
    wlin = params["wlin"].astype(jnp.float32)         # (Cin, Cout) = nn.Linear weight.T
    Cout = wlin.shape[1]
    gamma = params["gamma"].reshape(Cout).astype(jnp.float32)
    beta = params["beta"].reshape(Cout).astype(jnp.float32)

    # ---- voxel tiling --------------------------------------------------------
    tv = int(min(tile_voxels, max(N, 1)))
    tv = max(8, (tv // 8) * 8)                        # keep sublane dim 8-aligned
    n_tiles = -(-N // tv)
    if n_tiles == 1 and N > 8:
        # v7x has 2 TensorCores: make sure the "parallel" voxel axis has >= 2 tiles.
        tv = max(8, ((-(-N // 2) + 7) // 8) * 8)
        n_tiles = -(-N // tv)
    N_pad = n_tiles * tv
    x = inputs if N_pad == N else jnp.pad(inputs, ((0, N_pad - N), (0, 0), (0, 0)))
    # Padding correctness relies on the linear layer having no bias (use_norm=True):
    # zero voxels -> y == 0 -> no contribution to the partial sums.

    x_spec_kwargs = {}
    if x_buffer_count is not None and x_buffer_count != 2:
        x_spec_kwargs["pipeline_mode"] = pl.Buffered(x_buffer_count)   # e.g. 3 on v5e

    minmax, stats = pl.pallas_call(
        functools.partial(_pfn_fused_kernel, fast_matmul=fast_matmul),
        out_shape=(
            jax.ShapeDtypeStruct((N_pad, 2 * Cout), jnp.float32),        # [max | min]
            jax.ShapeDtypeStruct((n_tiles, 1, 2 * Cout), jnp.float32),   # [sum | sum^2]
        ),
        grid_spec=pltpu.PrefetchScalarGridSpec(
            num_scalar_prefetch=0,
            grid=(n_tiles,),
            in_specs=[
                pl.BlockSpec((tv, P, Cin), lambda i: (i, 0, 0), **x_spec_kwargs),
                pl.BlockSpec((Cin, Cout), lambda i: (0, 0)),
            ],
            out_specs=[
                pl.BlockSpec((tv, 2 * Cout), lambda i: (i, 0)),
                pl.BlockSpec((1, 1, 2 * Cout), lambda i: (i, 0, 0)),
            ],
        ),
        compiler_params=pltpu.CompilerParams(
            dimension_semantics=("parallel",),        # no accumulators -> megacore-safe
            vmem_limit_bytes=vmem_limit_bytes,        # safe on v5e/v6e/v7x
        ),
    )(x, wlin)

    # ---- tiny host-side epilogue (elementwise, fused by XLA) ----------------
    cnt = jnp.float32(N * P)                          # true sample count (no padding)
    s = jnp.sum(stats[:, 0, :Cout], axis=0)           # (Cout,)
    ssq = jnp.sum(stats[:, 0, Cout:], axis=0)         # (Cout,)
    mean = s / cnt
    # TODO(synk): one-pass E[y^2]-E[y]^2 can cancel when |mean| >> std (torch uses a
    # centered two-pass variance); guarded with max(.,0), fine at the 1e-4 tolerance.
    var = jnp.maximum(ssq / cnt - mean * mean, 0.0)
    inv_std = jax.lax.rsqrt(var + eps)
    a = gamma * inv_std                               # folded BN scale  (Cout,)
    b = beta - mean * a                               # folded BN shift  (Cout,)

    ymax = minmax[:N, :Cout]
    ymin = minmax[:N, Cout:]
    # relu(a*y + b) is monotone in y: the per-voxel max over points is attained at
    # max_p(y) when a >= 0 and at min_p(y) when a < 0.
    sel = jnp.where(a >= 0.0, ymax, ymin)
    out = jnp.maximum(sel * a + b, 0.0)
    return out.reshape(N, 1, Cout)                    # keepdim=True like torch


# ---------------------------------------------------------------------------
# Pure-JAX reference (mirrors the PyTorch forward output)
# ---------------------------------------------------------------------------
def _reference(inputs, params, eps=1e-3):
    y = inputs @ params["wlin"]                       # (N, P, Cout)
    mean = jnp.mean(y, axis=(0, 1))
    var = jnp.mean((y - mean) ** 2, axis=(0, 1))
    xn = (y - mean) / jnp.sqrt(var + eps) * params["gamma"][0] + params["beta"][0]
    xr = jnp.maximum(xn, 0.0)
    return jnp.max(xr, axis=1, keepdims=True)         # (N, 1, Cout)


if __name__ == "__main__":
    # Small deterministic shapes: n_voxels=200 (forces padding + a 2-tile grid),
    # n_points=16, in_channels=32, out_channels=64.
    N, P, Cin, Cout = 200, 16, 32, 64
    key = jax.random.PRNGKey(0)
    k0, k1, k2, k3 = jax.random.split(key, 4)

    inputs = jax.random.normal(k0, (N, P, Cin), dtype=jnp.float32)
    params = {
        "wlin": 0.1 * jax.random.normal(k1, (Cin, Cout), dtype=jnp.float32),
        "gamma": 1.0 + 0.1 * jax.random.normal(k2, (1, Cout), dtype=jnp.float32),
        "beta": 0.1 * jax.random.normal(k3, (1, Cout), dtype=jnp.float32),
    }

    x_max = jax.block_until_ready(pfn_layer4_chanl(inputs, params))
    x_max_ref = _reference(inputs, params)

    np.testing.assert_allclose(np.asarray(x_max), np.asarray(x_max_ref),
                               rtol=1e-4, atol=1e-4)
    print("KERNEL_OK")
</pallas_src>

<mosaic_0001>
module attributes {stable_mosaic.version = 11 : i64} {
  func.func @_pfn_fused_kernel(%arg0: i32, %arg1: memref<104x16x32xf32, #tpu.memory_space<vmem>>, %arg2: memref<32x64xf32, #tpu.memory_space<vmem>>, %arg3: memref<104x128xf32, #tpu.memory_space<vmem>>, %arg4: memref<1x1x128xf32, #tpu.memory_space<vmem>>) attributes {dimension_semantics = [#tpu.dimension_semantics<parallel>], iteration_bounds = array<i64: 2>, scalar_prefetch = 0 : i64, scratch_operands = 0 : i64, tpu.core_type = #tpu.core_type<tc>, window_params = [{transform_indices = @transform_0, window_bounds = array<i64: 104, 16, 32>}, {pipeline_mode = #tpu.pipeline_mode<synchronous>, transform_indices = @transform_1, window_bounds = array<i64: 32, 64>}, {transform_indices = @transform_2, window_bounds = array<i64: 104, 128>}, {transform_indices = @transform_3, window_bounds = array<i64: 1, 1, 128>}]} {
    %c0 = arith.constant 0 : index
    %c0_0 = arith.constant 0 : index
    %c0_1 = arith.constant 0 : index
    %0 = vector.load %arg1[%c0, %c0_0, %c0_1] : memref<104x16x32xf32, #tpu.memory_space<vmem>>, vector<104x16x32xf32>
    %1 = vector.shape_cast %0 : vector<104x16x32xf32> to vector<1664x32xf32>
    %c0_2 = arith.constant 0 : index
    %c0_3 = arith.constant 0 : index
    %2 = vector.load %arg2[%c0_2, %c0_3] : memref<32x64xf32, #tpu.memory_space<vmem>>, vector<32x64xf32>
    %cst = arith.constant dense<0.000000e+00> : vector<1664x64xf32>
    %3 = tpu.matmul %1, %2, %cst {dimension_numbers = #tpu.dot_dimension_numbers<[1], [0], [0], [1], [0, 0, 1, 1], [], []>} : vector<1664x32xf32>, vector<32x64xf32>, vector<1664x64xf32> -> vector<1664x64xf32>
    %4 = vector.shape_cast %3 : vector<1664x64xf32> to vector<104x16x64xf32>
    %cst_4 = arith.constant dense<0xFF800000> : vector<104x64xf32>
    %5 = vector.multi_reduction <maximumf>, %4, %cst_4 [1] : vector<104x16x64xf32> to vector<104x64xf32>
    %cst_5 = arith.constant dense<0x7F800000> : vector<104x64xf32>
    %6 = vector.multi_reduction <minimumf>, %4, %cst_5 [1] : vector<104x16x64xf32> to vector<104x64xf32>
    %7 = tpu.concatenate %5, %6 in 1 : vector<104x64xf32>, vector<104x64xf32> -> vector<104x128xf32>
    %c0_6 = arith.constant 0 : index
    %c0_7 = arith.constant 0 : index
    %8 = vector.load %arg3[%c0_6, %c0_7] : memref<104x128xf32, #tpu.memory_space<vmem>>, vector<104x128xf32>
    tpu.vector_store %arg3[%c0_6, %c0_7], %7 {strides = array<i32>} : memref<104x128xf32, #tpu.memory_space<vmem>>, vector<104x128xf32>,
    %cst_8 = arith.constant dense<0.000000e+00> : vector<64xf32>
    %9 = vector.multi_reduction <add>, %3, %cst_8 [0] : vector<1664x64xf32> to vector<64xf32>
    %10 = vector.shape_cast %9 : vector<64xf32> to vector<1x64xf32>
    %11 = arith.mulf %3, %3 : vector<1664x64xf32>
    %cst_9 = arith.constant dense<0.000000e+00> : vector<64xf32>
    %12 = vector.multi_reduction <add>, %11, %cst_9 [0] : vector<1664x64xf32> to vector<64xf32>
    %13 = vector.shape_cast %12 : vector<64xf32> to vector<1x64xf32>
    %14 = tpu.concatenate %10, %13 in 1 : vector<1x64xf32>, vector<1x64xf32> -> vector<1x128xf32>
    %15 = vector.shape_cast %14 : vector<1x128xf32> to vector<1x1x128xf32>
    %c0_10 = arith.constant 0 : index
    %c0_11 = arith.constant 0 : index
    %c0_12 = arith.constant 0 : index
    %16 = vector.load %arg4[%c0_10, %c0_11, %c0_12] : memref<1x1x128xf32, #tpu.memory_space<vmem>>, vector<1x1x128xf32>
    tpu.vector_store %arg4[%c0_10, %c0_11, %c0_12], %15 {strides = array<i32>} : memref<1x1x128xf32, #tpu.memory_space<vmem>>, vector<1x1x128xf32>,
    return
  }
  func.func @transform_0(%arg0: i32) -> (i32, i32, i32) {
    %c0_i32 = arith.constant 0 : i32
    %c0_i32_0 = arith.constant 0 : i32
    %c0_i32_1 = arith.constant 0 : i32
    return %arg0, %c0_i32, %c0_i32_0 : i32, i32, i32
  }
  func.func @transform_1(%arg0: i32) -> (i32, i32) {
    %c0_i32 = arith.constant 0 : i32
    %c0_i32_0 = arith.constant 0 : i32
    %c0_i32_1 = arith.constant 0 : i32
    return %c0_i32, %c0_i32_0 : i32, i32
  }
  func.func @transform_2(%arg0: i32) -> (i32, i32) {
    %c0_i32 = arith.constant 0 : i32
    %c0_i32_0 = arith.constant 0 : i32
    return %arg0, %c0_i32 : i32, i32
  }
  func.func @transform_3(%arg0: i32) -> (i32, i32, i32) {
    %c0_i32 = arith.constant 0 : i32
    %c0_i32_0 = arith.constant 0 : i32
    %c0_i32_1 = arith.constant 0 : i32
    return %arg0, %c0_i32, %c0_i32_0 : i32, i32, i32
  }
}

</mosaic_0001>

<llo_original>
// kernel: tpu_custom_call.1
$region0: #{tpu_custom_call.1}
  #allocation0 [shape = 'u32[]', space=smem, size = 0x4, offset = 0x4, fixed_abs, tag = 'smem constant byte address 0x4 - core index']
  #allocation1 [shape = 'u32[144,128]{1,0:T(1,128)}', space=vmem, size = 0x12000, scoped, tag = 'internal scratch']
  %s0 = inlined_call_operand.vmem [shape: f32[208,16,32], index: 0, kind: input, shape index: {}]
  %s1 = inlined_call_operand.vmem [shape: f32[32,64], index: 1, kind: input, shape index: {}]
  %s2 = inlined_call_operand.hbm [shape: f32[208,128], index: 2, kind: output, shape index: {0}]
  %s3 = inlined_call_operand.hbm [shape: f32[2,1,128], index: 3, kind: output, shape index: {1}]
  %4 = xla_tuple %s2, %s3
  %s5 = sld [smem:[#allocation0]]
  $region49: #{tpu_custom_call.1} parent=0
    _
  %s7 = ssub.s32 1, %s5
  %s8 = scalar_select 0, %s7, %s5
  $region1: #{tpu_custom_call.1} parent=0
    #allocation2 [shape = 'u8[106496]{0}', space=vmem, size = 0x1a000, scoped, tag = 'output window, operand 0']
    #allocation3 [shape = 's32[2]{0}', space=sflag, size = 0x8, scoped, tag = 'scoped memory for tpu_custom_call.1']
    #allocation4 [shape = 'u8[1024]{0}', space=vmem, size = 0x400, scoped, tag = 'output window, operand 1']
    #allocation5 [shape = 's32[2]{0}', space=sflag, size = 0x8, scoped, tag = 'scoped memory for tpu_custom_call.1']
    %9 = vsyncpa [#allocation3], 0
    %s10 = scalar_lea.sflag [#allocation3], 1
    %11 = vsyncpa %s10, 0
    %12 = vsyncpa [#allocation5], 0
    %s13 = scalar_lea.sflag [#allocation5], 1
    %14 = vsyncpa %s13, 0
    loop: start=0, step=1, limit=4
    $region2: #{tpu_custom_call.1} parent=1 // loop_pre_header
      _
    $region3: #{tpu_custom_call.1} parent=1 // loop_header
      %s16 = sphi 0, %s20
      %p17 = scmp.ge.s32.totalorder %s16, 4
      %s26 = sphi 0, %s28
      %s29 = sphi 0, %s26
      %s30 = sphi 0, %s29
      %s46 = sphi 0, %s30
      %s50 = sphi 0, %s50
      %s52 = sphi 0, %s50
      %s53 = sphi 0, %s52
      %s67 = sphi 0, %s53
      %s73 = sphi 0, %s75
      %s76 = sphi 0, %s73
      %s77 = sphi 0, %s76
      %s93 = sphi 0, %s77
      %s99 = sphi 0, %s101
      %s102 = sphi 0, %s99
      %s103 = sphi 0, %s102
      %s119 = sphi 0, %s103
    $region4: #{tpu_custom_call.1} parent=1 // loop_header_branch
      %19 = sbr.rel (%p17) target = $region8
    $region5: #{tpu_custom_call.1} parent=1 // loop_body
      %s21 = ssub.s32 %s16, 1
      %s22 = ssub.s32 %s16, 2
      %s23 = sadd.s32 %s16, 1
      %s24 = ssub.s32 %s16, %s23
      %p25 = scmp.eq.s32.totalorder %s24, 0
      %s27 = sadd.s32 %s26, 1
      %s28 = scalar_select %p25, %s26, %s27
      %p31 = pneg %p25
      %p32 = scmp.eq.s32.totalorder %s16, 1
      %p33 = por %p31, %p32
      %p34 = scmp.ne.s32.totalorder %s26, %s29
      %p35 = scmp.eq.s32.totalorder %s16, 0
      %p36 = por %p34, %p35
      %p37 = scmp.ne.s32.totalorder %s26, %s29
      %p38 = scmp.eq.s32.totalorder %s21, 1
      %p39 = por %p37, %p38
      %p40 = scmp.ne.s32.totalorder %s29, %s30
      %p41 = scmp.eq.s32.totalorder %s21, 0
      %p42 = por %p40, %p41
      %p43 = scmp.ne.s32.totalorder %s29, %s30
      %p44 = scmp.eq.s32.totalorder %s22, 1
      %p45 = por %p43, %p44
      %p47 = scmp.ne.s32.totalorder %s30, %s46
      %p48 = scmp.eq.s32.totalorder %s22, 0
      %p49 = por %p47, %p48
      %s51 = sadd.s32 %s50, 1
      %p54 = scmp.eq.s32.totalorder %s16, 1
      %p55 = scmp.ne.s32.totalorder %s50, %s52
      %p56 = scmp.eq.s32.totalorder %s16, 0
      %p57 = por %p55, %p56
      %p58 = scmp.ne.s32.totalorder %s50, %s52
      %p59 = scmp.eq.s32.totalorder %s21, 1
      %p60 = por %p58, %p59
      %p61 = scmp.ne.s32.totalorder %s52, %s53
      %p62 = scmp.eq.s32.totalorder %s21, 0
      %p63 = por %p61, %p62
      %p64 = scmp.ne.s32.totalorder %s52, %s53
      %p65 = scmp.eq.s32.totalorder %s22, 1
      %p66 = por %p64, %p65
      %p68 = scmp.ne.s32.totalorder %s53, %s67
      %p69 = scmp.eq.s32.totalorder %s22, 0
      %p70 = por %p68, %p69
      %s71 = ssub.s32 %s16, %s23
      %p72 = scmp.eq.s32.totalorder %s71, 0
      %s74 = sadd.s32 %s73, 1
      %s75 = scalar_select %p72, %s73, %s74
      %p78 = pneg %p72
      %p79 = scmp.eq.s32.totalorder %s16, 1
      %p80 = por %p78, %p79
      %p81 = scmp.ne.s32.totalorder %s73, %s76
      %p82 = scmp.eq.s32.totalorder %s16, 0
      %p83 = por %p81, %p82
      %p84 = scmp.ne.s32.totalorder %s73, %s76
      %p85 = scmp.eq.s32.totalorder %s21, 1
      %p86 = por %p84, %p85
      %p87 = scmp.ne.s32.totalorder %s76, %s77
      %p88 = scmp.eq.s32.totalorder %s21, 0
      %p89 = por %p87, %p88
      %p90 = scmp.ne.s32.totalorder %s76, %s77
      %p91 = scmp.eq.s32.totalorder %s22, 1
      %p92 = por %p90, %p91
      %p94 = scmp.ne.s32.totalorder %s77, %s93
      %p95 = scmp.eq.s32.totalorder %s22, 0
      %p96 = por %p94, %p95
      %s97 = ssub.s32 %s16, %s23
      %p98 = scmp.eq.s32.totalorder %s97, 0
      %s100 = sadd.s32 %s99, 1
      %s101 = scalar_select %p98, %s99, %s100
      %p104 = pneg %p98
      %p105 = scmp.eq.s32.totalorder %s16, 1
      %p106 = por %p104, %p105
      %p107 = scmp.ne.s32.totalorder %s99, %s102
      %p108 = scmp.eq.s32.totalorder %s16, 0
      %p109 = por %p107, %p108
      %p110 = scmp.ne.s32.totalorder %s99, %s102
      %p111 = scmp.eq.s32.totalorder %s21, 1
      %p112 = por %p110, %p111
      %p113 = scmp.ne.s32.totalorder %s102, %s103
      %p114 = scmp.eq.s32.totalorder %s21, 0
      %p115 = por %p113, %p114
      %p116 = scmp.ne.s32.totalorder %s102, %s103
      %p117 = scmp.eq.s32.totalorder %s22, 1
      %p118 = por %p116, %p117
      %p120 = scmp.ne.s32.totalorder %s103, %s119
      %p121 = scmp.eq.s32.totalorder %s22, 0
      %p122 = por %p120, %p121
      %p123 = scmp.le.s32.totalorder 1, %s16
      %p124 = scmp.lt.s32.totalorder %s16, 3
      %p125 = pnand %p123, %p124
      %p126 = pneg %p125
      // Predicated region
      $region9: #{tpu_custom_call.1} parent=5 // pred_check
        _
      $region10: #{tpu_custom_call.1} parent=5 // pred_check_branch
        %128 = sbr.rel (%p125) target = $region12
      $region11: #{tpu_custom_call.1} parent=5 // pred_region
        %s129 = ssub.s32 %s16, 1
        // Predicated region
        $region13: #{tpu_custom_call.1} parent=11 // pred_check
          %p130 = pneg %p63
        $region14: #{tpu_custom_call.1} parent=11 // pred_check_branch
          %132 = sbr.rel (%p130) target = $region16
        $region15: #{tpu_custom_call.1} parent=11 // pred_region
          _
        $region16: #{tpu_custom_call.1} parent=11 // pred_fallthru
          _
      $region12: #{tpu_custom_call.1} parent=5 // pred_fallthru
        _
      %p133 = scmp.lt.s32.totalorder %s16, 2
      // Predicated region
      $region17: #{tpu_custom_call.1} parent=5 // pred_check
        %p134 = pneg %p133
      $region18: #{tpu_custom_call.1} parent=5 // pred_check_branch
        %136 = sbr.rel (%p134) target = $region20
      $region19: #{tpu_custom_call.1} parent=5 // pred_region
        // Predicated region
        $region21: #{tpu_custom_call.1} parent=19 // pred_check
          %p137 = pneg %p36
        $region22: #{tpu_custom_call.1} parent=19 // pred_check_branch
          %139 = sbr.rel (%p137) target = $region24
        $region23: #{tpu_custom_call.1} parent=19 // pred_region
          %s140 = smul.u32 104, %s16
          %p141 = scmp.lt.s32.totalorder %s140, 207
          %s142 = scalar_select %p141, %s140, 207
          %s143 = smul.addr %s142, 2
          %s144 = smul.addr %s143, 8
          %s145 = scalar_lea.vmem %s0, %s144
          %s146 = smul.u32 104, %s16
        $region24: #{tpu_custom_call.1} parent=19 // pred_fallthru
          _
      $region20: #{tpu_custom_call.1} parent=5 // pred_fallthru
        _
      %p147 = scmp.le.s32.totalorder 1, %s16
      %p148 = scmp.lt.s32.totalorder %s16, 3
      %p149 = pnand %p147, %p148
      %p150 = pneg %p149
      // Predicated region
      $region25: #{tpu_custom_call.1} parent=5 // pred_check
        _
      $region26: #{tpu_custom_call.1} parent=5 // pred_check_branch
        %152 = sbr.rel (%p149) target = $region28
      $region27: #{tpu_custom_call.1} parent=5 // pred_region
        %s153 = ssub.s32 %s16, 1
        %s154 = smul.u32 104, %s21
        %p155 = scmp.lt.s32.totalorder %s154, 207
        %s156 = scalar_select %p155, %s154, 207
        %s157 = smul.addr %s156, 2
        %s158 = smul.addr %s157, 8
        %s159 = scalar_lea.vmem %s0, %s158
        %p160 = pneg %p42
        %p161 = pneg %p39
        %p162 = pneg %p63
        %p163 = pneg %p60
        %p164 = pneg %p89
        %p165 = pneg %p86
        %s166 = sand.u32 %s76, 1
        %s167 = scalar_lea.sflag [#allocation3], %s166
        %s168 = sand.u32 %s76, 1
        %s169 = smul.addr %s168, 104
        %s170 = scalar_lea.vmem [#allocation2], %s169
        %p171 = pneg %p115
        %p172 = pneg %p112
        %s173 = sand.u32 %s102, 1
        %s174 = scalar_lea.sflag [#allocation5], %s173
        %s175 = sand.u32 %s102, 1
        %s176 = scalar_lea.vmem [#allocation4], %s175
        %s177 = smul.u32 104, %s21
        %p178 = scmp.lt.s32.totalorder %s177, 207
        %s179 = scalar_select %p178, %s177, 207
        %s180 = smul.addr %s179, 2
        %s181 = smul.addr %s180, 8
        %s182 = scalar_lea.vmem %s0, %s181
        %s183 = smul.u32 104, %s21
        %s184 = smul.u32 13, %s21
        %v185 = vld [vmem:[%s182] sm:$0xff]
        %v186 = vld [vmem:[%s182 + $0x8] sm:$0xff]
        %v187 = vld [vmem:[%s182 + $0x10] sm:$0xff]
        %v188 = vld [vmem:[%s182 + $0x18] sm:$0xff]
        %v189 = vld [vmem:[%s182 + $0x20] sm:$0xff]
        %v190 = vld [vmem:[%s182 + $0x28] sm:$0xff]
        %v191 = vld [vmem:[%s182 + $0x30] sm:$0xff]
        %v192 = vld [vmem:[%s182 + $0x38] sm:$0xff]
        %v193 = vld [vmem:[%s182 + $0x40] sm:$0xff]
        %v194 = vld [vmem:[%s182 + $0x48] sm:$0xff]
        %v195 = vld [vmem:[%s182 + $0x50] sm:$0xff]
        %v196 = vld [vmem:[%s182 + $0x58] sm:$0xff]
        %v197 = vld [vmem:[%s182 + $0x60] sm:$0xff]
        %v198 = vld [vmem:[%s182 + $0x68] sm:$0xff]
        %v199 = vld [vmem:[%s182 + $0x70] sm:$0xff]
        %v200 = vld [vmem:[%s182 + $0x78] sm:$0xff]
        %v201 = vld [vmem:[%s182 + $0x80] sm:$0xff]
        %v202 = vld [vmem:[%s182 + $0x88] sm:$0xff]
        %v203 = vld [vmem:[%s182 + $0x90] sm:$0xff]
        %v204 = vld [vmem:[%s182 + $0x98] sm:$0xff]
        %v205 = vld [vmem:[%s182 + $0xa0] sm:$0xff]
        %v206 = vld [vmem:[%s182 + $0xa8] sm:$0xff]
        %v207 = vld [vmem:[%s182 + $0xb0] sm:$0xff]
        %v208 = vld [vmem:[%s182 + $0xb8] sm:$0xff]
        %v209 = vld [vmem:[%s182 + $0xc0] sm:$0xff]
        %v210 = vld [vmem:[%s182 + $0xc8] sm:$0xff]
        %v211 = vld [vmem:[%s182 + $0xd0] sm:$0xff]
        %v212 = vld [vmem:[%s182 + $0xd8] sm:$0xff]
        %v213 = vld [vmem:[%s182 + $0xe0] sm:$0xff]
        %v214 = vld [vmem:[%s182 + $0xe8] sm:$0xff]
        %v215 = vld [vmem:[%s182 + $0xf0] sm:$0xff]
        %v216 = vld [vmem:[%s182 + $0xf8] sm:$0xff]
        %v217 = vld [vmem:[%s182 + $0x100] sm:$0xff]
        %v218 = vld [vmem:[%s182 + $0x108] sm:$0xff]
        %v219 = vld [vmem:[%s182 + $0x110] sm:$0xff]
        %v220 = vld [vmem:[%s182 + $0x118] sm:$0xff]
        %v221 = vld [vmem:[%s182 + $0x120] sm:$0xff]
        %v222 = vld [vmem:[%s182 + $0x128] sm:$0xff]
        %v223 = vld [vmem:[%s182 + $0x130] sm:$0xff]
        %v224 = vld [vmem:[%s182 + $0x138] sm:$0xff]
        %v225 = vld [vmem:[%s182 + $0x140] sm:$0xff]
        %v226 = vld [vmem:[%s182 + $0x148] sm:$0xff]
        %v227 = vld [vmem:[%s182 + $0x150] sm:$0xff]
        %v228 = vld [vmem:[%s182 + $0x158] sm:$0xff]
        %v229 = vld [vmem:[%s182 + $0x160] sm:$0xff]
        %v230 = vld [vmem:[%s182 + $0x168] sm:$0xff]
        %v231 = vld [vmem:[%s182 + $0x170] sm:$0xff]
        %v232 = vld [vmem:[%s182 + $0x178] sm:$0xff]
        %v233 = vld [vmem:[%s182 + $0x180] sm:$0xff]
        %v234 = vld [vmem:[%s182 + $0x188] sm:$0xff]
        %v235 = vld [vmem:[%s182 + $0x190] sm:$0xff]
        %v236 = vld [vmem:[%s182 + $0x198] sm:$0xff]
        %v237 = vld [vmem:[%s182 + $0x1a0] sm:$0xff]
        %v238 = vld [vmem:[%s182 + $0x1a8] sm:$0xff]
        %v239 = vld [vmem:[%s182 + $0x1b0] sm:$0xff]
        %v240 = vld [vmem:[%s182 + $0x1b8] sm:$0xff]
        %v241 = vld [vmem:[%s182 + $0x1c0] sm:$0xff]
        %v242 = vld [vmem:[%s182 + $0x1c8] sm:$0xff]
        %v243 = vld [vmem:[%s182 + $0x1d0] sm:$0xff]
        %v244 = vld [vmem:[%s182 + $0x1d8] sm:$0xff]
        %v245 = vld [vmem:[%s182 + $0x1e0] sm:$0xff]
        %v246 = vld [vmem:[%s182 + $0x1e8] sm:$0xff]
        %v247 = vld [vmem:[%s182 + $0x1f0] sm:$0xff]
        %v248 = vld [vmem:[%s182 + $0x1f8] sm:$0xff]
        %v249 = vld [vmem:[%s182 + $0x200] sm:$0xff]
        %v250 = vld [vmem:[%s182 + $0x208] sm:$0xff]
        %v251 = vld [vmem:[%s182 + $0x210] sm:$0xff]
        %v252 = vld [vmem:[%s182 + $0x218] sm:$0xff]
        %v253 = vld [vmem:[%s182 + $0x220] sm:$0xff]
        %v254 = vld [vmem:[%s182 + $0x228] sm:$0xff]
        %v255 = vld [vmem:[%s182 + $0x230] sm:$0xff]
        %v256 = vld [vmem:[%s182 + $0x238] sm:$0xff]
        %v257 = vld [vmem:[%s182 + $0x240] sm:$0xff]
        %v258 = vld [vmem:[%s182 + $0x248] sm:$0xff]
        %v259 = vld [vmem:[%s182 + $0x250] sm:$0xff]
        %v260 = vld [vmem:[%s182 + $0x258] sm:$0xff]
        %v261 = vld [vmem:[%s182 + $0x260] sm:$0xff]
        %v262 = vld [vmem:[%s182 + $0x268] sm:$0xff]
        %v263 = vld [vmem:[%s182 + $0x270] sm:$0xff]
        %v264 = vld [vmem:[%s182 + $0x278] sm:$0xff]
        %v265 = vld [vmem:[%s182 + $0x280] sm:$0xff]
        %v266 = vld [vmem:[%s182 + $0x288] sm:$0xff]
        %v267 = vld [vmem:[%s182 + $0x290] sm:$0xff]
        %v268 = vld [vmem:[%s182 + $0x298] sm:$0xff]
        %v269 = vld [vmem:[%s182 + $0x2a0] sm:$0xff]
        %v270 = vld [vmem:[%s182 + $0x2a8] sm:$0xff]
        %v271 = vld [vmem:[%s182 + $0x2b0] sm:$0xff]
        %v272 = vld [vmem:[%s182 + $0x2b8] sm:$0xff]
        %v273 = vld [vmem:[%s182 + $0x2c0] sm:$0xff]
        %v274 = vld [vmem:[%s182 + $0x2c8] sm:$0xff]
        %v275 = vld [vmem:[%s182 + $0x2d0] sm:$0xff]
        %v276 = vld [vmem:[%s182 + $0x2d8] sm:$0xff]
        %v277 = vld [vmem:[%s182 + $0x2e0] sm:$0xff]
        %v278 = vld [vmem:[%s182 + $0x2e8] sm:$0xff]
        %v279 = vld [vmem:[%s182 + $0x2f0] sm:$0xff]
        %v280 = vld [vmem:[%s182 + $0x2f8] sm:$0xff]
        %v281 = vld [vmem:[%s182 + $0x300] sm:$0xff]
        %v282 = vld [vmem:[%s182 + $0x308] sm:$0xff]
        %v283 = vld [vmem:[%s182 + $0x310] sm:$0xff]
        %v284 = vld [vmem:[%s182 + $0x318] sm:$0xff]
        %v285 = vld [vmem:[%s182 + $0x320] sm:$0xff]
        %v286 = vld [vmem:[%s182 + $0x328] sm:$0xff]
        %v287 = vld [vmem:[%s182 + $0x330] sm:$0xff]
        %v288 = vld [vmem:[%s182 + $0x338] sm:$0xff]
        %v289 = vld [vmem:[%s182 + $0x340] sm:$0xff]
        %v290 = vld [vmem:[%s182 + $0x348] sm:$0xff]
        %v291 = vld [vmem:[%s182 + $0x350] sm:$0xff]
        %v292 = vld [vmem:[%s182 + $0x358] sm:$0xff]
        %v293 = vld [vmem:[%s182 + $0x360] sm:$0xff]
        %v294 = vld [vmem:[%s182 + $0x368] sm:$0xff]
        %v295 = vld [vmem:[%s182 + $0x370] sm:$0xff]
        %v296 = vld [vmem:[%s182 + $0x378] sm:$0xff]
        %v297 = vld [vmem:[%s182 + $0x380] sm:$0xff]
        %v298 = vld [vmem:[%s182 + $0x388] sm:$0xff]
        %v299 = vld [vmem:[%s182 + $0x390] sm:$0xff]
        %v300 = vld [vmem:[%s182 + $0x398] sm:$0xff]
        %v301 = vld [vmem:[%s182 + $0x3a0] sm:$0xff]
        %v302 = vld [vmem:[%s182 + $0x3a8] sm:$0xff]
        %v303 = vld [vmem:[%s182 + $0x3b0] sm:$0xff]
        %v304 = vld [vmem:[%s182 + $0x3b8] sm:$0xff]
        %v305 = vld [vmem:[%s182 + $0x3c0] sm:$0xff]
        %v306 = vld [vmem:[%s182 + $0x3c8] sm:$0xff]
        %v307 = vld [vmem:[%s182 + $0x3d0] sm:$0xff]
        %v308 = vld [vmem:[%s182 + $0x3d8] sm:$0xff]
        %v309 = vld [vmem:[%s182 + $0x3e0] sm:$0xff]
        %v310 = vld [vmem:[%s182 + $0x3e8] sm:$0xff]
        %v311 = vld [vmem:[%s182 + $0x3f0] sm:$0xff]
        %v312 = vld [vmem:[%s182 + $0x3f8] sm:$0xff]
        %v313 = vld [vmem:[%s182 + $0x400] sm:$0xff]
        %v314 = vld [vmem:[%s182 + $0x408] sm:$0xff]
        %v315 = vld [vmem:[%s182 + $0x410] sm:$0xff]
        %v316 = vld [vmem:[%s182 + $0x418] sm:$0xff]
        %v317 = vld [vmem:[%s182 + $0x420] sm:$0xff]
        %v318 = vld [vmem:[%s182 + $0x428] sm:$0xff]
        %v319 = vld [vmem:[%s182 + $0x430] sm:$0xff]
        %v320 = vld [vmem:[%s182 + $0x438] sm:$0xff]
        %v321 = vld [vmem:[%s182 + $0x440] sm:$0xff]
        %v322 = vld [vmem:[%s182 + $0x448] sm:$0xff]
        %v323 = vld [vmem:[%s182 + $0x450] sm:$0xff]
        %v324 = vld [vmem:[%s182 + $0x458] sm:$0xff]
        %v325 = vld [vmem:[%s182 + $0x460] sm:$0xff]
        %v326 = vld [vmem:[%s182 + $0x468] sm:$0xff]
        %v327 = vld [vmem:[%s182 + $0x470] sm:$0xff]
        %v328 = vld [vmem:[%s182 + $0x478] sm:$0xff]
        %v329 = vld [vmem:[%s182 + $0x480] sm:$0xff]
        %v330 = vld [vmem:[%s182 + $0x488] sm:$0xff]
        %v331 = vld [vmem:[%s182 + $0x490] sm:$0xff]
        %v332 = vld [vmem:[%s182 + $0x498] sm:$0xff]
        %v333 = vld [vmem:[%s182 + $0x4a0] sm:$0xff]
        %v334 = vld [vmem:[%s182 + $0x4a8] sm:$0xff]
        %v335 = vld [vmem:[%s182 + $0x4b0] sm:$0xff]
        %v336 = vld [vmem:[%s182 + $0x4b8] sm:$0xff]
        %v337 = vld [vmem:[%s182 + $0x4c0] sm:$0xff]
        %v338 = vld [vmem:[%s182 + $0x4c8] sm:$0xff]
        %v339 = vld [vmem:[%s182 + $0x4d0] sm:$0xff]
        %v340 = vld [vmem:[%s182 + $0x4d8] sm:$0xff]
        %v341 = vld [vmem:[%s182 + $0x4e0] sm:$0xff]
        %v342 = vld [vmem:[%s182 + $0x4e8] sm:$0xff]
        %v343 = vld [vmem:[%s182 + $0x4f0] sm:$0xff]
        %v344 = vld [vmem:[%s182 + $0x4f8] sm:$0xff]
        %v345 = vld [vmem:[%s182 + $0x500] sm:$0xff]
        %v346 = vld [vmem:[%s182 + $0x508] sm:$0xff]
        %v347 = vld [vmem:[%s182 + $0x510] sm:$0xff]
        %v348 = vld [vmem:[%s182 + $0x518] sm:$0xff]
        %v349 = vld [vmem:[%s182 + $0x520] sm:$0xff]
        %v350 = vld [vmem:[%s182 + $0x528] sm:$0xff]
        %v351 = vld [vmem:[%s182 + $0x530] sm:$0xff]
        %v352 = vld [vmem:[%s182 + $0x538] sm:$0xff]
        %v353 = vld [vmem:[%s182 + $0x540] sm:$0xff]
        %v354 = vld [vmem:[%s182 + $0x548] sm:$0xff]
        %v355 = vld [vmem:[%s182 + $0x550] sm:$0xff]
        %v356 = vld [vmem:[%s182 + $0x558] sm:$0xff]
        %v357 = vld [vmem:[%s182 + $0x560] sm:$0xff]
        %v358 = vld [vmem:[%s182 + $0x568] sm:$0xff]
        %v359 = vld [vmem:[%s182 + $0x570] sm:$0xff]
        %v360 = vld [vmem:[%s182 + $0x578] sm:$0xff]
        %v361 = vld [vmem:[%s182 + $0x580] sm:$0xff]
        %v362 = vld [vmem:[%s182 + $0x588] sm:$0xff]
        %v363 = vld [vmem:[%s182 + $0x590] sm:$0xff]
        %v364 = vld [vmem:[%s182 + $0x598] sm:$0xff]
        %v365 = vld [vmem:[%s182 + $0x5a0] sm:$0xff]
        %v366 = vld [vmem:[%s182 + $0x5a8] sm:$0xff]
        %v367 = vld [vmem:[%s182 + $0x5b0] sm:$0xff]
        %v368 = vld [vmem:[%s182 + $0x5b8] sm:$0xff]
        %v369 = vld [vmem:[%s182 + $0x5c0] sm:$0xff]
        %v370 = vld [vmem:[%s182 + $0x5c8] sm:$0xff]
        %v371 = vld [vmem:[%s182 + $0x5d0] sm:$0xff]
        %v372 = vld [vmem:[%s182 + $0x5d8] sm:$0xff]
        %v373 = vld [vmem:[%s182 + $0x5e0] sm:$0xff]
        %v374 = vld [vmem:[%s182 + $0x5e8] sm:$0xff]
        %v375 = vld [vmem:[%s182 + $0x5f0] sm:$0xff]
        %v376 = vld [vmem:[%s182 + $0x5f8] sm:$0xff]
        %v377 = vld [vmem:[%s182 + $0x600] sm:$0xff]
        %v378 = vld [vmem:[%s182 + $0x608] sm:$0xff]
        %v379 = vld [vmem:[%s182 + $0x610] sm:$0xff]
        %v380 = vld [vmem:[%s182 + $0x618] sm:$0xff]
        %v381 = vld [vmem:[%s182 + $0x620] sm:$0xff]
        %v382 = vld [vmem:[%s182 + $0x628] sm:$0xff]
        %v383 = vld [vmem:[%s182 + $0x630] sm:$0xff]
        %v384 = vld [vmem:[%s182 + $0x638] sm:$0xff]
        %v385 = vld [vmem:[%s182 + $0x640] sm:$0xff]
        %v386 = vld [vmem:[%s182 + $0x648] sm:$0xff]
        %v387 = vld [vmem:[%s182 + $0x650] sm:$0xff]
        %v388 = vld [vmem:[%s182 + $0x658] sm:$0xff]
        %v389 = vld [vmem:[%s182 + $0x660] sm:$0xff]
        %v390 = vld [vmem:[%s182 + $0x668] sm:$0xff]
        %v391 = vld [vmem:[%s182 + $0x670] sm:$0xff]
        %v392 = vld [vmem:[%s182 + $0x678] sm:$0xff]
        %v393 = vld [vmem:[%s1] sm:$0xff]
        %v394 = vld [vmem:[%s1 + $0x8] sm:$0xff]
        %v395 = vld [vmem:[%s1 + $0x10] sm:$0xff]
        %v396 = vld [vmem:[%s1 + $0x18] sm:$0xff]
        %vm397 = vcmask 261120
        %v399 = vsel %vm397, %v185, 0
        %v402 = vsel %vm397, %v186, 0
        %v405 = vsel %vm397, %v187, 0
        %v408 = vsel %vm397, %v188, 0
        %v411 = vsel %vm397, %v189, 0
        %v414 = vsel %vm397, %v190, 0
        %v417 = vsel %vm397, %v191, 0
        %v420 = vsel %vm397, %v192, 0
        %v423 = vsel %vm397, %v193, 0
        %v426 = vsel %vm397, %v194, 0
        %v429 = vsel %vm397, %v195, 0
        %v432 = vsel %vm397, %v196, 0
        %v435 = vsel %vm397, %v197, 0
        %v438 = vsel %vm397, %v198, 0
        %v441 = vsel %vm397, %v199, 0
        %v444 = vsel %vm397, %v200, 0
        %v447 = vsel %vm397, %v201, 0
        %v450 = vsel %vm397, %v202, 0
        %v453 = vsel %vm397, %v203, 0
        %v456 = vsel %vm397, %v204, 0
        %v459 = vsel %vm397, %v205, 0
        %v462 = vsel %vm397, %v206, 0
        %v465 = vsel %vm397, %v207, 0
        %v468 = vsel %vm397, %v208, 0
        %v471 = vsel %vm397, %v209, 0
        %v474 = vsel %vm397, %v210, 0
        %v477 = vsel %vm397, %v211, 0
        %v480 = vsel %vm397, %v212, 0
        %v483 = vsel %vm397, %v213, 0
        %v486 = vsel %vm397, %v214, 0
        %v489 = vsel %vm397, %v215, 0
        %v492 = vsel %vm397, %v216, 0
        %v495 = vsel %vm397, %v217, 0
        %v498 = vsel %vm397, %v218, 0
        %v501 = vsel %vm397, %v219, 0
        %v504 = vsel %vm397, %v220, 0
        %v507 = vsel %vm397, %v221, 0
        %v510 = vsel %vm397, %v222, 0
        %v513 = vsel %vm397, %v223, 0
        %v516 = vsel %vm397, %v224, 0
        %v519 = vsel %vm397, %v225, 0
        %v522 = vsel %vm397, %v226, 0
        %v525 = vsel %vm397, %v227, 0
        %v528 = vsel %vm397, %v228, 0
        %v531 = vsel %vm397, %v229, 0
        %v534 = vsel %vm397, %v230, 0
        %v537 = vsel %vm397, %v231, 0
        %v540 = vsel %vm397, %v232, 0
        %v543 = vsel %vm397, %v233, 0
        %v546 = vsel %vm397, %v234, 0
        %v549 = vsel %vm397, %v235, 0
        %v552 = vsel %vm397, %v236, 0
        %v555 = vsel %vm397, %v237, 0
        %v558 = vsel %vm397, %v238, 0
        %v561 = vsel %vm397, %v239, 0
        %v564 = vsel %vm397, %v240, 0
        %v567 = vsel %vm397, %v241, 0
        %v570 = vsel %vm397, %v242, 0
        %v573 = vsel %vm397, %v243, 0
        %v576 = vsel %vm397, %v244, 0
        %v579 = vsel %vm397, %v245, 0
        %v582 = vsel %vm397, %v246, 0
        %v585 = vsel %vm397, %v247, 0
        %v588 = vsel %vm397, %v248, 0
        %v591 = vsel %vm397, %v249, 0
        %v594 = vsel %vm397, %v250, 0
        %v597 = vsel %vm397, %v251, 0
        %v600 = vsel %vm397, %v252, 0
        %v603 = vsel %vm397, %v253, 0
        %v606 = vsel %vm397, %v254, 0
        %v609 = vsel %vm397, %v255, 0
        %v612 = vsel %vm397, %v256, 0
        %v615 = vsel %vm397, %v257, 0
        %v618 = vsel %vm397, %v258, 0
        %v621 = vsel %vm397, %v259, 0
        %v624 = vsel %vm397, %v260, 0
        %v627 = vsel %vm397, %v261, 0
        %v630 = vsel %vm397, %v262, 0
        %v633 = vsel %vm397, %v263, 0
        %v636 = vsel %vm397, %v264, 0
        %v639 = vsel %vm397, %v265, 0
        %v642 = vsel %vm397, %v266, 0
        %v645 = vsel %vm397, %v267, 0
        %v648 = vsel %vm397, %v268, 0
        %v651 = vsel %vm397, %v269, 0
        %v654 = vsel %vm397, %v270, 0
        %v657 = vsel %vm397, %v271, 0
        %v660 = vsel %vm397, %v272, 0
        %v663 = vsel %vm397, %v273, 0
        %v666 = vsel %vm397, %v274, 0
        %v669 = vsel %vm397, %v275, 0
        %v672 = vsel %vm397, %v276, 0
        %v675 = vsel %vm397, %v277, 0
        %v678 = vsel %vm397, %v278, 0
        %v681 = vsel %vm397, %v279, 0
        %v684 = vsel %vm397, %v280, 0
        %v687 = vsel %vm397, %v281, 0
        %v690 = vsel %vm397, %v282, 0
        %v693 = vsel %vm397, %v283, 0
        %v696 = vsel %vm397, %v284, 0
        %v699 = vsel %vm397, %v285, 0
        %v702 = vsel %vm397, %v286, 0
        %v705 = vsel %vm397, %v287, 0
        %v708 = vsel %vm397, %v288, 0
        %v711 = vsel %vm397, %v289, 0
        %v714 = vsel %vm397, %v290, 0
        %v717 = vsel %vm397, %v291, 0
        %v720 = vsel %vm397, %v292, 0
        %v723 = vsel %vm397, %v293, 0
        %v726 = vsel %vm397, %v294, 0
        %v729 = vsel %vm397, %v295, 0
        %v732 = vsel %vm397, %v296, 0
        %v735 = vsel %vm397, %v297, 0
        %v738 = vsel %vm397, %v298, 0
        %v741 = vsel %vm397, %v299, 0
        %v744 = vsel %vm397, %v300, 0
        %v747 = vsel %vm397, %v301, 0
        %v750 = vsel %vm397, %v302, 0
        %v753 = vsel %vm397, %v303, 0
        %v756 = vsel %vm397, %v304, 0
        %v759 = vsel %vm397, %v305, 0
        %v762 = vsel %vm397, %v306, 0
        %v765 = vsel %vm397, %v307, 0
        %v768 = vsel %vm397, %v308, 0
        %v771 = vsel %vm397, %v309, 0
        %v774 = vsel %vm397, %v310, 0
        %v777 = vsel %vm397, %v311, 0
        %v780 = vsel %vm397, %v312, 0
        %v783 = vsel %vm397, %v313, 0
        %v786 = vsel %vm397, %v314, 0
        %v789 = vsel %vm397, %v315, 0
        %v792 = vsel %vm397, %v316, 0
        %v795 = vsel %vm397, %v317, 0
        %v798 = vsel %vm397, %v318, 0
        %v801 = vsel %vm397, %v319, 0
        %v804 = vsel %vm397, %v320, 0
        %v807 = vsel %vm397, %v321, 0
        %v810 = vsel %vm397, %v322, 0
        %v813 = vsel %vm397, %v323, 0
        %v816 = vsel %vm397, %v324, 0
        %v819 = vsel %vm397, %v325, 0
        %v822 = vsel %vm397, %v326, 0
        %v825 = vsel %vm397, %v327, 0
        %v828 = vsel %vm397, %v328, 0
        %v831 = vsel %vm397, %v329, 0
        %v834 = vsel %vm397, %v330, 0
        %v837 = vsel %vm397, %v331, 0
        %v840 = vsel %vm397, %v332, 0
        %v843 = vsel %vm397, %v333, 0
        %v846 = vsel %vm397, %v334, 0
        %v849 = vsel %vm397, %v335, 0
        %v852 = vsel %vm397, %v336, 0
        %v855 = vsel %vm397, %v337, 0
        %v858 = vsel %vm397, %v338, 0
        %v861 = vsel %vm397, %v339, 0
        %v864 = vsel %vm397, %v340, 0
        %v867 = vsel %vm397, %v341, 0
        %v870 = vsel %vm397, %v342, 0
        %v873 = vsel %vm397, %v343, 0
        %v876 = vsel %vm397, %v344, 0
        %v879 = vsel %vm397, %v345, 0
        %v882 = vsel %vm397, %v346, 0
        %v885 = vsel %vm397, %v347, 0
        %v888 = vsel %vm397, %v348, 0
        %v891 = vsel %vm397, %v349, 0
        %v894 = vsel %vm397, %v350, 0
        %v897 = vsel %vm397, %v351, 0
        %v900 = vsel %vm397, %v352, 0
        %v903 = vsel %vm397, %v353, 0
        %v906 = vsel %vm397, %v354, 0
        %v909 = vsel %vm397, %v355, 0
        %v912 = vsel %vm397, %v356, 0
        %v915 = vsel %vm397, %v357, 0
        %v918 = vsel %vm397, %v358, 0
        %v921 = vsel %vm397, %v359, 0
        %v924 = vsel %vm397, %v360, 0
        %v927 = vsel %vm397, %v361, 0
        %v930 = vsel %vm397, %v362, 0
        %v933 = vsel %vm397, %v363, 0
        %v936 = vsel %vm397, %v364, 0
        %v939 = vsel %vm397, %v365, 0
        %v942 = vsel %vm397, %v366, 0
        %v945 = vsel %vm397, %v367, 0
        %v948 = vsel %vm397, %v368, 0
        %v951 = vsel %vm397, %v369, 0
        %v954 = vsel %vm397, %v370, 0
        %v957 = vsel %vm397, %v371, 0
        %v960 = vsel %vm397, %v372, 0
        %v963 = vsel %vm397, %v373, 0
        %v966 = vsel %vm397, %v374, 0
        %v969 = vsel %vm397, %v375, 0
        %v972 = vsel %vm397, %v376, 0
        %v975 = vsel %vm397, %v377, 0
        %v978 = vsel %vm397, %v378, 0
        %v981 = vsel %vm397, %v379, 0
        %v984 = vsel %vm397, %v380, 0
        %v987 = vsel %vm397, %v381, 0
        %v990 = vsel %vm397, %v382, 0
        %v993 = vsel %vm397, %v383, 0
        %v996 = vsel %vm397, %v384, 0
        %v999 = vsel %vm397, %v385, 0
        %v1002 = vsel %vm397, %v386, 0
        %v1005 = vsel %vm397, %v387, 0
        %v1008 = vsel %vm397, %v388, 0
        %v1011 = vsel %vm397, %v389, 0
        %v1014 = vsel %vm397, %v390, 0
        %v1017 = vsel %vm397, %v391, 0
        %v1020 = vsel %vm397, %v392, 0
        %1022 = vmatprep.subr.mxu0 0.0
        %1023 = vmatpush1.msra.mxu0 %v393
        %1024 = vmatprep.subr.mxu0 0.0
        %1025 = vmatpush1.msra.mxu0 %v394
        %1026 = vmatprep.subr.mxu0 0.0
        %1027 = vmatpush1.msra.mxu0 %v395
        %1028 = vmatprep.subr.mxu0 0.0
        %1029 = vmatpush1.msra.mxu0 %v396
        %1030 = vmatprep.subr.mxu0 0.0
        %1031 = vmatpush1.msra.mxu0 0.0
        %1032 = vmatprep.subr.mxu0 0.0
        %1033 = vmatpush1.msra.mxu0 0.0
        %1034 = vmatprep.subr.mxu0 0.0
        %1035 = vmatpush1.msra.mxu0 0.0
        %1036 = vmatprep.subr.mxu0 0.0
        %1037 = vmatpush1.msra.mxu0 0.0
        %1038 = vmatprep.subr.mxu0 0.0
        %1039 = vmatpush1.msra.mxu0 0.0
        %1040 = vmatprep.subr.mxu0 0.0
        %1041 = vmatpush1.msra.mxu0 0.0
        %1042 = vmatprep.subr.mxu0 0.0
        %1043 = vmatpush1.msra.mxu0 0.0
        %1044 = vmatprep.subr.mxu0 0.0
        %1045 = vmatpush1.msra.mxu0 0.0
        %1046 = vmatprep.subr.mxu0 0.0
        %1047 = vmatpush1.msra.mxu0 0.0
        %1048 = vmatprep.subr.mxu0 0.0
        %1049 = vmatpush1.msra.mxu0 0.0
        %1050 = vmatprep.subr.mxu0 0.0
        %1051 = vmatpush1.msra.mxu0 0.0
        %1052 = vmatprep.subr.mxu0 0.0
        %1053 = vmatpush1.msra.mxu0 0.0
        %1054 = vmatprep.subr.mxu0 0.0
        %1055 = vmatpush1.msra.mxu0 0.0
        %1056 = vmatprep.subr.mxu0 0.0
        %1057 = vmatpush1.msra.mxu0 0.0
        %1058 = vmatprep.subr.mxu0 0.0
        %1059 = vmatpush1.msra.mxu0 0.0
        %1060 = vmatprep.subr.mxu0 0.0
        %1061 = vmatpush1.msra.mxu0 0.0
        %1062 = vmatprep.subr.mxu0 0.0
        %1063 = vmatpush1.msra.mxu0 0.0
        %1064 = vmatprep.subr.mxu0 0.0
        %1065 = vmatpush1.msra.mxu0 0.0
        %1066 = vmatprep.subr.mxu0 0.0
        %1067 = vmatpush1.msra.mxu0 0.0
        %1068 = vmatprep.subr.mxu0 0.0
        %1069 = vmatpush1.msra.mxu0 0.0
        %1070 = vmatprep.subr.mxu0 0.0
        %1071 = vmatpush1.msra.mxu0 0.0
        %1072 = vmatprep.subr.mxu0 0.0
        %1073 = vmatpush1.msra.mxu0 0.0
        %1074 = vmatprep.subr.mxu0 0.0
        %1075 = vmatpush1.msra.mxu0 0.0
        %1076 = vmatprep.subr.mxu0 0.0
        %1077 = vmatpush1.msra.mxu0 0.0
        %1078 = vmatprep.subr.mxu0 0.0
        %1079 = vmatpush1.msra.mxu0 0.0
        %1080 = vmatprep.subr.mxu0 0.0
        %1081 = vmatpush1.msra.mxu0 0.0
        %1082 = vmatprep.subr.mxu0 0.0
        %1083 = vmatpush1.msra.mxu0 0.0
        %1084 = vmatprep.subr.mxu0 0.0
        %1085 = vmatpush1.msra.mxu0 0.0
        %1086 = vmatprep.mubr.f32.mxu0 0.0
        %1087 = vmatmul.mubr.f32.gmra.mrb[0].mxu0 %v399
        %v1088 = vpop.f32.mrb[0].mxu0
        %v1089 = vadd.f32 0.0, %v1088
        %v1090 = vpop.f32.mrb[0].mxu0
        %1091 = vmatprep.mubr.f32.mxu0 0.0
        %1092 = vmatmul.mubr.f32.gmra.mrb[0].mxu0 %v402
        %v1093 = vpop.f32.mrb[0].mxu0
        %v1094 = vadd.f32 0.0, %v1093
        %v1095 = vpop.f32.mrb[0].mxu0
        %1096 = vmatprep.mubr.f32.mxu0 0.0
        %1097 = vmatmul.mubr.f32.gmra.mrb[0].mxu0 %v405
        %v1098 = vpop.f32.mrb[0].mxu0
        %v1099 = vadd.f32 0.0, %v1098
        %v1100 = vpop.f32.mrb[0].mxu0
        %1101 = vmatprep.mubr.f32.mxu0 0.0
        %1102 = vmatmul.mubr.f32.gmra.mrb[0].mxu0 %v408
        %v1103 = vpop.f32.mrb[0].mxu0
        %v1104 = vadd.f32 0.0, %v1103
        %v1105 = vpop.f32.mrb[0].mxu0
        %1106 = vmatprep.mubr.f32.mxu0 0.0
        %1107 = vmatmul.mubr.f32.gmra.mrb[0].mxu0 %v411
        %v1108 = vpop.f32.mrb[0].mxu0
        %v1109 = vadd.f32 0.0, %v1108
        %v1110 = vpop.f32.mrb[0].mxu0
        %1111 = vmatprep.mubr.f32.mxu0 0.0
        %1112 = vmatmul.mubr.f32.gmra.mrb[0].mxu0 %v414
        %v1113 = vpop.f32.mrb[0].mxu0
        %v1114 = vadd.f32 0.0, %v1113
        %v1115 = vpop.f32.mrb[0].mxu0
        %1116 = vmatprep.mubr.f32.mxu0 0.0
        %1117 = vmatmul.mubr.f32.gmra.mrb[0].mxu0 %v417
        %v1118 = vpop.f32.mrb[0].mxu0
        %v1119 = vadd.f32 0.0, %v1118
        %v1120 = vpop.f32.mrb[0].mxu0
        %1121 = vmatprep.mubr.f32.mxu0 0.0
        %1122 = vmatmul.mubr.f32.gmra.mrb[0].mxu0 %v420
        %v1123 = vpop.f32.mrb[0].mxu0
        %v1124 = vadd.f32 0.0, %v1123
        %v1125 = vpop.f32.mrb[0].mxu0
        %1126 = vmatprep.mubr.f32.mxu0 0.0
        %1127 = vmatmul.mubr.f32.gmra.mrb[0].mxu0 %v423
        %v1128 = vpop.f32.mrb[0].mxu0
        %v1129 = vadd.f32 0.0, %v1128
        %v1130 = vpop.f32.mrb[0].mxu0
        %1131 = vmatprep.mubr.f32.mxu0 0.0
        %1132 = vmatmul.mubr.f32.gmra.mrb[0].mxu0 %v426
        %v1133 = vpop.f32.mrb[0].mxu0
        %v1134 = vadd.f32 0.0, %v1133
        %v1135 = vpop.f32.mrb[0].mxu0
        %1136 = vmatprep.mubr.f32.mxu0 0.0
        %1137 = vmatmul.mubr.f32.gmra.mrb[0].mxu0 %v429
        %v1138 = vpop.f32.mrb[0].mxu0
        %v1139 = vadd.f32 0.0, %v1138
        %v1140 = vpop.f32.mrb[0].mxu0
        %1141 = vmatprep.mubr.f32.mxu0 0.0
        %1142 = vmatmul.mubr.f32.gmra.mrb[0].mxu0 %v432
        %v1143 = vpop.f32.mrb[0].mxu0
        %v1144 = vadd.f32 0.0, %v1143
        %v1145 = vpop.f32.mrb[0].mxu0
        %1146 = vmatprep.mubr.f32.mxu0 0.0
        %1147 = vmatmul.mubr.f32.gmra.mrb[0].mxu0 %v435
        %v1148 = vpop.f32.mrb[0].mxu0
        %v1149 = vadd.f32 0.0, %v1148
        %v1150 = vpop.f32.mrb[0].mxu0
        %1151 = vmatprep.mubr.f32.mxu0 0.0
        %1152 = vmatmul.mubr.f32.gmra.mrb[0].mxu0 %v438
        %v1153 = vpop.f32.mrb[0].mxu0
        %v1154 = vadd.f32 0.0, %v1153
        %v1155 = vpop.f32.mrb[0].mxu0
        %1156 = vmatprep.mubr.f32.mxu0 0.0
        %1157 = vmatmul.mubr.f32.gmra.mrb[0].mxu0 %v441
        %v1158 = vpop.f32.mrb[0].mxu0
        %v1159 = vadd.f32 0.0, %v1158
        %v1160 = vpop.f32.mrb[0].mxu0
        %1161 = vmatprep.mubr.f32.mxu0 0.0
        %1162 = vmatmul.mubr.f32.gmra.mrb[0].mxu0 %v444
        %v1163 = vpop.f32.mrb[0].mxu0
        %v1164 = vadd.f32 0.0, %v1163
        %v1165 = vpop.f32.mrb[0].mxu0
        %1166 = vmatprep.mubr.f32.mxu0 0.0
        %1167 = vmatmul.mubr.f32.gmra.mrb[0].mxu0 %v447
        %v1168 = vpop.f32.mrb[0].mxu0
        %v1169 = vadd.f32 0.0, %v1168
        %v1170 = vpop.f32.mrb[0].mxu0
        %1171 = vmatprep.mubr.f32.mxu0 0.0
        %1172 = vmatmul.mubr.f32.gmra.mrb[0].mxu0 %v450
        %v1173 = vpop.f32.mrb[0].mxu0
        %v1174 = vadd.f32 0.0, %v1173
        %v1175 = vpop.f32.mrb[0].mxu0
        %1176 = vmatprep.mubr.f32.mxu0 0.0
        %1177 = vmatmul.mubr.f32.gmra.mrb[0].mxu0 %v453
        %v1178 = vpop.f32.mrb[0].mxu0
        %v1179 = vadd.f32 0.0, %v1178
        %v1180 = vpop.f32.mrb[0].mxu0
        %1181 = vmatprep.mubr.f32.mxu0 0.0
        %1182 = vmatmul.mubr.f32.gmra.mrb[0].mxu0 %v456
        %v1183 = vpop.f32.mrb[0].mxu0
        %v1184 = vadd.f32 0.0, %v1183
        %v1185 = vpop.f32.mrb[0].mxu0
        %1186 = vmatprep.mubr.f32.mxu0 0.0
        %1187 = vmatmul.mubr.f32.gmra.mrb[0].mxu0 %v459
        %v1188 = vpop.f32.mrb[0].mxu0
        %v1189 = vadd.f32 0.0, %v1188
        %v1190 = vpop.f32.mrb[0].mxu0
        %1191 = vmatprep.mubr.f32.mxu0 0.0
        %1192 = vmatmul.mubr.f32.gmra.mrb[0].mxu0 %v462
        %v1193 = vpop.f32.mrb[0].mxu0
        %v1194 = vadd.f32 0.0, %v1193
        %v1195 = vpop.f32.mrb[0].mxu0
        %1196 = vmatprep.mubr.f32.mxu0 0.0
        %1197 = vmatmul.mubr.f32.gmra.mrb[0].mxu0 %v465
        %v1198 = vpop.f32.mrb[0].mxu0
        %v1199 = vadd.f32 0.0, %v1198
        %v1200 = vpop.f32.mrb[0].mxu0
        %1201 = vmatprep.mubr.f32.mxu0 0.0
        %1202 = vmatmul.mubr.f32.gmra.mrb[0].mxu0 %v468
        %v1203 = vpop.f32.mrb[0].mxu0
        %v1204 = vadd.f32 0.0, %v1203
        %v1205 = vpop.f32.mrb[0].mxu0
        %1206 = vmatprep.mubr.f32.mxu0 0.0
        %1207 = vmatmul.mubr.f32.gmra.mrb[0].mxu0 %v471
        %v1208 = vpop.f32.mrb[0].mxu0
        %v1209 = vadd.f32 0.0, %v1208
        %v1210 = vpop.f32.mrb[0].mxu0
        %1211 = vmatprep.mubr.f32.mxu0 0.0
        %1212 = vmatmul.mubr.f32.gmra.mrb[0].mxu0 %v474
        %v1213 = vpop.f32.mrb[0].mxu0
        %v1214 = vadd.f32 0.0, %v1213
        %v1215 = vpop.f32.mrb[0].mxu0
        %1216 = vmatprep.mubr.f32.mxu0 0.0
        %1217 = vmatmul.mubr.f32.gmra.mrb[0].mxu0 %v477
        %v1218 = vpop.f32.mrb[0].mxu0
        %v1219 = vadd.f32 0.0, %v1218
        %v1220 = vpop.f32.mrb[0].mxu0
        %1221 = vmatprep.mubr.f32.mxu0 0.0
        %1222 = vmatmul.mubr.f32.gmra.mrb[0].mxu0 %v480
        %v1223 = vpop.f32.mrb[0].mxu0
        %v1224 = vadd.f32 0.0, %v1223
        %v1225 = vpop.f32.mrb[0].mxu0
        %1226 = vmatprep.mubr.f32.mxu0 0.0
        %1227 = vmatmul.mubr.f32.gmra.mrb[0].mxu0 %v483
        %v1228 = vpop.f32.mrb[0].mxu0
        %v1229 = vadd.f32 0.0, %v1228
        %v1230 = vpop.f32.mrb[0].mxu0
        %1231 = vmatprep.mubr.f32.mxu0 0.0
        %1232 = vmatmul.mubr.f32.gmra.mrb[0].mxu0 %v486
        %v1233 = vpop.f32.mrb[0].mxu0
        %v1234 = vadd.f32 0.0, %v1233
        %v1235 = vpop.f32.mrb[0].mxu0
        %1236 = vmatprep.mubr.f32.mxu0 0.0
        %1237 = vmatmul.mubr.f32.gmra.mrb[0].mxu0 %v489
        %v1238 = vpop.f32.mrb[0].mxu0
        %v1239 = vadd.f32 0.0, %v1238
        %v1240 = vpop.f32.mrb[0].mxu0
        %1241 = vmatprep.mubr.f32.mxu0 0.0
        %1242 = vmatmul.mubr.f32.gmra.mrb[0].mxu0 %v492
        %v1243 = vpop.f32.mrb[0].mxu0
        %v1244 = vadd.f32 0.0, %v1243
        %v1245 = vpop.f32.mrb[0].mxu0
        %1246 = vmatprep.mubr.f32.mxu0 0.0
        %1247 = vmatmul.mubr.f32.gmra.mrb[0].mxu0 %v495
        %v1248 = vpop.f32.mrb[0].mxu0
        %v1249 = vadd.f32 0.0, %v1248
        %v1250 = vpop.f32.mrb[0].mxu0
        %1251 = vmatprep.mubr.f32.mxu0 0.0
        %1252 = vmatmul.mubr.f32.gmra.mrb[0].mxu0 %v498
        %v1253 = vpop.f32.mrb[0].mxu0
        %v1254 = vadd.f32 0.0, %v1253
        %v1255 = vpop.f32.mrb[0].mxu0
        %1256 = vmatprep.mubr.f32.mxu0 0.0
        %1257 = vmatmul.mubr.f32.gmra.mrb[0].mxu0 %v501
        %v1258 = vpop.f32.mrb[0].mxu0
        %v1259 = vadd.f32 0.0, %v1258
        %v1260 = vpop.f32.mrb[0].mxu0
        %1261 = vmatprep.mubr.f32.mxu0 0.0
        %1262 = vmatmul.mubr.f32.gmra.mrb[0].mxu0 %v504
        %v1263 = vpop.f32.mrb[0].mxu0
        %v1264 = vadd.f32 0.0, %v1263
        %v1265 = vpop.f32.mrb[0].mxu0
        %1266 = vmatprep.mubr.f32.mxu0 0.0
        %1267 = vmatmul.mubr.f32.gmra.mrb[0].mxu0 %v507
        %v1268 = vpop.f32.mrb[0].mxu0
        %v1269 = vadd.f32 0.0, %v1268
        %v1270 = vpop.f32.mrb[0].mxu0
        %1271 = vmatprep.mubr.f32.mxu0 0.0
        %1272 = vmatmul.mubr.f32.gmra.mrb[0].mxu0 %v510
        %v1273 = vpop.f32.mrb[0].mxu0
        %v1274 = vadd.f32 0.0, %v1273
        %v1275 = vpop.f32.mrb[0].mxu0
        %1276 = vmatprep.mubr.f32.mxu0 0.0
        %1277 = vmatmul.mubr.f32.gmra.mrb[0].mxu0 %v513
        %v1278 = vpop.f32.mrb[0].mxu0
        %v1279 = vadd.f32 0.0, %v1278
        %v1280 = vpop.f32.mrb[0].mxu0
        %1281 = vmatprep.mubr.f32.mxu0 0.0
        %1282 = vmatmul.mubr.f32.gmra.mrb[0].mxu0 %v516
        %v1283 = vpop.f32.mrb[0].mxu0
        %v1284 = vadd.f32 0.0, %v1283
        %v1285 = vpop.f32.mrb[0].mxu0
        %1286 = vmatprep.mubr.f32.mxu0 0.0
        %1287 = vmatmul.mubr.f32.gmra.mrb[0].mxu0 %v519
        %v1288 = vpop.f32.mrb[0].mxu0
        %v1289 = vadd.f32 0.0, %v1288
        %v1290 = vpop.f32.mrb[0].mxu0
        %1291 = vmatprep.mubr.f32.mxu0 0.0
        %1292 = vmatmul.mubr.f32.gmra.mrb[0].mxu0 %v522
        %v1293 = vpop.f32.mrb[0].mxu0
        %v1294 = vadd.f32 0.0, %v1293
        %v1295 = vpop.f32.mrb[0].mxu0
        %1296 = vmatprep.mubr.f32.mxu0 0.0
        %1297 = vmatmul.mubr.f32.gmra.mrb[0].mxu0 %v525
        %v1298 = vpop.f32.mrb[0].mxu0
        %v1299 = vadd.f32 0.0, %v1298
        %v1300 = vpop.f32.mrb[0].mxu0
        %1301 = vmatprep.mubr.f32.mxu0 0.0
        %1302 = vmatmul.mubr.f32.gmra.mrb[0].mxu0 %v528
        %v1303 = vpop.f32.mrb[0].mxu0
        %v1304 = vadd.f32 0.0, %v1303
        %v1305 = vpop.f32.mrb[0].mxu0
        %1306 = vmatprep.mubr.f32.mxu0 0.0
        %1307 = vmatmul.mubr.f32.gmra.mrb[0].mxu0 %v531
        %v1308 = vpop.f32.mrb[0].mxu0
        %v1309 = vadd.f32 0.0, %v1308
        %v1310 = vpop.f32.mrb[0].mxu0
        %1311 = vmatprep.mubr.f32.mxu0 0.0
        %1312 = vmatmul.mubr.f32.gmra.mrb[0].mxu0 %v534
        %v1313 = vpop.f32.mrb[0].mxu0
        %v1314 = vadd.f32 0.0, %v1313
        %v1315 = vpop.f32.mrb[0].mxu0
        %1316 = vmatprep.mubr.f32.mxu0 0.0
        %1317 = vmatmul.mubr.f32.gmra.mrb[0].mxu0 %v537
        %v1318 = vpop.f32.mrb[0].mxu0
        %v1319 = vadd.f32 0.0, %v1318
        %v1320 = vpop.f32.mrb[0].mxu0
        %1321 = vmatprep.mubr.f32.mxu0 0.0
        %1322 = vmatmul.mubr.f32.gmra.mrb[0].mxu0 %v540
        %v1323 = vpop.f32.mrb[0].mxu0
        %v1324 = vadd.f32 0.0, %v1323
        %v1325 = vpop.f32.mrb[0].mxu0
        %1326 = vmatprep.mubr.f32.mxu0 0.0
        %1327 = vmatmul.mubr.f32.gmra.mrb[0].mxu0 %v543
        %v1328 = vpop.f32.mrb[0].mxu0
        %v1329 = vadd.f32 0.0, %v1328
        %v1330 = vpop.f32.mrb[0].mxu0
        %1331 = vmatprep.mubr.f32.mxu0 0.0
        %1332 = vmatmul.mubr.f32.gmra.mrb[0].mxu0 %v546
        %v1333 = vpop.f32.mrb[0].mxu0
        %v1334 = vadd.f32 0.0, %v1333
        %v1335 = vpop.f32.mrb[0].mxu0
        %1336 = vmatprep.mubr.f32.mxu0 0.0
        %1337 = vmatmul.mubr.f32.gmra.mrb[0].mxu0 %v549
        %v1338 = vpop.f32.mrb[0].mxu0
        %v1339 = vadd.f32 0.0, %v1338
        %v1340 = vpop.f32.mrb[0].mxu0
        %1341 = vmatprep.mubr.f32.mxu0 0.0
        %1342 = vmatmul.mubr.f32.gmra.mrb[0].mxu0 %v552
        %v1343 = vpop.f32.mrb[0].mxu0
        %v1344 = vadd.f32 0.0, %v1343
        %v1345 = vpop.f32.mrb[0].mxu0
        %1346 = vmatprep.mubr.f32.mxu0 0.0
        %1347 = vmatmul.mubr.f32.gmra.mrb[0].mxu0 %v555
        %v1348 = vpop.f32.mrb[0].mxu0
        %v1349 = vadd.f32 0.0, %v1348
        %v1350 = vpop.f32.mrb[0].mxu0
        %1351 = vmatprep.mubr.f32.mxu0 0.0
        %1352 = vmatmul.mubr.f32.gmra.mrb[0].mxu0 %v558
        %v1353 = vpop.f32.mrb[0].mxu0
        %v1354 = vadd.f32 0.0, %v1353
        %v1355 = vpop.f32.mrb[0].mxu0
        %1356 = vmatprep.mubr.f32.mxu0 0.0
        %1357 = vmatmul.mubr.f32.gmra.mrb[0].mxu0 %v561
        %v1358 = vpop.f32.mrb[0].mxu0
        %v1359 = vadd.f32 0.0, %v1358
        %v1360 = vpop.f32.mrb[0].mxu0
        %1361 = vmatprep.mubr.f32.mxu0 0.0
        %1362 = vmatmul.mubr.f32.gmra.mrb[0].mxu0 %v564
        %v1363 = vpop.f32.mrb[0].mxu0
        %v1364 = vadd.f32 0.0, %v1363
        %v1365 = vpop.f32.mrb[0].mxu0
        %1366 = vmatprep.mubr.f32.mxu0 0.0
        %1367 = vmatmul.mubr.f32.gmra.mrb[0].mxu0 %v567
        %v1368 = vpop.f32.mrb[0].mxu0
        %v1369 = vadd.f32 0.0, %v1368
        %v1370 = vpop.f32.mrb[0].mxu0
        %1371 = vmatprep.mubr.f32.mxu0 0.0
        %1372 = vmatmul.mubr.f32.gmra.mrb[0].mxu0 %v570
        %v1373 = vpop.f32.mrb[0].mxu0
        %v1374 = vadd.f32 0.0, %v1373
        %v1375 = vpop.f32.mrb[0].mxu0
        %1376 = vmatprep.mubr.f32.mxu0 0.0
        %1377 = vmatmul.mubr.f32.gmra.mrb[0].mxu0 %v573
        %v1378 = vpop.f32.mrb[0].mxu0
        %v1379 = vadd.f32 0.0, %v1378
        %v1380 = vpop.f32.mrb[0].mxu0
        %1381 = vmatprep.mubr.f32.mxu0 0.0
        %1382 = vmatmul.mubr.f32.gmra.mrb[0].mxu0 %v576
        %v1383 = vpop.f32.mrb[0].mxu0
        %v1384 = vadd.f32 0.0, %v1383
        %v1385 = vpop.f32.mrb[0].mxu0
        %1386 = vmatprep.mubr.f32.mxu0 0.0
        %1387 = vmatmul.mubr.f32.gmra.mrb[0].mxu0 %v579
        %v1388 = vpop.f32.mrb[0].mxu0
        %v1389 = vadd.f32 0.0, %v1388
        %v1390 = vpop.f32.mrb[0].mxu0
        %1391 = vmatprep.mubr.f32.mxu0 0.0
        %1392 = vmatmul.mubr.f32.gmra.mrb[0].mxu0 %v582
        %v1393 = vpop.f32.mrb[0].mxu0
        %v1394 = vadd.f32 0.0, %v1393
        %v1395 = vpop.f32.mrb[0].mxu0
        %1396 = vmatprep.mubr.f32.mxu0 0.0
        %1397 = vmatmul.mubr.f32.gmra.mrb[0].mxu0 %v585
        %v1398 = vpop.f32.mrb[0].mxu0
        %v1399 = vadd.f32 0.0, %v1398
        %v1400 = vpop.f32.mrb[0].mxu0
        %1401 = vmatprep.mubr.f32.mxu0 0.0
        %1402 = vmatmul.mubr.f32.gmra.mrb[0].mxu0 %v588
        %v1403 = vpop.f32.mrb[0].mxu0
        %v1404 = vadd.f32 0.0, %v1403
        %v1405 = vpop.f32.mrb[0].mxu0
        %1406 = vmatprep.mubr.f32.mxu0 0.0
        %1407 = vmatmul.mubr.f32.gmra.mrb[0].mxu0 %v591
        %v1408 = vpop.f32.mrb[0].mxu0
        %v1409 = vadd.f32 0.0, %v1408
        %v1410 = vpop.f32.mrb[0].mxu0
        %1411 = vmatprep.mubr.f32.mxu0 0.0
        %1412 = vmatmul.mubr.f32.gmra.mrb[0].mxu0 %v594
        %v1413 = vpop.f32.mrb[0].mxu0
        %v1414 = vadd.f32 0.0, %v1413
        %v1415 = vpop.f32.mrb[0].mxu0
        %1416 = vmatprep.mubr.f32.mxu0 0.0
        %1417 = vmatmul.mubr.f32.gmra.mrb[0].mxu0 %v597
        %v1418 = vpop.f32.mrb[0].mxu0
        %v1419 = vadd.f32 0.0, %v1418
        %v1420 = vpop.f32.mrb[0].mxu0
        %1421 = vmatprep.mubr.f32.mxu0 0.0
        %1422 = vmatmul.mubr.f32.gmra.mrb[0].mxu0 %v600
        %v1423 = vpop.f32.mrb[0].mxu0
        %v1424 = vadd.f32 0.0, %v1423
        %v1425 = vpop.f32.mrb[0].mxu0
        %1426 = vmatprep.mubr.f32.mxu0 0.0
        %1427 = vmatmul.mubr.f32.gmra.mrb[0].mxu0 %v603
        %v1428 = vpop.f32.mrb[0].mxu0
        %v1429 = vadd.f32 0.0, %v1428
        %v1430 = vpop.f32.mrb[0].mxu0
        %1431 = vmatprep.mubr.f32.mxu0 0.0
        %1432 = vmatmul.mubr.f32.gmra.mrb[0].mxu0 %v606
        %v1433 = vpop.f32.mrb[0].mxu0
        %v1434 = vadd.f32 0.0, %v1433
        %v1435 = vpop.f32.mrb[0].mxu0
        %1436 = vmatprep.mubr.f32.mxu0 0.0
        %1437 = vmatmul.mubr.f32.gmra.mrb[0].mxu0 %v609
        %v1438 = vpop.f32.mrb[0].mxu0
        %v1439 = vadd.f32 0.0, %v1438
        %v1440 = vpop.f32.mrb[0].mxu0
        %1441 = vmatprep.mubr.f32.mxu0 0.0
        %1442 = vmatmul.mubr.f32.gmra.mrb[0].mxu0 %v612
        %v1443 = vpop.f32.mrb[0].mxu0
        %v1444 = vadd.f32 0.0, %v1443
        %v1445 = vpop.f32.mrb[0].mxu0
        %1446 = vmatprep.mubr.f32.mxu0 0.0
        %1447 = vmatmul.mubr.f32.gmra.mrb[0].mxu0 %v615
        %v1448 = vpop.f32.mrb[0].mxu0
        %v1449 = vadd.f32 0.0, %v1448
        %v1450 = vpop.f32.mrb[0].mxu0
        %1451 = vmatprep.mubr.f32.mxu0 0.0
        %1452 = vmatmul.mubr.f32.gmra.mrb[0].mxu0 %v618
        %v1453 = vpop.f32.mrb[0].mxu0
        %v1454 = vadd.f32 0.0, %v1453
        %v1455 = vpop.f32.mrb[0].mxu0
        %1456 = vmatprep.mubr.f32.mxu0 0.0
        %1457 = vmatmul.mubr.f32.gmra.mrb[0].mxu0 %v621
        %v1458 = vpop.f32.mrb[0].mxu0
        %v1459 = vadd.f32 0.0, %v1458
        %v1460 = vpop.f32.mrb[0].mxu0
        %1461 = vmatprep.mubr.f32.mxu0 0.0
        %1462 = vmatmul.mubr.f32.gmra.mrb[0].mxu0 %v624
        %v1463 = vpop.f32.mrb[0].mxu0
        %v1464 = vadd.f32 0.0, %v1463
        %v1465 = vpop.f32.mrb[0].mxu0
        %1466 = vmatprep.mubr.f32.mxu0 0.0
        %1467 = vmatmul.mubr.f32.gmra.mrb[0].mxu0 %v627
        %v1468 = vpop.f32.mrb[0].mxu0
        %v1469 = vadd.f32 0.0, %v1468
        %v1470 = vpop.f32.mrb[0].mxu0
        %1471 = vmatprep.mubr.f32.mxu0 0.0
        %1472 = vmatmul.mubr.f32.gmra.mrb[0].mxu0 %v630
        %v1473 = vpop.f32.mrb[0].mxu0
        %v1474 = vadd.f32 0.0, %v1473
        %v1475 = vpop.f32.mrb[0].mxu0
        %1476 = vmatprep.mubr.f32.mxu0 0.0
        %1477 = vmatmul.mubr.f32.gmra.mrb[0].mxu0 %v633
        %v1478 = vpop.f32.mrb[0].mxu0
        %v1479 = vadd.f32 0.0, %v1478
        %v1480 = vpop.f32.mrb[0].mxu0
        %1481 = vmatprep.mubr.f32.mxu0 0.0
        %1482 = vmatmul.mubr.f32.gmra.mrb[0].mxu0 %v636
        %v1483 = vpop.f32.mrb[0].mxu0
        %v1484 = vadd.f32 0.0, %v1483
        %v1485 = vpop.f32.mrb[0].mxu0
        %1486 = vmatprep.mubr.f32.mxu0 0.0
        %1487 = vmatmul.mubr.f32.gmra.mrb[0].mxu0 %v639
        %v1488 = vpop.f32.mrb[0].mxu0
        %v1489 = vadd.f32 0.0, %v1488
        %v1490 = vpop.f32.mrb[0].mxu0
        %1491 = vmatprep.mubr.f32.mxu0 0.0
        %1492 = vmatmul.mubr.f32.gmra.mrb[0].mxu0 %v642
        %v1493 = vpop.f32.mrb[0].mxu0
        %v1494 = vadd.f32 0.0, %v1493
        %v1495 = vpop.f32.mrb[0].mxu0
        %1496 = vmatprep.mubr.f32.mxu0 0.0
        %1497 = vmatmul.mubr.f32.gmra.mrb[0].mxu0 %v645
        %v1498 = vpop.f32.mrb[0].mxu0
        %v1499 = vadd.f32 0.0, %v1498
        %v1500 = vpop.f32.mrb[0].mxu0
        %1501 = vmatprep.mubr.f32.mxu0 0.0
        %1502 = vmatmul.mubr.f32.gmra.mrb[0].mxu0 %v648
        %v1503 = vpop.f32.mrb[0].mxu0
        %v1504 = vadd.f32 0.0, %v1503
        %v1505 = vpop.f32.mrb[0].mxu0
        %1506 = vmatprep.mubr.f32.mxu0 0.0
        %1507 = vmatmul.mubr.f32.gmra.mrb[0].mxu0 %v651
        %v1508 = vpop.f32.mrb[0].mxu0
        %v1509 = vadd.f32 0.0, %v1508
        %v1510 = vpop.f32.mrb[0].mxu0
        %1511 = vmatprep.mubr.f32.mxu0 0.0
        %1512 = vmatmul.mubr.f32.gmra.mrb[0].mxu0 %v654
        %v1513 = vpop.f32.mrb[0].mxu0
        %v1514 = vadd.f32 0.0, %v1513
        %v1515 = vpop.f32.mrb[0].mxu0
        %1516 = vmatprep.mubr.f32.mxu0 0.0
        %1517 = vmatmul.mubr.f32.gmra.mrb[0].mxu0 %v657
        %v1518 = vpop.f32.mrb[0].mxu0
        %v1519 = vadd.f32 0.0, %v1518
        %v1520 = vpop.f32.mrb[0].mxu0
        %1521 = vmatprep.mubr.f32.mxu0 0.0
        %1522 = vmatmul.mubr.f32.gmra.mrb[0].mxu0 %v660
        %v1523 = vpop.f32.mrb[0].mxu0
        %v1524 = vadd.f32 0.0, %v1523
        %v1525 = vpop.f32.mrb[0].mxu0
        %1526 = vmatprep.mubr.f32.mxu0 0.0
        %1527 = vmatmul.mubr.f32.gmra.mrb[0].mxu0 %v663
        %v1528 = vpop.f32.mrb[0].mxu0
        %v1529 = vadd.f32 0.0, %v1528
        %v1530 = vpop.f32.mrb[0].mxu0
        %1531 = vmatprep.mubr.f32.mxu0 0.0
        %1532 = vmatmul.mubr.f32.gmra.mrb[0].mxu0 %v666
        %v1533 = vpop.f32.mrb[0].mxu0
        %v1534 = vadd.f32 0.0, %v1533
        %v1535 = vpop.f32.mrb[0].mxu0
        %1536 = vmatprep.mubr.f32.mxu0 0.0
        %1537 = vmatmul.mubr.f32.gmra.mrb[0].mxu0 %v669
        %v1538 = vpop.f32.mrb[0].mxu0
        %v1539 = vadd.f32 0.0, %v1538
        %v1540 = vpop.f32.mrb[0].mxu0
        %1541 = vmatprep.mubr.f32.mxu0 0.0
        %1542 = vmatmul.mubr.f32.gmra.mrb[0].mxu0 %v672
        %v1543 = vpop.f32.mrb[0].mxu0
        %v1544 = vadd.f32 0.0, %v1543
        %v1545 = vpop.f32.mrb[0].mxu0
        %1546 = vmatprep.mubr.f32.mxu0 0.0
        %1547 = vmatmul.mubr.f32.gmra.mrb[0].mxu0 %v675
        %v1548 = vpop.f32.mrb[0].mxu0
        %v1549 = vadd.f32 0.0, %v1548
        %v1550 = vpop.f32.mrb[0].mxu0
        %1551 = vmatprep.mubr.f32.mxu0 0.0
        %1552 = vmatmul.mubr.f32.gmra.mrb[0].mxu0 %v678
        %v1553 = vpop.f32.mrb[0].mxu0
        %v1554 = vadd.f32 0.0, %v1553
        %v1555 = vpop.f32.mrb[0].mxu0
        %1556 = vmatprep.mubr.f32.mxu0 0.0
        %1557 = vmatmul.mubr.f32.gmra.mrb[0].mxu0 %v681
        %v1558 = vpop.f32.mrb[0].mxu0
        %v1559 = vadd.f32 0.0, %v1558
        %v1560 = vpop.f32.mrb[0].mxu0
        %1561 = vmatprep.mubr.f32.mxu0 0.0
        %1562 = vmatmul.mubr.f32.gmra.mrb[0].mxu0 %v684
        %v1563 = vpop.f32.mrb[0].mxu0
        %v1564 = vadd.f32 0.0, %v1563
        %v1565 = vpop.f32.mrb[0].mxu0
        %1566 = vmatprep.mubr.f32.mxu0 0.0
        %1567 = vmatmul.mubr.f32.gmra.mrb[0].mxu0 %v687
        %v1568 = vpop.f32.mrb[0].mxu0
        %v1569 = vadd.f32 0.0, %v1568
        %v1570 = vpop.f32.mrb[0].mxu0
        %1571 = vmatprep.mubr.f32.mxu0 0.0
        %1572 = vmatmul.mubr.f32.gmra.mrb[0].mxu0 %v690
        %v1573 = vpop.f32.mrb[0].mxu0
        %v1574 = vadd.f32 0.0, %v1573
        %v1575 = vpop.f32.mrb[0].mxu0
        %1576 = vmatprep.mubr.f32.mxu0 0.0
        %1577 = vmatmul.mubr.f32.gmra.mrb[0].mxu0 %v693
        %v1578 = vpop.f32.mrb[0].mxu0
        %v1579 = vadd.f32 0.0, %v1578
        %v1580 = vpop.f32.mrb[0].mxu0
        %1581 = vmatprep.mubr.f32.mxu0 0.0
        %1582 = vmatmul.mubr.f32.gmra.mrb[0].mxu0 %v696
        %v1583 = vpop.f32.mrb[0].mxu0
        %v1584 = vadd.f32 0.0, %v1583
        %v1585 = vpop.f32.mrb[0].mxu0
        %1586 = vmatprep.mubr.f32.mxu0 0.0
        %1587 = vmatmul.mubr.f32.gmra.mrb[0].mxu0 %v699
        %v1588 = vpop.f32.mrb[0].mxu0
        %v1589 = vadd.f32 0.0, %v1588
        %v1590 = vpop.f32.mrb[0].mxu0
        %1591 = vmatprep.mubr.f32.mxu0 0.0
        %1592 = vmatmul.mubr.f32.gmra.mrb[0].mxu0 %v702
        %v1593 = vpop.f32.mrb[0].mxu0
        %v1594 = vadd.f32 0.0, %v1593
        %v1595 = vpop.f32.mrb[0].mxu0
        %1596 = vmatprep.mubr.f32.mxu0 0.0
        %1597 = vmatmul.mubr.f32.gmra.mrb[0].mxu0 %v705
        %v1598 = vpop.f32.mrb[0].mxu0
        %v1599 = vadd.f32 0.0, %v1598
        %v1600 = vpop.f32.mrb[0].mxu0
        %1601 = vmatprep.mubr.f32.mxu0 0.0
        %1602 = vmatmul.mubr.f32.gmra.mrb[0].mxu0 %v708
        %v1603 = vpop.f32.mrb[0].mxu0
        %v1604 = vadd.f32 0.0, %v1603
        %v1605 = vpop.f32.mrb[0].mxu0
        %1606 = vmatprep.mubr.f32.mxu0 0.0
        %1607 = vmatmul.mubr.f32.gmra.mrb[0].mxu0 %v711
        %v1608 = vpop.f32.mrb[0].mxu0
        %v1609 = vadd.f32 0.0, %v1608
        %v1610 = vpop.f32.mrb[0].mxu0
        %1611 = vmatprep.mubr.f32.mxu0 0.0
        %1612 = vmatmul.mubr.f32.gmra.mrb[0].mxu0 %v714
        %v1613 = vpop.f32.mrb[0].mxu0
        %v1614 = vadd.f32 0.0, %v1613
        %v1615 = vpop.f32.mrb[0].mxu0
        %1616 = vmatprep.mubr.f32.mxu0 0.0
        %1617 = vmatmul.mubr.f32.gmra.mrb[0].mxu0 %v717
        %v1618 = vpop.f32.mrb[0].mxu0
        %v1619 = vadd.f32 0.0, %v1618
        %v1620 = vpop.f32.mrb[0].mxu0
        %1621 = vmatprep.mubr.f32.mxu0 0.0
        %1622 = vmatmul.mubr.f32.gmra.mrb[0].mxu0 %v720
        %v1623 = vpop.f32.mrb[0].mxu0
        %v1624 = vadd.f32 0.0, %v1623
        %v1625 = vpop.f32.mrb[0].mxu0
        %1626 = vmatprep.mubr.f32.mxu0 0.0
        %1627 = vmatmul.mubr.f32.gmra.mrb[0].mxu0 %v723
        %v1628 = vpop.f32.mrb[0].mxu0
        %v1629 = vadd.f32 0.0, %v1628
        %v1630 = vpop.f32.mrb[0].mxu0
        %1631 = vmatprep.mubr.f32.mxu0 0.0
        %1632 = vmatmul.mubr.f32.gmra.mrb[0].mxu0 %v726
        %v1633 = vpop.f32.mrb[0].mxu0
        %v1634 = vadd.f32 0.0, %v1633
        %v1635 = vpop.f32.mrb[0].mxu0
        %1636 = vmatprep.mubr.f32.mxu0 0.0
        %1637 = vmatmul.mubr.f32.gmra.mrb[0].mxu0 %v729
        %v1638 = vpop.f32.mrb[0].mxu0
        %v1639 = vadd.f32 0.0, %v1638
        %v1640 = vpop.f32.mrb[0].mxu0
        %1641 = vmatprep.mubr.f32.mxu0 0.0
        %1642 = vmatmul.mubr.f32.gmra.mrb[0].mxu0 %v732
        %v1643 = vpop.f32.mrb[0].mxu0
        %v1644 = vadd.f32 0.0, %v1643
        %v1645 = vpop.f32.mrb[0].mxu0
        %1646 = vmatprep.mubr.f32.mxu0 0.0
        %1647 = vmatmul.mubr.f32.gmra.mrb[0].mxu0 %v735
        %v1648 = vpop.f32.mrb[0].mxu0
        %v1649 = vadd.f32 0.0, %v1648
        %v1650 = vpop.f32.mrb[0].mxu0
        %1651 = vmatprep.mubr.f32.mxu0 0.0
        %1652 = vmatmul.mubr.f32.gmra.mrb[0].mxu0 %v738
        %v1653 = vpop.f32.mrb[0].mxu0
        %v1654 = vadd.f32 0.0, %v1653
        %v1655 = vpop.f32.mrb[0].mxu0
        %1656 = vmatprep.mubr.f32.mxu0 0.0
        %1657 = vmatmul.mubr.f32.gmra.mrb[0].mxu0 %v741
        %v1658 = vpop.f32.mrb[0].mxu0
        %v1659 = vadd.f32 0.0, %v1658
        %v1660 = vpop.f32.mrb[0].mxu0
        %1661 = vmatprep.mubr.f32.mxu0 0.0
        %1662 = vmatmul.mubr.f32.gmra.mrb[0].mxu0 %v744
        %v1663 = vpop.f32.mrb[0].mxu0
        %v1664 = vadd.f32 0.0, %v1663
        %v1665 = vpop.f32.mrb[0].mxu0
        %1666 = vmatprep.mubr.f32.mxu0 0.0
        %1667 = vmatmul.mubr.f32.gmra.mrb[0].mxu0 %v747
        %v1668 = vpop.f32.mrb[0].mxu0
        %v1669 = vadd.f32 0.0, %v1668
        %v1670 = vpop.f32.mrb[0].mxu0
        %1671 = vmatprep.mubr.f32.mxu0 0.0
        %1672 = vmatmul.mubr.f32.gmra.mrb[0].mxu0 %v750
        %v1673 = vpop.f32.mrb[0].mxu0
        %v1674 = vadd.f32 0.0, %v1673
        %v1675 = vpop.f32.mrb[0].mxu0
        %1676 = vmatprep.mubr.f32.mxu0 0.0
        %1677 = vmatmul.mubr.f32.gmra.mrb[0].mxu0 %v753
        %v1678 = vpop.f32.mrb[0].mxu0
        %v1679 = vadd.f32 0.0, %v1678
        %v1680 = vpop.f32.mrb[0].mxu0
        %1681 = vmatprep.mubr.f32.mxu0 0.0
        %1682 = vmatmul.mubr.f32.gmra.mrb[0].mxu0 %v756
        %v1683 = vpop.f32.mrb[0].mxu0
        %v1684 = vadd.f32 0.0, %v1683
        %v1685 = vpop.f32.mrb[0].mxu0
        %1686 = vmatprep.mubr.f32.mxu0 0.0
        %1687 = vmatmul.mubr.f32.gmra.mrb[0].mxu0 %v759
        %v1688 = vpop.f32.mrb[0].mxu0
        %v1689 = vadd.f32 0.0, %v1688
        %v1690 = vpop.f32.mrb[0].mxu0
        %1691 = vmatprep.mubr.f32.mxu0 0.0
        %1692 = vmatmul.mubr.f32.gmra.mrb[0].mxu0 %v762
        %v1693 = vpop.f32.mrb[0].mxu0
        %v1694 = vadd.f32 0.0, %v1693
        %v1695 = vpop.f32.mrb[0].mxu0
        %1696 = vmatprep.mubr.f32.mxu0 0.0
        %1697 = vmatmul.mubr.f32.gmra.mrb[0].mxu0 %v765
        %v1698 = vpop.f32.mrb[0].mxu0
        %v1699 = vadd.f32 0.0, %v1698
        %v1700 = vpop.f32.mrb[0].mxu0
        %1701 = vmatprep.mubr.f32.mxu0 0.0
        %1702 = vmatmul.mubr.f32.gmra.mrb[0].mxu0 %v768
        %v1703 = vpop.f32.mrb[0].mxu0
        %v1704 = vadd.f32 0.0, %v1703
        %v1705 = vpop.f32.mrb[0].mxu0
        %1706 = vmatprep.mubr.f32.mxu0 0.0
        %1707 = vmatmul.mubr.f32.gmra.mrb[0].mxu0 %v771
        %v1708 = vpop.f32.mrb[0].mxu0
        %v1709 = vadd.f32 0.0, %v1708
        %v1710 = vpop.f32.mrb[0].mxu0
        %1711 = vmatprep.mubr.f32.mxu0 0.0
        %1712 = vmatmul.mubr.f32.gmra.mrb[0].mxu0 %v774
        %v1713 = vpop.f32.mrb[0].mxu0
        %v1714 = vadd.f32 0.0, %v1713
        %v1715 = vpop.f32.mrb[0].mxu0
        %1716 = vmatprep.mubr.f32.mxu0 0.0
        %1717 = vmatmul.mubr.f32.gmra.mrb[0].mxu0 %v777
        %v1718 = vpop.f32.mrb[0].mxu0
        %v1719 = vadd.f32 0.0, %v1718
        %v1720 = vpop.f32.mrb[0].mxu0
        %1721 = vmatprep.mubr.f32.mxu0 0.0
        %1722 = vmatmul.mubr.f32.gmra.mrb[0].mxu0 %v780
        %v1723 = vpop.f32.mrb[0].mxu0
        %v1724 = vadd.f32 0.0, %v1723
        %v1725 = vpop.f32.mrb[0].mxu0
        %1726 = vmatprep.mubr.f32.mxu0 0.0
        %1727 = vmatmul.mubr.f32.gmra.mrb[0].mxu0 %v783
        %v1728 = vpop.f32.mrb[0].mxu0
        %v1729 = vadd.f32 0.0, %v1728
        %v1730 = vpop.f32.mrb[0].mxu0
        %1731 = vmatprep.mubr.f32.mxu0 0.0
        %1732 = vmatmul.mubr.f32.gmra.mrb[0].mxu0 %v786
        %v1733 = vpop.f32.mrb[0].mxu0
        %v1734 = vadd.f32 0.0, %v1733
        %v1735 = vpop.f32.mrb[0].mxu0
        %1736 = vmatprep.mubr.f32.mxu0 0.0
        %1737 = vmatmul.mubr.f32.gmra.mrb[0].mxu0 %v789
        %v1738 = vpop.f32.mrb[0].mxu0
        %v1739 = vadd.f32 0.0, %v1738
        %v1740 = vpop.f32.mrb[0].mxu0
        %1741 = vmatprep.mubr.f32.mxu0 0.0
        %1742 = vmatmul.mubr.f32.gmra.mrb[0].mxu0 %v792
        %v1743 = vpop.f32.mrb[0].mxu0
        %v1744 = vadd.f32 0.0, %v1743
        %v1745 = vpop.f32.mrb[0].mxu0
        %1746 = vmatprep.mubr.f32.mxu0 0.0
        %1747 = vmatmul.mubr.f32.gmra.mrb[0].mxu0 %v795
        %v1748 = vpop.f32.mrb[0].mxu0
        %v1749 = vadd.f32 0.0, %v1748
        %v1750 = vpop.f32.mrb[0].mxu0
        %1751 = vmatprep.mubr.f32.mxu0 0.0
        %1752 = vmatmul.mubr.f32.gmra.mrb[0].mxu0 %v798
        %v1753 = vpop.f32.mrb[0].mxu0
        %v1754 = vadd.f32 0.0, %v1753
        %v1755 = vpop.f32.mrb[0].mxu0
        %1756 = vmatprep.mubr.f32.mxu0 0.0
        %1757 = vmatmul.mubr.f32.gmra.mrb[0].mxu0 %v801
        %v1758 = vpop.f32.mrb[0].mxu0
        %v1759 = vadd.f32 0.0, %v1758
        %v1760 = vpop.f32.mrb[0].mxu0
        %1761 = vmatprep.mubr.f32.mxu0 0.0
        %1762 = vmatmul.mubr.f32.gmra.mrb[0].mxu0 %v804
        %v1763 = vpop.f32.mrb[0].mxu0
        %v1764 = vadd.f32 0.0, %v1763
        %v1765 = vpop.f32.mrb[0].mxu0
        %1766 = vmatprep.mubr.f32.mxu0 0.0
        %1767 = vmatmul.mubr.f32.gmra.mrb[0].mxu0 %v807
        %v1768 = vpop.f32.mrb[0].mxu0
        %v1769 = vadd.f32 0.0, %v1768
        %v1770 = vpop.f32.mrb[0].mxu0
        %1771 = vmatprep.mubr.f32.mxu0 0.0
        %1772 = vmatmul.mubr.f32.gmra.mrb[0].mxu0 %v810
        %v1773 = vpop.f32.mrb[0].mxu0
        %v1774 = vadd.f32 0.0, %v1773
        %v1775 = vpop.f32.mrb[0].mxu0
        %1776 = vmatprep.mubr.f32.mxu0 0.0
        %1777 = vmatmul.mubr.f32.gmra.mrb[0].mxu0 %v813
        %v1778 = vpop.f32.mrb[0].mxu0
        %v1779 = vadd.f32 0.0, %v1778
        %v1780 = vpop.f32.mrb[0].mxu0
        %1781 = vmatprep.mubr.f32.mxu0 0.0
        %1782 = vmatmul.mubr.f32.gmra.mrb[0].mxu0 %v816
        %v1783 = vpop.f32.mrb[0].mxu0
        %v1784 = vadd.f32 0.0, %v1783
        %v1785 = vpop.f32.mrb[0].mxu0
        %1786 = vmatprep.mubr.f32.mxu0 0.0
        %1787 = vmatmul.mubr.f32.gmra.mrb[0].mxu0 %v819
        %v1788 = vpop.f32.mrb[0].mxu0
        %v1789 = vadd.f32 0.0, %v1788
        %v1790 = vpop.f32.mrb[0].mxu0
        %1791 = vmatprep.mubr.f32.mxu0 0.0
        %1792 = vmatmul.mubr.f32.gmra.mrb[0].mxu0 %v822
        %v1793 = vpop.f32.mrb[0].mxu0
        %v1794 = vadd.f32 0.0, %v1793
        %v1795 = vpop.f32.mrb[0].mxu0
        %1796 = vmatprep.mubr.f32.mxu0 0.0
        %1797 = vmatmul.mubr.f32.gmra.mrb[0].mxu0 %v825
        %v1798 = vpop.f32.mrb[0].mxu0
        %v1799 = vadd.f32 0.0, %v1798
        %v1800 = vpop.f32.mrb[0].mxu0
        %1801 = vmatprep.mubr.f32.mxu0 0.0
        %1802 = vmatmul.mubr.f32.gmra.mrb[0].mxu0 %v828
        %v1803 = vpop.f32.mrb[0].mxu0
        %v1804 = vadd.f32 0.0, %v1803
        %v1805 = vpop.f32.mrb[0].mxu0
        %1806 = vmatprep.mubr.f32.mxu0 0.0
        %1807 = vmatmul.mubr.f32.gmra.mrb[0].mxu0 %v831
        %v1808 = vpop.f32.mrb[0].mxu0
        %v1809 = vadd.f32 0.0, %v1808
        %v1810 = vpop.f32.mrb[0].mxu0
        %1811 = vmatprep.mubr.f32.mxu0 0.0
        %1812 = vmatmul.mubr.f32.gmra.mrb[0].mxu0 %v834
        %v1813 = vpop.f32.mrb[0].mxu0
        %v1814 = vadd.f32 0.0, %v1813
        %v1815 = vpop.f32.mrb[0].mxu0
        %1816 = vmatprep.mubr.f32.mxu0 0.0
        %1817 = vmatmul.mubr.f32.gmra.mrb[0].mxu0 %v837
        %v1818 = vpop.f32.mrb[0].mxu0
        %v1819 = vadd.f32 0.0, %v1818
        %v1820 = vpop.f32.mrb[0].mxu0
        %1821 = vmatprep.mubr.f32.mxu0 0.0
        %1822 = vmatmul.mubr.f32.gmra.mrb[0].mxu0 %v840
        %v1823 = vpop.f32.mrb[0].mxu0
        %v1824 = vadd.f32 0.0, %v1823
        %v1825 = vpop.f32.mrb[0].mxu0
        %1826 = vmatprep.mubr.f32.mxu0 0.0
        %1827 = vmatmul.mubr.f32.gmra.mrb[0].mxu0 %v843
        %v1828 = vpop.f32.mrb[0].mxu0
        %v1829 = vadd.f32 0.0, %v1828
        %v1830 = vpop.f32.mrb[0].mxu0
        %1831 = vmatprep.mubr.f32.mxu0 0.0
        %1832 = vmatmul.mubr.f32.gmra.mrb[0].mxu0 %v846
        %v1833 = vpop.f32.mrb[0].mxu0
        %v1834 = vadd.f32 0.0, %v1833
        %v1835 = vpop.f32.mrb[0].mxu0
        %1836 = vmatprep.mubr.f32.mxu0 0.0
        %1837 = vmatmul.mubr.f32.gmra.mrb[0].mxu0 %v849
        %v1838 = vpop.f32.mrb[0].mxu0
        %v1839 = vadd.f32 0.0, %v1838
        %v1840 = vpop.f32.mrb[0].mxu0
        %1841 = vmatprep.mubr.f32.mxu0 0.0
        %1842 = vmatmul.mubr.f32.gmra.mrb[0].mxu0 %v852
        %v1843 = vpop.f32.mrb[0].mxu0
        %v1844 = vadd.f32 0.0, %v1843
        %v1845 = vpop.f32.mrb[0].mxu0
        %1846 = vmatprep.mubr.f32.mxu0 0.0
        %1847 = vmatmul.mubr.f32.gmra.mrb[0].mxu0 %v855
        %v1848 = vpop.f32.mrb[0].mxu0
        %v1849 = vadd.f32 0.0, %v1848
        %v1850 = vpop.f32.mrb[0].mxu0
        %1851 = vmatprep.mubr.f32.mxu0 0.0
        %1852 = vmatmul.mubr.f32.gmra.mrb[0].mxu0 %v858
        %v1853 = vpop.f32.mrb[0].mxu0
        %v1854 = vadd.f32 0.0, %v1853
        %v1855 = vpop.f32.mrb[0].mxu0
        %1856 = vmatprep.mubr.f32.mxu0 0.0
        %1857 = vmatmul.mubr.f32.gmra.mrb[0].mxu0 %v861
        %v1858 = vpop.f32.mrb[0].mxu0
        %v1859 = vadd.f32 0.0, %v1858
        %v1860 = vpop.f32.mrb[0].mxu0
        %1861 = vmatprep.mubr.f32.mxu0 0.0
        %1862 = vmatmul.mubr.f32.gmra.mrb[0].mxu0 %v864
        %v1863 = vpop.f32.mrb[0].mxu0
        %v1864 = vadd.f32 0.0, %v1863
        %v1865 = vpop.f32.mrb[0].mxu0
        %1866 = vmatprep.mubr.f32.mxu0 0.0
        %1867 = vmatmul.mubr.f32.gmra.mrb[0].mxu0 %v867
        %v1868 = vpop.f32.mrb[0].mxu0
        %v1869 = vadd.f32 0.0, %v1868
        %v1870 = vpop.f32.mrb[0].mxu0
        %1871 = vmatprep.mubr.f32.mxu0 0.0
        %1872 = vmatmul.mubr.f32.gmra.mrb[0].mxu0 %v870
        %v1873 = vpop.f32.mrb[0].mxu0
        %v1874 = vadd.f32 0.0, %v1873
        %v1875 = vpop.f32.mrb[0].mxu0
        %1876 = vmatprep.mubr.f32.mxu0 0.0
        %1877 = vmatmul.mubr.f32.gmra.mrb[0].mxu0 %v873
        %v1878 = vpop.f32.mrb[0].mxu0
        %v1879 = vadd.f32 0.0, %v1878
        %v1880 = vpop.f32.mrb[0].mxu0
        %1881 = vmatprep.mubr.f32.mxu0 0.0
        %1882 = vmatmul.mubr.f32.gmra.mrb[0].mxu0 %v876
        %v1883 = vpop.f32.mrb[0].mxu0
        %v1884 = vadd.f32 0.0, %v1883
        %v1885 = vpop.f32.mrb[0].mxu0
        %1886 = vmatprep.mubr.f32.mxu0 0.0
        %1887 = vmatmul.mubr.f32.gmra.mrb[0].mxu0 %v879
        %v1888 = vpop.f32.mrb[0].mxu0
        %v1889 = vadd.f32 0.0, %v1888
        %v1890 = vpop.f32.mrb[0].mxu0
        %1891 = vmatprep.mubr.f32.mxu0 0.0
        %1892 = vmatmul.mubr.f32.gmra.mrb[0].mxu0 %v882
        %v1893 = vpop.f32.mrb[0].mxu0
        %v1894 = vadd.f32 0.0, %v1893
        %v1895 = vpop.f32.mrb[0].mxu0
        %1896 = vmatprep.mubr.f32.mxu0 0.0
        %1897 = vmatmul.mubr.f32.gmra.mrb[0].mxu0 %v885
        %v1898 = vpop.f32.mrb[0].mxu0
        %v1899 = vadd.f32 0.0, %v1898
        %v1900 = vpop.f32.mrb[0].mxu0
        %1901 = vmatprep.mubr.f32.mxu0 0.0
        %1902 = vmatmul.mubr.f32.gmra.mrb[0].mxu0 %v888
        %v1903 = vpop.f32.mrb[0].mxu0
        %v1904 = vadd.f32 0.0, %v1903
        %v1905 = vpop.f32.mrb[0].mxu0
        %1906 = vmatprep.mubr.f32.mxu0 0.0
        %1907 = vmatmul.mubr.f32.gmra.mrb[0].mxu0 %v891
        %v1908 = vpop.f32.mrb[0].mxu0
        %v1909 = vadd.f32 0.0, %v1908
        %v1910 = vpop.f32.mrb[0].mxu0
        %1911 = vmatprep.mubr.f32.mxu0 0.0
        %1912 = vmatmul.mubr.f32.gmra.mrb[0].mxu0 %v894
        %v1913 = vpop.f32.mrb[0].mxu0
        %v1914 = vadd.f32 0.0, %v1913
        %v1915 = vpop.f32.mrb[0].mxu0
        %1916 = vmatprep.mubr.f32.mxu0 0.0
        %1917 = vmatmul.mubr.f32.gmra.mrb[0].mxu0 %v897
        %v1918 = vpop.f32.mrb[0].mxu0
        %v1919 = vadd.f32 0.0, %v1918
        %v1920 = vpop.f32.mrb[0].mxu0
        %1921 = vmatprep.mubr.f32.mxu0 0.0
        %1922 = vmatmul.mubr.f32.gmra.mrb[0].mxu0 %v900
        %v1923 = vpop.f32.mrb[0].mxu0
        %v1924 = vadd.f32 0.0, %v1923
        %v1925 = vpop.f32.mrb[0].mxu0
        %1926 = vmatprep.mubr.f32.mxu0 0.0
        %1927 = vmatmul.mubr.f32.gmra.mrb[0].mxu0 %v903
        %v1928 = vpop.f32.mrb[0].mxu0
        %v1929 = vadd.f32 0.0, %v1928
        %v1930 = vpop.f32.mrb[0].mxu0
        %1931 = vmatprep.mubr.f32.mxu0 0.0
        %1932 = vmatmul.mubr.f32.gmra.mrb[0].mxu0 %v906
        %v1933 = vpop.f32.mrb[0].mxu0
        %v1934 = vadd.f32 0.0, %v1933
        %v1935 = vpop.f32.mrb[0].mxu0
        %1936 = vmatprep.mubr.f32.mxu0 0.0
        %1937 = vmatmul.mubr.f32.gmra.mrb[0].mxu0 %v909
        %v1938 = vpop.f32.mrb[0].mxu0
        %v1939 = vadd.f32 0.0, %v1938
        %v1940 = vpop.f32.mrb[0].mxu0
        %1941 = vmatprep.mubr.f32.mxu0 0.0
        %1942 = vmatmul.mubr.f32.gmra.mrb[0].mxu0 %v912
        %v1943 = vpop.f32.mrb[0].mxu0
        %v1944 = vadd.f32 0.0, %v1943
        %v1945 = vpop.f32.mrb[0].mxu0
        %1946 = vmatprep.mubr.f32.mxu0 0.0
        %1947 = vmatmul.mubr.f32.gmra.mrb[0].mxu0 %v915
        %v1948 = vpop.f32.mrb[0].mxu0
        %v1949 = vadd.f32 0.0, %v1948
        %v1950 = vpop.f32.mrb[0].mxu0
        %1951 = vmatprep.mubr.f32.mxu0 0.0
        %1952 = vmatmul.mubr.f32.gmra.mrb[0].mxu0 %v918
        %v1953 = vpop.f32.mrb[0].mxu0
        %v1954 = vadd.f32 0.0, %v1953
        %v1955 = vpop.f32.mrb[0].mxu0
        %1956 = vmatprep.mubr.f32.mxu0 0.0
        %1957 = vmatmul.mubr.f32.gmra.mrb[0].mxu0 %v921
        %v1958 = vpop.f32.mrb[0].mxu0
        %v1959 = vadd.f32 0.0, %v1958
        %v1960 = vpop.f32.mrb[0].mxu0
        %1961 = vmatprep.mubr.f32.mxu0 0.0
        %1962 = vmatmul.mubr.f32.gmra.mrb[0].mxu0 %v924
        %v1963 = vpop.f32.mrb[0].mxu0
        %v1964 = vadd.f32 0.0, %v1963
        %v1965 = vpop.f32.mrb[0].mxu0
        %1966 = vmatprep.mubr.f32.mxu0 0.0
        %1967 = vmatmul.mubr.f32.gmra.mrb[0].mxu0 %v927
        %v1968 = vpop.f32.mrb[0].mxu0
        %v1969 = vadd.f32 0.0, %v1968
        %v1970 = vpop.f32.mrb[0].mxu0
        %1971 = vmatprep.mubr.f32.mxu0 0.0
        %1972 = vmatmul.mubr.f32.gmra.mrb[0].mxu0 %v930
        %v1973 = vpop.f32.mrb[0].mxu0
        %v1974 = vadd.f32 0.0, %v1973
        %v1975 = vpop.f32.mrb[0].mxu0
        %1976 = vmatprep.mubr.f32.mxu0 0.0
        %1977 = vmatmul.mubr.f32.gmra.mrb[0].mxu0 %v933
        %v1978 = vpop.f32.mrb[0].mxu0
        %v1979 = vadd.f32 0.0, %v1978
        %v1980 = vpop.f32.mrb[0].mxu0
        %1981 = vmatprep.mubr.f32.mxu0 0.0
        %1982 = vmatmul.mubr.f32.gmra.mrb[0].mxu0 %v936
        %v1983 = vpop.f32.mrb[0].mxu0
        %v1984 = vadd.f32 0.0, %v1983
        %v1985 = vpop.f32.mrb[0].mxu0
        %1986 = vmatprep.mubr.f32.mxu0 0.0
        %1987 = vmatmul.mubr.f32.gmra.mrb[0].mxu0 %v939
        %v1988 = vpop.f32.mrb[0].mxu0
        %v1989 = vadd.f32 0.0, %v1988
        %v1990 = vpop.f32.mrb[0].mxu0
        %1991 = vmatprep.mubr.f32.mxu0 0.0
        %1992 = vmatmul.mubr.f32.gmra.mrb[0].mxu0 %v942
        %v1993 = vpop.f32.mrb[0].mxu0
        %v1994 = vadd.f32 0.0, %v1993
        %v1995 = vpop.f32.mrb[0].mxu0
        %1996 = vmatprep.mubr.f32.mxu0 0.0
        %1997 = vmatmul.mubr.f32.gmra.mrb[0].mxu0 %v945
        %v1998 = vpop.f32.mrb[0].mxu0
        %v1999 = vadd.f32 0.0, %v1998
        %v2000 = vpop.f32.mrb[0].mxu0
        %2001 = vmatprep.mubr.f32.mxu0 0.0
        %2002 = vmatmul.mubr.f32.gmra.mrb[0].mxu0 %v948
        %v2003 = vpop.f32.mrb[0].mxu0
        %v2004 = vadd.f32 0.0, %v2003
        %v2005 = vpop.f32.mrb[0].mxu0
        %2006 = vmatprep.mubr.f32.mxu0 0.0
        %2007 = vmatmul.mubr.f32.gmra.mrb[0].mxu0 %v951
        %v2008 = vpop.f32.mrb[0].mxu0
        %v2009 = vadd.f32 0.0, %v2008
        %v2010 = vpop.f32.mrb[0].mxu0
        %2011 = vmatprep.mubr.f32.mxu0 0.0
        %2012 = vmatmul.mubr.f32.gmra.mrb[0].mxu0 %v954
        %v2013 = vpop.f32.mrb[0].mxu0
        %v2014 = vadd.f32 0.0, %v2013
        %v2015 = vpop.f32.mrb[0].mxu0
        %2016 = vmatprep.mubr.f32.mxu0 0.0
        %2017 = vmatmul.mubr.f32.gmra.mrb[0].mxu0 %v957
        %v2018 = vpop.f32.mrb[0].mxu0
        %v2019 = vadd.f32 0.0, %v2018
        %v2020 = vpop.f32.mrb[0].mxu0
        %2021 = vmatprep.mubr.f32.mxu0 0.0
        %2022 = vmatmul.mubr.f32.gmra.mrb[0].mxu0 %v960
        %v2023 = vpop.f32.mrb[0].mxu0
        %v2024 = vadd.f32 0.0, %v2023
        %v2025 = vpop.f32.mrb[0].mxu0
        %2026 = vmatprep.mubr.f32.mxu0 0.0
        %2027 = vmatmul.mubr.f32.gmra.mrb[0].mxu0 %v963
        %v2028 = vpop.f32.mrb[0].mxu0
        %v2029 = vadd.f32 0.0, %v2028
        %v2030 = vpop.f32.mrb[0].mxu0
        %2031 = vmatprep.mubr.f32.mxu0 0.0
        %2032 = vmatmul.mubr.f32.gmra.mrb[0].mxu0 %v966
        %v2033 = vpop.f32.mrb[0].mxu0
        %v2034 = vadd.f32 0.0, %v2033
        %v2035 = vpop.f32.mrb[0].mxu0
        %2036 = vmatprep.mubr.f32.mxu0 0.0
        %2037 = vmatmul.mubr.f32.gmra.mrb[0].mxu0 %v969
        %v2038 = vpop.f32.mrb[0].mxu0
        %v2039 = vadd.f32 0.0, %v2038
        %v2040 = vpop.f32.mrb[0].mxu0
        %2041 = vmatprep.mubr.f32.mxu0 0.0
        %2042 = vmatmul.mubr.f32.gmra.mrb[0].mxu0 %v972
        %v2043 = vpop.f32.mrb[0].mxu0
        %v2044 = vadd.f32 0.0, %v2043
        %v2045 = vpop.f32.mrb[0].mxu0
        %2046 = vmatprep.mubr.f32.mxu0 0.0
        %2047 = vmatmul.mubr.f32.gmra.mrb[0].mxu0 %v975
        %v2048 = vpop.f32.mrb[0].mxu0
        %v2049 = vadd.f32 0.0, %v2048
        %v2050 = vpop.f32.mrb[0].mxu0
        %2051 = vmatprep.mubr.f32.mxu0 0.0
        %2052 = vmatmul.mubr.f32.gmra.mrb[0].mxu0 %v978
        %v2053 = vpop.f32.mrb[0].mxu0
        %v2054 = vadd.f32 0.0, %v2053
        %v2055 = vpop.f32.mrb[0].mxu0
        %2056 = vmatprep.mubr.f32.mxu0 0.0
        %2057 = vmatmul.mubr.f32.gmra.mrb[0].mxu0 %v981
        %v2058 = vpop.f32.mrb[0].mxu0
        %v2059 = vadd.f32 0.0, %v2058
        %v2060 = vpop.f32.mrb[0].mxu0
        %2061 = vmatprep.mubr.f32.mxu0 0.0
        %2062 = vmatmul.mubr.f32.gmra.mrb[0].mxu0 %v984
        %v2063 = vpop.f32.mrb[0].mxu0
        %v2064 = vadd.f32 0.0, %v2063
        %v2065 = vpop.f32.mrb[0].mxu0
        %2066 = vmatprep.mubr.f32.mxu0 0.0
        %2067 = vmatmul.mubr.f32.gmra.mrb[0].mxu0 %v987
        %v2068 = vpop.f32.mrb[0].mxu0
        %v2069 = vadd.f32 0.0, %v2068
        %v2070 = vpop.f32.mrb[0].mxu0
        %2071 = vmatprep.mubr.f32.mxu0 0.0
        %2072 = vmatmul.mubr.f32.gmra.mrb[0].mxu0 %v990
        %v2073 = vpop.f32.mrb[0].mxu0
        %v2074 = vadd.f32 0.0, %v2073
        %v2075 = vpop.f32.mrb[0].mxu0
        %2076 = vmatprep.mubr.f32.mxu0 0.0
        %2077 = vmatmul.mubr.f32.gmra.mrb[0].mxu0 %v993
        %v2078 = vpop.f32.mrb[0].mxu0
        %v2079 = vadd.f32 0.0, %v2078
        %v2080 = vpop.f32.mrb[0].mxu0
        %2081 = vmatprep.mubr.f32.mxu0 0.0
        %2082 = vmatmul.mubr.f32.gmra.mrb[0].mxu0 %v996
        %v2083 = vpop.f32.mrb[0].mxu0
        %v2084 = vadd.f32 0.0, %v2083
        %v2085 = vpop.f32.mrb[0].mxu0
        %2086 = vmatprep.mubr.f32.mxu0 0.0
        %2087 = vmatmul.mubr.f32.gmra.mrb[0].mxu0 %v999
        %v2088 = vpop.f32.mrb[0].mxu0
        %v2089 = vadd.f32 0.0, %v2088
        %v2090 = vpop.f32.mrb[0].mxu0
        %2091 = vmatprep.mubr.f32.mxu0 0.0
        %2092 = vmatmul.mubr.f32.gmra.mrb[0].mxu0 %v1002
        %v2093 = vpop.f32.mrb[0].mxu0
        %v2094 = vadd.f32 0.0, %v2093
        %v2095 = vpop.f32.mrb[0].mxu0
        %2096 = vmatprep.mubr.f32.mxu0 0.0
        %2097 = vmatmul.mubr.f32.gmra.mrb[0].mxu0 %v1005
        %v2098 = vpop.f32.mrb[0].mxu0
        %v2099 = vadd.f32 0.0, %v2098
        %v2100 = vpop.f32.mrb[0].mxu0
        %2101 = vmatprep.mubr.f32.mxu0 0.0
        %2102 = vmatmul.mubr.f32.gmra.mrb[0].mxu0 %v1008
        %v2103 = vpop.f32.mrb[0].mxu0
        %v2104 = vadd.f32 0.0, %v2103
        %v2105 = vpop.f32.mrb[0].mxu0
        %2106 = vmatprep.mubr.f32.mxu0 0.0
        %2107 = vmatmul.mubr.f32.gmra.mrb[0].mxu0 %v1011
        %v2108 = vpop.f32.mrb[0].mxu0
        %v2109 = vadd.f32 0.0, %v2108
        %v2110 = vpop.f32.mrb[0].mxu0
        %2111 = vmatprep.mubr.f32.mxu0 0.0
        %2112 = vmatmul.mubr.f32.gmra.mrb[0].mxu0 %v1014
        %v2113 = vpop.f32.mrb[0].mxu0
        %v2114 = vadd.f32 0.0, %v2113
        %v2115 = vpop.f32.mrb[0].mxu0
        %2116 = vmatprep.mubr.f32.mxu0 0.0
        %2117 = vmatmul.mubr.f32.gmra.mrb[0].mxu0 %v1017
        %v2118 = vpop.f32.mrb[0].mxu0
        %v2119 = vadd.f32 0.0, %v2118
        %v2120 = vpop.f32.mrb[0].mxu0
        %2121 = vmatprep.mubr.f32.mxu0 0.0
        %2122 = vmatmul.mubr.f32.gmra.mrb[0].mxu0 %v1020
        %v2123 = vpop.f32.mrb[0].mxu0
        %v2124 = vadd.f32 0.0, %v2123
        %v2125 = vpop.f32.mrb[0].mxu0
        %2126 = vdwg.mxu0
        %vm2127 = vcmask 523264
        %v2128 = vsel %vm2127, %v1089, -inf
        %v2129 = vsel %vm2127, %v1094, -inf
        %v2130 = vmax.f32 %v2128, %v2129
        %v2131 = vrot.slane %v2130, 4
        %v2132 = vmax.f32 %v2130, %v2131
        %v2133 = vrot.slane %v2132, 2
        %v2134 = vmax.f32 %v2132, %v2133
        %v2135 = vrot.slane %v2134, 1
        %v2136 = vmax.f32 %v2134, %v2135
        %v2137 = vsel %vm2127, %v1099, -inf
        %v2138 = vsel %vm2127, %v1104, -inf
        %v2139 = vmax.f32 %v2137, %v2138
        %v2140 = vrot.slane %v2139, 4
        %v2141 = vmax.f32 %v2139, %v2140
        %v2142 = vrot.slane %v2141, 2
        %v2143 = vmax.f32 %v2141, %v2142
        %v2144 = vrot.slane %v2143, 1
        %v2145 = vmax.f32 %v2143, %v2144
        %v2146 = vsel %vm2127, %v1109, -inf
        %v2147 = vsel %vm2127, %v1114, -inf
        %v2148 = vmax.f32 %v2146, %v2147
        %v2149 = vrot.slane %v2148, 4
        %v2150 = vmax.f32 %v2148, %v2149
        %v2151 = vrot.slane %v2150, 2
        %v2152 = vmax.f32 %v2150, %v2151
        %v2153 = vrot.slane %v2152, 1
        %v2154 = vmax.f32 %v2152, %v2153
        %v2155 = vsel %vm2127, %v1119, -inf
        %v2156 = vsel %vm2127, %v1124, -inf
        %v2157 = vmax.f32 %v2155, %v2156
        %v2158 = vrot.slane %v2157, 4
        %v2159 = vmax.f32 %v2157, %v2158
        %v2160 = vrot.slane %v2159, 2
        %v2161 = vmax.f32 %v2159, %v2160
        %v2162 = vrot.slane %v2161, 1
        %v2163 = vmax.f32 %v2161, %v2162
        %v2164 = vsel %vm2127, %v1129, -inf
        %v2165 = vsel %vm2127, %v1134, -inf
        %v2166 = vmax.f32 %v2164, %v2165
        %v2167 = vrot.slane %v2166, 4
        %v2168 = vmax.f32 %v2166, %v2167
        %v2169 = vrot.slane %v2168, 2
        %v2170 = vmax.f32 %v2168, %v2169
        %v2171 = vrot.slane %v2170, 1
        %v2172 = vmax.f32 %v2170, %v2171
        %v2173 = vsel %vm2127, %v1139, -inf
        %v2174 = vsel %vm2127, %v1144, -inf
        %v2175 = vmax.f32 %v2173, %v2174
        %v2176 = vrot.slane %v2175, 4
        %v2177 = vmax.f32 %v2175, %v2176
        %v2178 = vrot.slane %v2177, 2
        %v2179 = vmax.f32 %v2177, %v2178
        %v2180 = vrot.slane %v2179, 1
        %v2181 = vmax.f32 %v2179, %v2180
        %v2182 = vsel %vm2127, %v1149, -inf
        %v2183 = vsel %vm2127, %v1154, -inf
        %v2184 = vmax.f32 %v2182, %v2183
        %v2185 = vrot.slane %v2184, 4
        %v2186 = vmax.f32 %v2184, %v2185
        %v2187 = vrot.slane %v2186, 2
        %v2188 = vmax.f32 %v2186, %v2187
        %v2189 = vrot.slane %v2188, 1
        %v2190 = vmax.f32 %v2188, %v2189
        %v2191 = vsel %vm2127, %v1159, -inf
        %v2192 = vsel %vm2127, %v1164, -inf
        %v2193 = vmax.f32 %v2191, %v2192
        %v2194 = vrot.slane %v2193, 4
        %v2195 = vmax.f32 %v2193, %v2194
        %v2196 = vrot.slane %v2195, 2
        %v2197 = vmax.f32 %v2195, %v2196
        %v2198 = vrot.slane %v2197, 1
        %v2199 = vmax.f32 %v2197, %v2198
        %v2200 = vsel %vm2127, %v1169, -inf
        %v2201 = vsel %vm2127, %v1174, -inf
        %v2202 = vmax.f32 %v2200, %v2201
        %v2203 = vrot.slane %v2202, 4
        %v2204 = vmax.f32 %v2202, %v2203
        %v2205 = vrot.slane %v2204, 2
        %v2206 = vmax.f32 %v2204, %v2205
        %v2207 = vrot.slane %v2206, 1
        %v2208 = vmax.f32 %v2206, %v2207
        %v2209 = vsel %vm2127, %v1179, -inf
        %v2210 = vsel %vm2127, %v1184, -inf
        %v2211 = vmax.f32 %v2209, %v2210
        %v2212 = vrot.slane %v2211, 4
        %v2213 = vmax.f32 %v2211, %v2212
        %v2214 = vrot.slane %v2213, 2
        %v2215 = vmax.f32 %v2213, %v2214
        %v2216 = vrot.slane %v2215, 1
        %v2217 = vmax.f32 %v2215, %v2216
        %v2218 = vsel %vm2127, %v1189, -inf
        %v2219 = vsel %vm2127, %v1194, -inf
        %v2220 = vmax.f32 %v2218, %v2219
        %v2221 = vrot.slane %v2220, 4
        %v2222 = vmax.f32 %v2220, %v2221
        %v2223 = vrot.slane %v2222, 2
        %v2224 = vmax.f32 %v2222, %v2223
        %v2225 = vrot.slane %v2224, 1
        %v2226 = vmax.f32 %v2224, %v2225
        %v2227 = vsel %vm2127, %v1199, -inf
        %v2228 = vsel %vm2127, %v1204, -inf
        %v2229 = vmax.f32 %v2227, %v2228
        %v2230 = vrot.slane %v2229, 4
        %v2231 = vmax.f32 %v2229, %v2230
        %v2232 = vrot.slane %v2231, 2
        %v2233 = vmax.f32 %v2231, %v2232
        %v2234 = vrot.slane %v2233, 1
        %v2235 = vmax.f32 %v2233, %v2234
        %v2236 = vsel %vm2127, %v1209, -inf
        %v2237 = vsel %vm2127, %v1214, -inf
        %v2238 = vmax.f32 %v2236, %v2237
        %v2239 = vrot.slane %v2238, 4
        %v2240 = vmax.f32 %v2238, %v2239
        %v2241 = vrot.slane %v2240, 2
        %v2242 = vmax.f32 %v2240, %v2241
        %v2243 = vrot.slane %v2242, 1
        %v2244 = vmax.f32 %v2242, %v2243
        %v2245 = vsel %vm2127, %v1219, -inf
        %v2246 = vsel %vm2127, %v1224, -inf
        %v2247 = vmax.f32 %v2245, %v2246
        %v2248 = vrot.slane %v2247, 4
        %v2249 = vmax.f32 %v2247, %v2248
        %v2250 = vrot.slane %v2249, 2
        %v2251 = vmax.f32 %v2249, %v2250
        %v2252 = vrot.slane %v2251, 1
        %v2253 = vmax.f32 %v2251, %v2252
        %v2254 = vsel %vm2127, %v1229, -inf
        %v2255 = vsel %vm2127, %v1234, -inf
        %v2256 = vmax.f32 %v2254, %v2255
        %v2257 = vrot.slane %v2256, 4
        %v2258 = vmax.f32 %v2256, %v2257
        %v2259 = vrot.slane %v2258, 2
        %v2260 = vmax.f32 %v2258, %v2259
        %v2261 = vrot.slane %v2260, 1
        %v2262 = vmax.f32 %v2260, %v2261
        %v2263 = vsel %vm2127, %v1239, -inf
        %v2264 = vsel %vm2127, %v1244, -inf
        %v2265 = vmax.f32 %v2263, %v2264
        %v2266 = vrot.slane %v2265, 4
        %v2267 = vmax.f32 %v2265, %v2266
        %v2268 = vrot.slane %v2267, 2
        %v2269 = vmax.f32 %v2267, %v2268
        %v2270 = vrot.slane %v2269, 1
        %v2271 = vmax.f32 %v2269, %v2270
        %v2272 = vsel %vm2127, %v1249, -inf
        %v2273 = vsel %vm2127, %v1254, -inf
        %v2274 = vmax.f32 %v2272, %v2273
        %v2275 = vrot.slane %v2274, 4
        %v2276 = vmax.f32 %v2274, %v2275
        %v2277 = vrot.slane %v2276, 2
        %v2278 = vmax.f32 %v2276, %v2277
        %v2279 = vrot.slane %v2278, 1
        %v2280 = vmax.f32 %v2278, %v2279
        %v2281 = vsel %vm2127, %v1259, -inf
        %v2282 = vsel %vm2127, %v1264, -inf
        %v2283 = vmax.f32 %v2281, %v2282
        %v2284 = vrot.slane %v2283, 4
        %v2285 = vmax.f32 %v2283, %v2284
        %v2286 = vrot.slane %v2285, 2
        %v2287 = vmax.f32 %v2285, %v2286
        %v2288 = vrot.slane %v2287, 1
        %v2289 = vmax.f32 %v2287, %v2288
        %v2290 = vsel %vm2127, %v1269, -inf
        %v2291 = vsel %vm2127, %v1274, -inf
        %v2292 = vmax.f32 %v2290, %v2291
        %v2293 = vrot.slane %v2292, 4
        %v2294 = vmax.f32 %v2292, %v2293
        %v2295 = vrot.slane %v2294, 2
        %v2296 = vmax.f32 %v2294, %v2295
        %v2297 = vrot.slane %v2296, 1
        %v2298 = vmax.f32 %v2296, %v2297
        %v2299 = vsel %vm2127, %v1279, -inf
        %v2300 = vsel %vm2127, %v1284, -inf
        %v2301 = vmax.f32 %v2299, %v2300
        %v2302 = vrot.slane %v2301, 4
        %v2303 = vmax.f32 %v2301, %v2302
        %v2304 = vrot.slane %v2303, 2
        %v2305 = vmax.f32 %v2303, %v2304
        %v2306 = vrot.slane %v2305, 1
        %v2307 = vmax.f32 %v2305, %v2306
        %v2308 = vsel %vm2127, %v1289, -inf
        %v2309 = vsel %vm2127, %v1294, -inf
        %v2310 = vmax.f32 %v2308, %v2309
        %v2311 = vrot.slane %v2310, 4
        %v2312 = vmax.f32 %v2310, %v2311
        %v2313 = vrot.slane %v2312, 2
        %v2314 = vmax.f32 %v2312, %v2313
        %v2315 = vrot.slane %v2314, 1
        %v2316 = vmax.f32 %v2314, %v2315
        %v2317 = vsel %vm2127, %v1299, -inf
        %v2318 = vsel %vm2127, %v1304, -inf
        %v2319 = vmax.f32 %v2317, %v2318
        %v2320 = vrot.slane %v2319, 4
        %v2321 = vmax.f32 %v2319, %v2320
        %v2322 = vrot.slane %v2321, 2
        %v2323 = vmax.f32 %v2321, %v2322
        %v2324 = vrot.slane %v2323, 1
        %v2325 = vmax.f32 %v2323, %v2324
        %v2326 = vsel %vm2127, %v1309, -inf
        %v2327 = vsel %vm2127, %v1314, -inf
        %v2328 = vmax.f32 %v2326, %v2327
        %v2329 = vrot.slane %v2328, 4
        %v2330 = vmax.f32 %v2328, %v2329
        %v2331 = vrot.slane %v2330, 2
        %v2332 = vmax.f32 %v2330, %v2331
        %v2333 = vrot.slane %v2332, 1
        %v2334 = vmax.f32 %v2332, %v2333
        %v2335 = vsel %vm2127, %v1319, -inf
        %v2336 = vsel %vm2127, %v1324, -inf
        %v2337 = vmax.f32 %v2335, %v2336
        %v2338 = vrot.slane %v2337, 4
        %v2339 = vmax.f32 %v2337, %v2338
        %v2340 = vrot.slane %v2339, 2
        %v2341 = vmax.f32 %v2339, %v2340
        %v2342 = vrot.slane %v2341, 1
        %v2343 = vmax.f32 %v2341, %v2342
        %v2344 = vsel %vm2127, %v1329, -inf
        %v2345 = vsel %vm2127, %v1334, -inf
        %v2346 = vmax.f32 %v2344, %v2345
        %v2347 = vrot.slane %v2346, 4
        %v2348 = vmax.f32 %v2346, %v2347
        %v2349 = vrot.slane %v2348, 2
        %v2350 = vmax.f32 %v2348, %v2349
        %v2351 = vrot.slane %v2350, 1
        %v2352 = vmax.f32 %v2350, %v2351
        %v2353 = vsel %vm2127, %v1339, -inf
        %v2354 = vsel %vm2127, %v1344, -inf
        %v2355 = vmax.f32 %v2353, %v2354
        %v2356 = vrot.slane %v2355, 4
        %v2357 = vmax.f32 %v2355, %v2356
        %v2358 = vrot.slane %v2357, 2
        %v2359 = vmax.f32 %v2357, %v2358
        %v2360 = vrot.slane %v2359, 1
        %v2361 = vmax.f32 %v2359, %v2360
        %v2362 = vsel %vm2127, %v1349, -inf
        %v2363 = vsel %vm2127, %v1354, -inf
        %v2364 = vmax.f32 %v2362, %v2363
        %v2365 = vrot.slane %v2364, 4
        %v2366 = vmax.f32 %v2364, %v2365
        %v2367 = vrot.slane %v2366, 2
        %v2368 = vmax.f32 %v2366, %v2367
        %v2369 = vrot.slane %v2368, 1
        %v2370 = vmax.f32 %v2368, %v2369
        %v2371 = vsel %vm2127, %v1359, -inf
        %v2372 = vsel %vm2127, %v1364, -inf
        %v2373 = vmax.f32 %v2371, %v2372
        %v2374 = vrot.slane %v2373, 4
        %v2375 = vmax.f32 %v2373, %v2374
        %v2376 = vrot.slane %v2375, 2
        %v2377 = vmax.f32 %v2375, %v2376
        %v2378 = vrot.slane %v2377, 1
        %v2379 = vmax.f32 %v2377, %v2378
        %v2380 = vsel %vm2127, %v1369, -inf
        %v2381 = vsel %vm2127, %v1374, -inf
        %v2382 = vmax.f32 %v2380, %v2381
        %v2383 = vrot.slane %v2382, 4
        %v2384 = vmax.f32 %v2382, %v2383
        %v2385 = vrot.slane %v2384, 2
        %v2386 = vmax.f32 %v2384, %v2385
        %v2387 = vrot.slane %v2386, 1
        %v2388 = vmax.f32 %v2386, %v2387
        %v2389 = vsel %vm2127, %v1379, -inf
        %v2390 = vsel %vm2127, %v1384, -inf
        %v2391 = vmax.f32 %v2389, %v2390
        %v2392 = vrot.slane %v2391, 4
        %v2393 = vmax.f32 %v2391, %v2392
        %v2394 = vrot.slane %v2393, 2
        %v2395 = vmax.f32 %v2393, %v2394
        %v2396 = vrot.slane %v2395, 1
        %v2397 = vmax.f32 %v2395, %v2396
        %v2398 = vsel %vm2127, %v1389, -inf
        %v2399 = vsel %vm2127, %v1394, -inf
        %v2400 = vmax.f32 %v2398, %v2399
        %v2401 = vrot.slane %v2400, 4
        %v2402 = vmax.f32 %v2400, %v2401
        %v2403 = vrot.slane %v2402, 2
        %v2404 = vmax.f32 %v2402, %v2403
        %v2405 = vrot.slane %v2404, 1
        %v2406 = vmax.f32 %v2404, %v2405
        %v2407 = vsel %vm2127, %v1399, -inf
        %v2408 = vsel %vm2127, %v1404, -inf
        %v2409 = vmax.f32 %v2407, %v2408
        %v2410 = vrot.slane %v2409, 4
        %v2411 = vmax.f32 %v2409, %v2410
        %v2412 = vrot.slane %v2411, 2
        %v2413 = vmax.f32 %v2411, %v2412
        %v2414 = vrot.slane %v2413, 1
        %v2415 = vmax.f32 %v2413, %v2414
        %v2416 = vsel %vm2127, %v1409, -inf
        %v2417 = vsel %vm2127, %v1414, -inf
        %v2418 = vmax.f32 %v2416, %v2417
        %v2419 = vrot.slane %v2418, 4
        %v2420 = vmax.f32 %v2418, %v2419
        %v2421 = vrot.slane %v2420, 2
        %v2422 = vmax.f32 %v2420, %v2421
        %v2423 = vrot.slane %v2422, 1
        %v2424 = vmax.f32 %v2422, %v2423
        %v2425 = vsel %vm2127, %v1419, -inf
        %v2426 = vsel %vm2127, %v1424, -inf
        %v2427 = vmax.f32 %v2425, %v2426
        %v2428 = vrot.slane %v2427, 4
        %v2429 = vmax.f32 %v2427, %v2428
        %v2430 = vrot.slane %v2429, 2
        %v2431 = vmax.f32 %v2429, %v2430
        %v2432 = vrot.slane %v2431, 1
        %v2433 = vmax.f32 %v2431, %v2432
        %v2434 = vsel %vm2127, %v1429, -inf
        %v2435 = vsel %vm2127, %v1434, -inf
        %v2436 = vmax.f32 %v2434, %v2435
        %v2437 = vrot.slane %v2436, 4
        %v2438 = vmax.f32 %v2436, %v2437
        %v2439 = vrot.slane %v2438, 2
        %v2440 = vmax.f32 %v2438, %v2439
        %v2441 = vrot.slane %v2440, 1
        %v2442 = vmax.f32 %v2440, %v2441
        %v2443 = vsel %vm2127, %v1439, -inf
        %v2444 = vsel %vm2127, %v1444, -inf
        %v2445 = vmax.f32 %v2443, %v2444
        %v2446 = vrot.slane %v2445, 4
        %v2447 = vmax.f32 %v2445, %v2446
        %v2448 = vrot.slane %v2447, 2
        %v2449 = vmax.f32 %v2447, %v2448
        %v2450 = vrot.slane %v2449, 1
        %v2451 = vmax.f32 %v2449, %v2450
        %v2452 = vsel %vm2127, %v1449, -inf
        %v2453 = vsel %vm2127, %v1454, -inf
        %v2454 = vmax.f32 %v2452, %v2453
        %v2455 = vrot.slane %v2454, 4
        %v2456 = vmax.f32 %v2454, %v2455
        %v2457 = vrot.slane %v2456, 2
        %v2458 = vmax.f32 %v2456, %v2457
        %v2459 = vrot.slane %v2458, 1
        %v2460 = vmax.f32 %v2458, %v2459
        %v2461 = vsel %vm2127, %v1459, -inf
        %v2462 = vsel %vm2127, %v1464, -inf
        %v2463 = vmax.f32 %v2461, %v2462
        %v2464 = vrot.slane %v2463, 4
        %v2465 = vmax.f32 %v2463, %v2464
        %v2466 = vrot.slane %v2465, 2
        %v2467 = vmax.f32 %v2465, %v2466
        %v2468 = vrot.slane %v2467, 1
        %v2469 = vmax.f32 %v2467, %v2468
        %v2470 = vsel %vm2127, %v1469, -inf
        %v2471 = vsel %vm2127, %v1474, -inf
        %v2472 = vmax.f32 %v2470, %v2471
        %v2473 = vrot.slane %v2472, 4
        %v2474 = vmax.f32 %v2472, %v2473
        %v2475 = vrot.slane %v2474, 2
        %v2476 = vmax.f32 %v2474, %v2475
        %v2477 = vrot.slane %v2476, 1
        %v2478 = vmax.f32 %v2476, %v2477
        %v2479 = vsel %vm2127, %v1479, -inf
        %v2480 = vsel %vm2127, %v1484, -inf
        %v2481 = vmax.f32 %v2479, %v2480
        %v2482 = vrot.slane %v2481, 4
        %v2483 = vmax.f32 %v2481, %v2482
        %v2484 = vrot.slane %v2483, 2
        %v2485 = vmax.f32 %v2483, %v2484
        %v2486 = vrot.slane %v2485, 1
        %v2487 = vmax.f32 %v2485, %v2486
        %v2488 = vsel %vm2127, %v1489, -inf
        %v2489 = vsel %vm2127, %v1494, -inf
        %v2490 = vmax.f32 %v2488, %v2489
        %v2491 = vrot.slane %v2490, 4
        %v2492 = vmax.f32 %v2490, %v2491
        %v2493 = vrot.slane %v2492, 2
        %v2494 = vmax.f32 %v2492, %v2493
        %v2495 = vrot.slane %v2494, 1
        %v2496 = vmax.f32 %v2494, %v2495
        %v2497 = vsel %vm2127, %v1499, -inf
        %v2498 = vsel %vm2127, %v1504, -inf
        %v2499 = vmax.f32 %v2497, %v2498
        %v2500 = vrot.slane %v2499, 4
        %v2501 = vmax.f32 %v2499, %v2500
        %v2502 = vrot.slane %v2501, 2
        %v2503 = vmax.f32 %v2501, %v2502
        %v2504 = vrot.slane %v2503, 1
        %v2505 = vmax.f32 %v2503, %v2504
        %v2506 = vsel %vm2127, %v1509, -inf
        %v2507 = vsel %vm2127, %v1514, -inf
        %v2508 = vmax.f32 %v2506, %v2507
        %v2509 = vrot.slane %v2508, 4
        %v2510 = vmax.f32 %v2508, %v2509
        %v2511 = vrot.slane %v2510, 2
        %v2512 = vmax.f32 %v2510, %v2511
        %v2513 = vrot.slane %v2512, 1
        %v2514 = vmax.f32 %v2512, %v2513
        %v2515 = vsel %vm2127, %v1519, -inf
        %v2516 = vsel %vm2127, %v1524, -inf
        %v2517 = vmax.f32 %v2515, %v2516
        %v2518 = vrot.slane %v2517, 4
        %v2519 = vmax.f32 %v2517, %v2518
        %v2520 = vrot.slane %v2519, 2
        %v2521 = vmax.f32 %v2519, %v2520
        %v2522 = vrot.slane %v2521, 1
        %v2523 = vmax.f32 %v2521, %v2522
        %v2524 = vsel %vm2127, %v1529, -inf
        %v2525 = vsel %vm2127, %v1534, -inf
        %v2526 = vmax.f32 %v2524, %v2525
        %v2527 = vrot.slane %v2526, 4
        %v2528 = vmax.f32 %v2526, %v2527
        %v2529 = vrot.slane %v2528, 2
        %v2530 = vmax.f32 %v2528, %v2529
        %v2531 = vrot.slane %v2530, 1
        %v2532 = vmax.f32 %v2530, %v2531
        %v2533 = vsel %vm2127, %v1539, -inf
        %v2534 = vsel %vm2127, %v1544, -inf
        %v2535 = vmax.f32 %v2533, %v2534
        %v2536 = vrot.slane %v2535, 4
        %v2537 = vmax.f32 %v2535, %v2536
        %v2538 = vrot.slane %v2537, 2
        %v2539 = vmax.f32 %v2537, %v2538
        %v2540 = vrot.slane %v2539, 1
        %v2541 = vmax.f32 %v2539, %v2540
        %v2542 = vsel %vm2127, %v1549, -inf
        %v2543 = vsel %vm2127, %v1554, -inf
        %v2544 = vmax.f32 %v2542, %v2543
        %v2545 = vrot.slane %v2544, 4
        %v2546 = vmax.f32 %v2544, %v2545
        %v2547 = vrot.slane %v2546, 2
        %v2548 = vmax.f32 %v2546, %v2547
        %v2549 = vrot.slane %v2548, 1
        %v2550 = vmax.f32 %v2548, %v2549
        %v2551 = vsel %vm2127, %v1559, -inf
        %v2552 = vsel %vm2127, %v1564, -inf
        %v2553 = vmax.f32 %v2551, %v2552
        %v2554 = vrot.slane %v2553, 4
        %v2555 = vmax.f32 %v2553, %v2554
        %v2556 = vrot.slane %v2555, 2
        %v2557 = vmax.f32 %v2555, %v2556
        %v2558 = vrot.slane %v2557, 1
        %v2559 = vmax.f32 %v2557, %v2558
        %v2560 = vsel %vm2127, %v1569, -inf
        %v2561 = vsel %vm2127, %v1574, -inf
        %v2562 = vmax.f32 %v2560, %v2561
        %v2563 = vrot.slane %v2562, 4
        %v2564 = vmax.f32 %v2562, %v2563
        %v2565 = vrot.slane %v2564, 2
        %v2566 = vmax.f32 %v2564, %v2565
        %v2567 = vrot.slane %v2566, 1
        %v2568 = vmax.f32 %v2566, %v2567
        %v2569 = vsel %vm2127, %v1579, -inf
        %v2570 = vsel %vm2127, %v1584, -inf
        %v2571 = vmax.f32 %v2569, %v2570
        %v2572 = vrot.slane %v2571, 4
        %v2573 = vmax.f32 %v2571, %v2572
        %v2574 = vrot.slane %v2573, 2
        %v2575 = vmax.f32 %v2573, %v2574
        %v2576 = vrot.slane %v2575, 1
        %v2577 = vmax.f32 %v2575, %v2576
        %v2578 = vsel %vm2127, %v1589, -inf
        %v2579 = vsel %vm2127, %v1594, -inf
        %v2580 = vmax.f32 %v2578, %v2579
        %v2581 = vrot.slane %v2580, 4
        %v2582 = vmax.f32 %v2580, %v2581
        %v2583 = vrot.slane %v2582, 2
        %v2584 = vmax.f32 %v2582, %v2583
        %v2585 = vrot.slane %v2584, 1
        %v2586 = vmax.f32 %v2584, %v2585
        %v2587 = vsel %vm2127, %v1599, -inf
        %v2588 = vsel %vm2127, %v1604, -inf
        %v2589 = vmax.f32 %v2587, %v2588
        %v2590 = vrot.slane %v2589, 4
        %v2591 = vmax.f32 %v2589, %v2590
        %v2592 = vrot.slane %v2591, 2
        %v2593 = vmax.f32 %v2591, %v2592
        %v2594 = vrot.slane %v2593, 1
        %v2595 = vmax.f32 %v2593, %v2594
        %v2596 = vsel %vm2127, %v1609, -inf
        %v2597 = vsel %vm2127, %v1614, -inf
        %v2598 = vmax.f32 %v2596, %v2597
        %v2599 = vrot.slane %v2598, 4
        %v2600 = vmax.f32 %v2598, %v2599
        %v2601 = vrot.slane %v2600, 2
        %v2602 = vmax.f32 %v2600, %v2601
        %v2603 = vrot.slane %v2602, 1
        %v2604 = vmax.f32 %v2602, %v2603
        %v2605 = vsel %vm2127, %v1619, -inf
        %v2606 = vsel %vm2127, %v1624, -inf
        %v2607 = vmax.f32 %v2605, %v2606
        %v2608 = vrot.slane %v2607, 4
        %v2609 = vmax.f32 %v2607, %v2608
        %v2610 = vrot.slane %v2609, 2
        %v2611 = vmax.f32 %v2609, %v2610
        %v2612 = vrot.slane %v2611, 1
        %v2613 = vmax.f32 %v2611, %v2612
        %v2614 = vsel %vm2127, %v1629, -inf
        %v2615 = vsel %vm2127, %v1634, -inf
        %v2616 = vmax.f32 %v2614, %v2615
        %v2617 = vrot.slane %v2616, 4
        %v2618 = vmax.f32 %v2616, %v2617
        %v2619 = vrot.slane %v2618, 2
        %v2620 = vmax.f32 %v2618, %v2619
        %v2621 = vrot.slane %v2620, 1
        %v2622 = vmax.f32 %v2620, %v2621
        %v2623 = vsel %vm2127, %v1639, -inf
        %v2624 = vsel %vm2127, %v1644, -inf
        %v2625 = vmax.f32 %v2623, %v2624
        %v2626 = vrot.slane %v2625, 4
        %v2627 = vmax.f32 %v2625, %v2626
        %v2628 = vrot.slane %v2627, 2
        %v2629 = vmax.f32 %v2627, %v2628
        %v2630 = vrot.slane %v2629, 1
        %v2631 = vmax.f32 %v2629, %v2630
        %v2632 = vsel %vm2127, %v1649, -inf
        %v2633 = vsel %vm2127, %v1654, -inf
        %v2634 = vmax.f32 %v2632, %v2633
        %v2635 = vrot.slane %v2634, 4
        %v2636 = vmax.f32 %v2634, %v2635
        %v2637 = vrot.slane %v2636, 2
        %v2638 = vmax.f32 %v2636, %v2637
        %v2639 = vrot.slane %v2638, 1
        %v2640 = vmax.f32 %v2638, %v2639
        %v2641 = vsel %vm2127, %v1659, -inf
        %v2642 = vsel %vm2127, %v1664, -inf
        %v2643 = vmax.f32 %v2641, %v2642
        %v2644 = vrot.slane %v2643, 4
        %v2645 = vmax.f32 %v2643, %v2644
        %v2646 = vrot.slane %v2645, 2
        %v2647 = vmax.f32 %v2645, %v2646
        %v2648 = vrot.slane %v2647, 1
        %v2649 = vmax.f32 %v2647, %v2648
        %v2650 = vsel %vm2127, %v1669, -inf
        %v2651 = vsel %vm2127, %v1674, -inf
        %v2652 = vmax.f32 %v2650, %v2651
        %v2653 = vrot.slane %v2652, 4
        %v2654 = vmax.f32 %v2652, %v2653
        %v2655 = vrot.slane %v2654, 2
        %v2656 = vmax.f32 %v2654, %v2655
        %v2657 = vrot.slane %v2656, 1
        %v2658 = vmax.f32 %v2656, %v2657
        %v2659 = vsel %vm2127, %v1679, -inf
        %v2660 = vsel %vm2127, %v1684, -inf
        %v2661 = vmax.f32 %v2659, %v2660
        %v2662 = vrot.slane %v2661, 4
        %v2663 = vmax.f32 %v2661, %v2662
        %v2664 = vrot.slane %v2663, 2
        %v2665 = vmax.f32 %v2663, %v2664
        %v2666 = vrot.slane %v2665, 1
        %v2667 = vmax.f32 %v2665, %v2666
        %v2668 = vsel %vm2127, %v1689, -inf
        %v2669 = vsel %vm2127, %v1694, -inf
        %v2670 = vmax.f32 %v2668, %v2669
        %v2671 = vrot.slane %v2670, 4
        %v2672 = vmax.f32 %v2670, %v2671
        %v2673 = vrot.slane %v2672, 2
        %v2674 = vmax.f32 %v2672, %v2673
        %v2675 = vrot.slane %v2674, 1
        %v2676 = vmax.f32 %v2674, %v2675
        %v2677 = vsel %vm2127, %v1699, -inf
        %v2678 = vsel %vm2127, %v1704, -inf
        %v2679 = vmax.f32 %v2677, %v2678
        %v2680 = vrot.slane %v2679, 4
        %v2681 = vmax.f32 %v2679, %v2680
        %v2682 = vrot.slane %v2681, 2
        %v2683 = vmax.f32 %v2681, %v2682
        %v2684 = vrot.slane %v2683, 1
        %v2685 = vmax.f32 %v2683, %v2684
        %v2686 = vsel %vm2127, %v1709, -inf
        %v2687 = vsel %vm2127, %v1714, -inf
        %v2688 = vmax.f32 %v2686, %v2687
        %v2689 = vrot.slane %v2688, 4
        %v2690 = vmax.f32 %v2688, %v2689
        %v2691 = vrot.slane %v2690, 2
        %v2692 = vmax.f32 %v2690, %v2691
        %v2693 = vrot.slane %v2692, 1
        %v2694 = vmax.f32 %v2692, %v2693
        %v2695 = vsel %vm2127, %v1719, -inf
        %v2696 = vsel %vm2127, %v1724, -inf
        %v2697 = vmax.f32 %v2695, %v2696
        %v2698 = vrot.slane %v2697, 4
        %v2699 = vmax.f32 %v2697, %v2698
        %v2700 = vrot.slane %v2699, 2
        %v2701 = vmax.f32 %v2699, %v2700
        %v2702 = vrot.slane %v2701, 1
        %v2703 = vmax.f32 %v2701, %v2702
        %v2704 = vsel %vm2127, %v1729, -inf
        %v2705 = vsel %vm2127, %v1734, -inf
        %v2706 = vmax.f32 %v2704, %v2705
        %v2707 = vrot.slane %v2706, 4
        %v2708 = vmax.f32 %v2706, %v2707
        %v2709 = vrot.slane %v2708, 2
        %v2710 = vmax.f32 %v2708, %v2709
        %v2711 = vrot.slane %v2710, 1
        %v2712 = vmax.f32 %v2710, %v2711
        %v2713 = vsel %vm2127, %v1739, -inf
        %v2714 = vsel %vm2127, %v1744, -inf
        %v2715 = vmax.f32 %v2713, %v2714
        %v2716 = vrot.slane %v2715, 4
        %v2717 = vmax.f32 %v2715, %v2716
        %v2718 = vrot.slane %v2717, 2
        %v2719 = vmax.f32 %v2717, %v2718
        %v2720 = vrot.slane %v2719, 1
        %v2721 = vmax.f32 %v2719, %v2720
        %v2722 = vsel %vm2127, %v1749, -inf
        %v2723 = vsel %vm2127, %v1754, -inf
        %v2724 = vmax.f32 %v2722, %v2723
        %v2725 = vrot.slane %v2724, 4
        %v2726 = vmax.f32 %v2724, %v2725
        %v2727 = vrot.slane %v2726, 2
        %v2728 = vmax.f32 %v2726, %v2727
        %v2729 = vrot.slane %v2728, 1
        %v2730 = vmax.f32 %v2728, %v2729
        %v2731 = vsel %vm2127, %v1759, -inf
        %v2732 = vsel %vm2127, %v1764, -inf
        %v2733 = vmax.f32 %v2731, %v2732
        %v2734 = vrot.slane %v2733, 4
        %v2735 = vmax.f32 %v2733, %v2734
        %v2736 = vrot.slane %v2735, 2
        %v2737 = vmax.f32 %v2735, %v2736
        %v2738 = vrot.slane %v2737, 1
        %v2739 = vmax.f32 %v2737, %v2738
        %v2740 = vsel %vm2127, %v1769, -inf
        %v2741 = vsel %vm2127, %v1774, -inf
        %v2742 = vmax.f32 %v2740, %v2741
        %v2743 = vrot.slane %v2742, 4
        %v2744 = vmax.f32 %v2742, %v2743
        %v2745 = vrot.slane %v2744, 2
        %v2746 = vmax.f32 %v2744, %v2745
        %v2747 = vrot.slane %v2746, 1
        %v2748 = vmax.f32 %v2746, %v2747
        %v2749 = vsel %vm2127, %v1779, -inf
        %v2750 = vsel %vm2127, %v1784, -inf
        %v2751 = vmax.f32 %v2749, %v2750
        %v2752 = vrot.slane %v2751, 4
        %v2753 = vmax.f32 %v2751, %v2752
        %v2754 = vrot.slane %v2753, 2
        %v2755 = vmax.f32 %v2753, %v2754
        %v2756 = vrot.slane %v2755, 1
        %v2757 = vmax.f32 %v2755, %v2756
        %v2758 = vsel %vm2127, %v1789, -inf
        %v2759 = vsel %vm2127, %v1794, -inf
        %v2760 = vmax.f32 %v2758, %v2759
        %v2761 = vrot.slane %v2760, 4
        %v2762 = vmax.f32 %v2760, %v2761
        %v2763 = vrot.slane %v2762, 2
        %v2764 = vmax.f32 %v2762, %v2763
        %v2765 = vrot.slane %v2764, 1
        %v2766 = vmax.f32 %v2764, %v2765
        %v2767 = vsel %vm2127, %v1799, -inf
        %v2768 = vsel %vm2127, %v1804, -inf
        %v2769 = vmax.f32 %v2767, %v2768
        %v2770 = vrot.slane %v2769, 4
        %v2771 = vmax.f32 %v2769, %v2770
        %v2772 = vrot.slane %v2771, 2
        %v2773 = vmax.f32 %v2771, %v2772
        %v2774 = vrot.slane %v2773, 1
        %v2775 = vmax.f32 %v2773, %v2774
        %v2776 = vsel %vm2127, %v1809, -inf
        %v2777 = vsel %vm2127, %v1814, -inf
        %v2778 = vmax.f32 %v2776, %v2777
        %v2779 = vrot.slane %v2778, 4
        %v2780 = vmax.f32 %v2778, %v2779
        %v2781 = vrot.slane %v2780, 2
        %v2782 = vmax.f32 %v2780, %v2781
        %v2783 = vrot.slane %v2782, 1
        %v2784 = vmax.f32 %v2782, %v2783
        %v2785 = vsel %vm2127, %v1819, -inf
        %v2786 = vsel %vm2127, %v1824, -inf
        %v2787 = vmax.f32 %v2785, %v2786
        %v2788 = vrot.slane %v2787, 4
        %v2789 = vmax.f32 %v2787, %v2788
        %v2790 = vrot.slane %v2789, 2
        %v2791 = vmax.f32 %v2789, %v2790
        %v2792 = vrot.slane %v2791, 1
        %v2793 = vmax.f32 %v2791, %v2792
        %v2794 = vsel %vm2127, %v1829, -inf
        %v2795 = vsel %vm2127, %v1834, -inf
        %v2796 = vmax.f32 %v2794, %v2795
        %v2797 = vrot.slane %v2796, 4
        %v2798 = vmax.f32 %v2796, %v2797
        %v2799 = vrot.slane %v2798, 2
        %v2800 = vmax.f32 %v2798, %v2799
        %v2801 = vrot.slane %v2800, 1
        %v2802 = vmax.f32 %v2800, %v2801
        %v2803 = vsel %vm2127, %v1839, -inf
        %v2804 = vsel %vm2127, %v1844, -inf
        %v2805 = vmax.f32 %v2803, %v2804
        %v2806 = vrot.slane %v2805, 4
        %v2807 = vmax.f32 %v2805, %v2806
        %v2808 = vrot.slane %v2807, 2
        %v2809 = vmax.f32 %v2807, %v2808
        %v2810 = vrot.slane %v2809, 1
        %v2811 = vmax.f32 %v2809, %v2810
        %v2812 = vsel %vm2127, %v1849, -inf
        %v2813 = vsel %vm2127, %v1854, -inf
        %v2814 = vmax.f32 %v2812, %v2813
        %v2815 = vrot.slane %v2814, 4
        %v2816 = vmax.f32 %v2814, %v2815
        %v2817 = vrot.slane %v2816, 2
        %v2818 = vmax.f32 %v2816, %v2817
        %v2819 = vrot.slane %v2818, 1
        %v2820 = vmax.f32 %v2818, %v2819
        %v2821 = vsel %vm2127, %v1859, -inf
        %v2822 = vsel %vm2127, %v1864, -inf
        %v2823 = vmax.f32 %v2821, %v2822
        %v2824 = vrot.slane %v2823, 4
        %v2825 = vmax.f32 %v2823, %v2824
        %v2826 = vrot.slane %v2825, 2
        %v2827 = vmax.f32 %v2825, %v2826
        %v2828 = vrot.slane %v2827, 1
        %v2829 = vmax.f32 %v2827, %v2828
        %v2830 = vsel %vm2127, %v1869, -inf
        %v2831 = vsel %vm2127, %v1874, -inf
        %v2832 = vmax.f32 %v2830, %v2831
        %v2833 = vrot.slane %v2832, 4
        %v2834 = vmax.f32 %v2832, %v2833
        %v2835 = vrot.slane %v2834, 2
        %v2836 = vmax.f32 %v2834, %v2835
        %v2837 = vrot.slane %v2836, 1
        %v2838 = vmax.f32 %v2836, %v2837
        %v2839 = vsel %vm2127, %v1879, -inf
        %v2840 = vsel %vm2127, %v1884, -inf
        %v2841 = vmax.f32 %v2839, %v2840
        %v2842 = vrot.slane %v2841, 4
        %v2843 = vmax.f32 %v2841, %v2842
        %v2844 = vrot.slane %v2843, 2
        %v2845 = vmax.f32 %v2843, %v2844
        %v2846 = vrot.slane %v2845, 1
        %v2847 = vmax.f32 %v2845, %v2846
        %v2848 = vsel %vm2127, %v1889, -inf
        %v2849 = vsel %vm2127, %v1894, -inf
        %v2850 = vmax.f32 %v2848, %v2849
        %v2851 = vrot.slane %v2850, 4
        %v2852 = vmax.f32 %v2850, %v2851
        %v2853 = vrot.slane %v2852, 2
        %v2854 = vmax.f32 %v2852, %v2853
        %v2855 = vrot.slane %v2854, 1
        %v2856 = vmax.f32 %v2854, %v2855
        %v2857 = vsel %vm2127, %v1899, -inf
        %v2858 = vsel %vm2127, %v1904, -inf
        %v2859 = vmax.f32 %v2857, %v2858
        %v2860 = vrot.slane %v2859, 4
        %v2861 = vmax.f32 %v2859, %v2860
        %v2862 = vrot.slane %v2861, 2
        %v2863 = vmax.f32 %v2861, %v2862
        %v2864 = vrot.slane %v2863, 1
        %v2865 = vmax.f32 %v2863, %v2864
        %v2866 = vsel %vm2127, %v1909, -inf
        %v2867 = vsel %vm2127, %v1914, -inf
        %v2868 = vmax.f32 %v2866, %v2867
        %v2869 = vrot.slane %v2868, 4
        %v2870 = vmax.f32 %v2868, %v2869
        %v2871 = vrot.slane %v2870, 2
        %v2872 = vmax.f32 %v2870, %v2871
        %v2873 = vrot.slane %v2872, 1
        %v2874 = vmax.f32 %v2872, %v2873
        %v2875 = vsel %vm2127, %v1919, -inf
        %v2876 = vsel %vm2127, %v1924, -inf
        %v2877 = vmax.f32 %v2875, %v2876
        %v2878 = vrot.slane %v2877, 4
        %v2879 = vmax.f32 %v2877, %v2878
        %v2880 = vrot.slane %v2879, 2
        %v2881 = vmax.f32 %v2879, %v2880
        %v2882 = vrot.slane %v2881, 1
        %v2883 = vmax.f32 %v2881, %v2882
        %v2884 = vsel %vm2127, %v1929, -inf
        %v2885 = vsel %vm2127, %v1934, -inf
        %v2886 = vmax.f32 %v2884, %v2885
        %v2887 = vrot.slane %v2886, 4
        %v2888 = vmax.f32 %v2886, %v2887
        %v2889 = vrot.slane %v2888, 2
        %v2890 = vmax.f32 %v2888, %v2889
        %v2891 = vrot.slane %v2890, 1
        %v2892 = vmax.f32 %v2890, %v2891
        %v2893 = vsel %vm2127, %v1939, -inf
        %v2894 = vsel %vm2127, %v1944, -inf
        %v2895 = vmax.f32 %v2893, %v2894
        %v2896 = vrot.slane %v2895, 4
        %v2897 = vmax.f32 %v2895, %v2896
        %v2898 = vrot.slane %v2897, 2
        %v2899 = vmax.f32 %v2897, %v2898
        %v2900 = vrot.slane %v2899, 1
        %v2901 = vmax.f32 %v2899, %v2900
        %v2902 = vsel %vm2127, %v1949, -inf
        %v2903 = vsel %vm2127, %v1954, -inf
        %v2904 = vmax.f32 %v2902, %v2903
        %v2905 = vrot.slane %v2904, 4
        %v2906 = vmax.f32 %v2904, %v2905
        %v2907 = vrot.slane %v2906, 2
        %v2908 = vmax.f32 %v2906, %v2907
        %v2909 = vrot.slane %v2908, 1
        %v2910 = vmax.f32 %v2908, %v2909
        %v2911 = vsel %vm2127, %v1959, -inf
        %v2912 = vsel %vm2127, %v1964, -inf
        %v2913 = vmax.f32 %v2911, %v2912
        %v2914 = vrot.slane %v2913, 4
        %v2915 = vmax.f32 %v2913, %v2914
        %v2916 = vrot.slane %v2915, 2
        %v2917 = vmax.f32 %v2915, %v2916
        %v2918 = vrot.slane %v2917, 1
        %v2919 = vmax.f32 %v2917, %v2918
        %v2920 = vsel %vm2127, %v1969, -inf
        %v2921 = vsel %vm2127, %v1974, -inf
        %v2922 = vmax.f32 %v2920, %v2921
        %v2923 = vrot.slane %v2922, 4
        %v2924 = vmax.f32 %v2922, %v2923
        %v2925 = vrot.slane %v2924, 2
        %v2926 = vmax.f32 %v2924, %v2925
        %v2927 = vrot.slane %v2926, 1
        %v2928 = vmax.f32 %v2926, %v2927
        %v2929 = vsel %vm2127, %v1979, -inf
        %v2930 = vsel %vm2127, %v1984, -inf
        %v2931 = vmax.f32 %v2929, %v2930
        %v2932 = vrot.slane %v2931, 4
        %v2933 = vmax.f32 %v2931, %v2932
        %v2934 = vrot.slane %v2933, 2
        %v2935 = vmax.f32 %v2933, %v2934
        %v2936 = vrot.slane %v2935, 1
        %v2937 = vmax.f32 %v2935, %v2936
        %v2938 = vsel %vm2127, %v1989, -inf
        %v2939 = vsel %vm2127, %v1994, -inf
        %v2940 = vmax.f32 %v2938, %v2939
        %v2941 = vrot.slane %v2940, 4
        %v2942 = vmax.f32 %v2940, %v2941
        %v2943 = vrot.slane %v2942, 2
        %v2944 = vmax.f32 %v2942, %v2943
        %v2945 = vrot.slane %v2944, 1
        %v2946 = vmax.f32 %v2944, %v2945
        %v2947 = vsel %vm2127, %v1999, -inf
        %v2948 = vsel %vm2127, %v2004, -inf
        %v2949 = vmax.f32 %v2947, %v2948
        %v2950 = vrot.slane %v2949, 4
        %v2951 = vmax.f32 %v2949, %v2950
        %v2952 = vrot.slane %v2951, 2
        %v2953 = vmax.f32 %v2951, %v2952
        %v2954 = vrot.slane %v2953, 1
        %v2955 = vmax.f32 %v2953, %v2954
        %v2956 = vsel %vm2127, %v2009, -inf
        %v2957 = vsel %vm2127, %v2014, -inf
        %v2958 = vmax.f32 %v2956, %v2957
        %v2959 = vrot.slane %v2958, 4
        %v2960 = vmax.f32 %v2958, %v2959
        %v2961 = vrot.slane %v2960, 2
        %v2962 = vmax.f32 %v2960, %v2961
        %v2963 = vrot.slane %v2962, 1
        %v2964 = vmax.f32 %v2962, %v2963
        %v2965 = vsel %vm2127, %v2019, -inf
        %v2966 = vsel %vm2127, %v2024, -inf
        %v2967 = vmax.f32 %v2965, %v2966
        %v2968 = vrot.slane %v2967, 4
        %v2969 = vmax.f32 %v2967, %v2968
        %v2970 = vrot.slane %v2969, 2
        %v2971 = vmax.f32 %v2969, %v2970
        %v2972 = vrot.slane %v2971, 1
        %v2973 = vmax.f32 %v2971, %v2972
        %v2974 = vsel %vm2127, %v2029, -inf
        %v2975 = vsel %vm2127, %v2034, -inf
        %v2976 = vmax.f32 %v2974, %v2975
        %v2977 = vrot.slane %v2976, 4
        %v2978 = vmax.f32 %v2976, %v2977
        %v2979 = vrot.slane %v2978, 2
        %v2980 = vmax.f32 %v2978, %v2979
        %v2981 = vrot.slane %v2980, 1
        %v2982 = vmax.f32 %v2980, %v2981
        %v2983 = vsel %vm2127, %v2039, -inf
        %v2984 = vsel %vm2127, %v2044, -inf
        %v2985 = vmax.f32 %v2983, %v2984
        %v2986 = vrot.slane %v2985, 4
        %v2987 = vmax.f32 %v2985, %v2986
        %v2988 = vrot.slane %v2987, 2
        %v2989 = vmax.f32 %v2987, %v2988
        %v2990 = vrot.slane %v2989, 1
        %v2991 = vmax.f32 %v2989, %v2990
        %v2992 = vsel %vm2127, %v2049, -inf
        %v2993 = vsel %vm2127, %v2054, -inf
        %v2994 = vmax.f32 %v2992, %v2993
        %v2995 = vrot.slane %v2994, 4
        %v2996 = vmax.f32 %v2994, %v2995
        %v2997 = vrot.slane %v2996, 2
        %v2998 = vmax.f32 %v2996, %v2997
        %v2999 = vrot.slane %v2998, 1
        %v3000 = vmax.f32 %v2998, %v2999
        %v3001 = vsel %vm2127, %v2059, -inf
        %v3002 = vsel %vm2127, %v2064, -inf
        %v3003 = vmax.f32 %v3001, %v3002
        %v3004 = vrot.slane %v3003, 4
        %v3005 = vmax.f32 %v3003, %v3004
        %v3006 = vrot.slane %v3005, 2
        %v3007 = vmax.f32 %v3005, %v3006
        %v3008 = vrot.slane %v3007, 1
        %v3009 = vmax.f32 %v3007, %v3008
        %v3010 = vsel %vm2127, %v2069, -inf
        %v3011 = vsel %vm2127, %v2074, -inf
        %v3012 = vmax.f32 %v3010, %v3011
        %v3013 = vrot.slane %v3012, 4
        %v3014 = vmax.f32 %v3012, %v3013
        %v3015 = vrot.slane %v3014, 2
        %v3016 = vmax.f32 %v3014, %v3015
        %v3017 = vrot.slane %v3016, 1
        %v3018 = vmax.f32 %v3016, %v3017
        %v3019 = vsel %vm2127, %v2079, -inf
        %v3020 = vsel %vm2127, %v2084, -inf
        %v3021 = vmax.f32 %v3019, %v3020
        %v3022 = vrot.slane %v3021, 4
        %v3023 = vmax.f32 %v3021, %v3022
        %v3024 = vrot.slane %v3023, 2
        %v3025 = vmax.f32 %v3023, %v3024
        %v3026 = vrot.slane %v3025, 1
        %v3027 = vmax.f32 %v3025, %v3026
        %v3028 = vsel %vm2127, %v2089, -inf
        %v3029 = vsel %vm2127, %v2094, -inf
        %v3030 = vmax.f32 %v3028, %v3029
        %v3031 = vrot.slane %v3030, 4
        %v3032 = vmax.f32 %v3030, %v3031
        %v3033 = vrot.slane %v3032, 2
        %v3034 = vmax.f32 %v3032, %v3033
        %v3035 = vrot.slane %v3034, 1
        %v3036 = vmax.f32 %v3034, %v3035
        %v3037 = vsel %vm2127, %v2099, -inf
        %v3038 = vsel %vm2127, %v2104, -inf
        %v3039 = vmax.f32 %v3037, %v3038
        %v3040 = vrot.slane %v3039, 4
        %v3041 = vmax.f32 %v3039, %v3040
        %v3042 = vrot.slane %v3041, 2
        %v3043 = vmax.f32 %v3041, %v3042
        %v3044 = vrot.slane %v3043, 1
        %v3045 = vmax.f32 %v3043, %v3044
        %v3046 = vsel %vm2127, %v2109, -inf
        %v3047 = vsel %vm2127, %v2114, -inf
        %v3048 = vmax.f32 %v3046, %v3047
        %v3049 = vrot.slane %v3048, 4
        %v3050 = vmax.f32 %v3048, %v3049
        %v3051 = vrot.slane %v3050, 2
        %v3052 = vmax.f32 %v3050, %v3051
        %v3053 = vrot.slane %v3052, 1
        %v3054 = vmax.f32 %v3052, %v3053
        %v3055 = vsel %vm2127, %v2119, -inf
        %v3056 = vsel %vm2127, %v2124, -inf
        %v3057 = vmax.f32 %v3055, %v3056
        %v3058 = vrot.slane %v3057, 4
        %v3059 = vmax.f32 %v3057, %v3058
        %v3060 = vrot.slane %v3059, 2
        %v3061 = vmax.f32 %v3059, %v3060
        %v3062 = vrot.slane %v3061, 1
        %v3063 = vmax.f32 %v3061, %v3062
        %v3064 = vsel %vm2127, %v1089, inf
        %v3065 = vsel %vm2127, %v1094, inf
        %v3066 = vmin.f32 %v3064, %v3065
        %v3067 = vrot.slane %v3066, 4
        %v3068 = vmin.f32 %v3066, %v3067
        %v3069 = vrot.slane %v3068, 2
        %v3070 = vmin.f32 %v3068, %v3069
        %v3071 = vrot.slane %v3070, 1
        %v3072 = vmin.f32 %v3070, %v3071
        %v3073 = vsel %vm2127, %v1099, inf
        %v3074 = vsel %vm2127, %v1104, inf
        %v3075 = vmin.f32 %v3073, %v3074
        %v3076 = vrot.slane %v3075, 4
        %v3077 = vmin.f32 %v3075, %v3076
        %v3078 = vrot.slane %v3077, 2
        %v3079 = vmin.f32 %v3077, %v3078
        %v3080 = vrot.slane %v3079, 1
        %v3081 = vmin.f32 %v3079, %v3080
        %v3082 = vsel %vm2127, %v1109, inf
        %v3083 = vsel %vm2127, %v1114, inf
        %v3084 = vmin.f32 %v3082, %v3083
        %v3085 = vrot.slane %v3084, 4
        %v3086 = vmin.f32 %v3084, %v3085
        %v3087 = vrot.slane %v3086, 2
        %v3088 = vmin.f32 %v3086, %v3087
        %v3089 = vrot.slane %v3088, 1
        %v3090 = vmin.f32 %v3088, %v3089
        %v3091 = vsel %vm2127, %v1119, inf
        %v3092 = vsel %vm2127, %v1124, inf
        %v3093 = vmin.f32 %v3091, %v3092
        %v3094 = vrot.slane %v3093, 4
        %v3095 = vmin.f32 %v3093, %v3094
        %v3096 = vrot.slane %v3095, 2
        %v3097 = vmin.f32 %v3095, %v3096
        %v3098 = vrot.slane %v3097, 1
        %v3099 = vmin.f32 %v3097, %v3098
        %v3100 = vsel %vm2127, %v1129, inf
        %v3101 = vsel %vm2127, %v1134, inf
        %v3102 = vmin.f32 %v3100, %v3101
        %v3103 = vrot.slane %v3102, 4
        %v3104 = vmin.f32 %v3102, %v3103
        %v3105 = vrot.slane %v3104, 2
        %v3106 = vmin.f32 %v3104, %v3105
        %v3107 = vrot.slane %v3106, 1
        %v3108 = vmin.f32 %v3106, %v3107
        %v3109 = vsel %vm2127, %v1139, inf
        %v3110 = vsel %vm2127, %v1144, inf
        %v3111 = vmin.f32 %v3109, %v3110
        %v3112 = vrot.slane %v3111, 4
        %v3113 = vmin.f32 %v3111, %v3112
        %v3114 = vrot.slane %v3113, 2
        %v3115 = vmin.f32 %v3113, %v3114
        %v3116 = vrot.slane %v3115, 1
        %v3117 = vmin.f32 %v3115, %v3116
        %v3118 = vsel %vm2127, %v1149, inf
        %v3119 = vsel %vm2127, %v1154, inf
        %v3120 = vmin.f32 %v3118, %v3119
        %v3121 = vrot.slane %v3120, 4
        %v3122 = vmin.f32 %v3120, %v3121
        %v3123 = vrot.slane %v3122, 2
        %v3124 = vmin.f32 %v3122, %v3123
        %v3125 = vrot.slane %v3124, 1
        %v3126 = vmin.f32 %v3124, %v3125
        %v3127 = vsel %vm2127, %v1159, inf
        %v3128 = vsel %vm2127, %v1164, inf
        %v3129 = vmin.f32 %v3127, %v3128
        %v3130 = vrot.slane %v3129, 4
        %v3131 = vmin.f32 %v3129, %v3130
        %v3132 = vrot.slane %v3131, 2
        %v3133 = vmin.f32 %v3131, %v3132
        %v3134 = vrot.slane %v3133, 1
        %v3135 = vmin.f32 %v3133, %v3134
        %v3136 = vsel %vm2127, %v1169, inf
        %v3137 = vsel %vm2127, %v1174, inf
        %v3138 = vmin.f32 %v3136, %v3137
        %v3139 = vrot.slane %v3138, 4
        %v3140 = vmin.f32 %v3138, %v3139
        %v3141 = vrot.slane %v3140, 2
        %v3142 = vmin.f32 %v3140, %v3141
        %v3143 = vrot.slane %v3142, 1
        %v3144 = vmin.f32 %v3142, %v3143
        %v3145 = vsel %vm2127, %v1179, inf
        %v3146 = vsel %vm2127, %v1184, inf
        %v3147 = vmin.f32 %v3145, %v3146
        %v3148 = vrot.slane %v3147, 4
        %v3149 = vmin.f32 %v3147, %v3148
        %v3150 = vrot.slane %v3149, 2
        %v3151 = vmin.f32 %v3149, %v3150
        %v3152 = vrot.slane %v3151, 1
        %v3153 = vmin.f32 %v3151, %v3152
        %v3154 = vsel %vm2127, %v1189, inf
        %v3155 = vsel %vm2127, %v1194, inf
        %v3156 = vmin.f32 %v3154, %v3155
        %v3157 = vrot.slane %v3156, 4
        %v3158 = vmin.f32 %v3156, %v3157
        %v3159 = vrot.slane %v3158, 2
        %v3160 = vmin.f32 %v3158, %v3159
        %v3161 = vrot.slane %v3160, 1
        %v3162 = vmin.f32 %v3160, %v3161
        %v3163 = vsel %vm2127, %v1199, inf
        %v3164 = vsel %vm2127, %v1204, inf
        %v3165 = vmin.f32 %v3163, %v3164
        %v3166 = vrot.slane %v3165, 4
        %v3167 = vmin.f32 %v3165, %v3166
        %v3168 = vrot.slane %v3167, 2
        %v3169 = vmin.f32 %v3167, %v3168
        %v3170 = vrot.slane %v3169, 1
        %v3171 = vmin.f32 %v3169, %v3170
        %v3172 = vsel %vm2127, %v1209, inf
        %v3173 = vsel %vm2127, %v1214, inf
        %v3174 = vmin.f32 %v3172, %v3173
        %v3175 = vrot.slane %v3174, 4
        %v3176 = vmin.f32 %v3174, %v3175
        %v3177 = vrot.slane %v3176, 2
        %v3178 = vmin.f32 %v3176, %v3177
        %v3179 = vrot.slane %v3178, 1
        %v3180 = vmin.f32 %v3178, %v3179
        %v3181 = vsel %vm2127, %v1219, inf
        %v3182 = vsel %vm2127, %v1224, inf
        %v3183 = vmin.f32 %v3181, %v3182
        %v3184 = vrot.slane %v3183, 4
        %v3185 = vmin.f32 %v3183, %v3184
        %v3186 = vrot.slane %v3185, 2
        %v3187 = vmin.f32 %v3185, %v3186
        %v3188 = vrot.slane %v3187, 1
        %v3189 = vmin.f32 %v3187, %v3188
        %v3190 = vsel %vm2127, %v1229, inf
        %v3191 = vsel %vm2127, %v1234, inf
        %v3192 = vmin.f32 %v3190, %v3191
        %v3193 = vrot.slane %v3192, 4
        %v3194 = vmin.f32 %v3192, %v3193
        %v3195 = vrot.slane %v3194, 2
        %v3196 = vmin.f32 %v3194, %v3195
        %v3197 = vrot.slane %v3196, 1
        %v3198 = vmin.f32 %v3196, %v3197
        %v3199 = vsel %vm2127, %v1239, inf
        %v3200 = vsel %vm2127, %v1244, inf
        %v3201 = vmin.f32 %v3199, %v3200
        %v3202 = vrot.slane %v3201, 4
        %v3203 = vmin.f32 %v3201, %v3202
        %v3204 = vrot.slane %v3203, 2
        %v3205 = vmin.f32 %v3203, %v3204
        %v3206 = vrot.slane %v3205, 1
        %v3207 = vmin.f32 %v3205, %v3206
        %v3208 = vsel %vm2127, %v1249, inf
        %v3209 = vsel %vm2127, %v1254, inf
        %v3210 = vmin.f32 %v3208, %v3209
        %v3211 = vrot.slane %v3210, 4
        %v3212 = vmin.f32 %v3210, %v3211
        %v3213 = vrot.slane %v3212, 2
        %v3214 = vmin.f32 %v3212, %v3213
        %v3215 = vrot.slane %v3214, 1
        %v3216 = vmin.f32 %v3214, %v3215
        %v3217 = vsel %vm2127, %v1259, inf
        %v3218 = vsel %vm2127, %v1264, inf
        %v3219 = vmin.f32 %v3217, %v3218
        %v3220 = vrot.slane %v3219, 4
        %v3221 = vmin.f32 %v3219, %v3220
        %v3222 = vrot.slane %v3221, 2
        %v3223 = vmin.f32 %v3221, %v3222
        %v3224 = vrot.slane %v3223, 1
        %v3225 = vmin.f32 %v3223, %v3224
        %v3226 = vsel %vm2127, %v1269, inf
        %v3227 = vsel %vm2127, %v1274, inf
        %v3228 = vmin.f32 %v3226, %v3227
        %v3229 = vrot.slane %v3228, 4
        %v3230 = vmin.f32 %v3228, %v3229
        %v3231 = vrot.slane %v3230, 2
        %v3232 = vmin.f32 %v3230, %v3231
        %v3233 = vrot.slane %v3232, 1
        %v3234 = vmin.f32 %v3232, %v3233
        %v3235 = vsel %vm2127, %v1279, inf
        %v3236 = vsel %vm2127, %v1284, inf
        %v3237 = vmin.f32 %v3235, %v3236
        %v3238 = vrot.slane %v3237, 4
        %v3239 = vmin.f32 %v3237, %v3238
        %v3240 = vrot.slane %v3239, 2
        %v3241 = vmin.f32 %v3239, %v3240
        %v3242 = vrot.slane %v3241, 1
        %v3243 = vmin.f32 %v3241, %v3242
        %v3244 = vsel %vm2127, %v1289, inf
        %v3245 = vsel %vm2127, %v1294, inf
        %v3246 = vmin.f32 %v3244, %v3245
        %v3247 = vrot.slane %v3246, 4
        %v3248 = vmin.f32 %v3246, %v3247
        %v3249 = vrot.slane %v3248, 2
        %v3250 = vmin.f32 %v3248, %v3249
        %v3251 = vrot.slane %v3250, 1
        %v3252 = vmin.f32 %v3250, %v3251
        %v3253 = vsel %vm2127, %v1299, inf
        %v3254 = vsel %vm2127, %v1304, inf
        %v3255 = vmin.f32 %v3253, %v3254
        %v3256 = vrot.slane %v3255, 4
        %v3257 = vmin.f32 %v3255, %v3256
        %v3258 = vrot.slane %v3257, 2
        %v3259 = vmin.f32 %v3257, %v3258
        %v3260 = vrot.slane %v3259, 1
        %v3261 = vmin.f32 %v3259, %v3260
        %v3262 = vsel %vm2127, %v1309, inf
        %v3263 = vsel %vm2127, %v1314, inf
        %v3264 = vmin.f32 %v3262, %v3263
        %v3265 = vrot.slane %v3264, 4
        %v3266 = vmin.f32 %v3264, %v3265
        %v3267 = vrot.slane %v3266, 2
        %v3268 = vmin.f32 %v3266, %v3267
        %v3269 = vrot.slane %v3268, 1
        %v3270 = vmin.f32 %v3268, %v3269
        %v3271 = vsel %vm2127, %v1319, inf
        %v3272 = vsel %vm2127, %v1324, inf
        %v3273 = vmin.f32 %v3271, %v3272
        %v3274 = vrot.slane %v3273, 4
        %v3275 = vmin.f32 %v3273, %v3274
        %v3276 = vrot.slane %v3275, 2
        %v3277 = vmin.f32 %v3275, %v3276
        %v3278 = vrot.slane %v3277, 1
        %v3279 = vmin.f32 %v3277, %v3278
        %v3280 = vsel %vm2127, %v1329, inf
        %v3281 = vsel %vm2127, %v1334, inf
        %v3282 = vmin.f32 %v3280, %v3281
        %v3283 = vrot.slane %v3282, 4
        %v3284 = vmin.f32 %v3282, %v3283
        %v3285 = vrot.slane %v3284, 2
        %v3286 = vmin.f32 %v3284, %v3285
        %v3287 = vrot.slane %v3286, 1
        %v3288 = vmin.f32 %v3286, %v3287
        %v3289 = vsel %vm2127, %v1339, inf
        %v3290 = vsel %vm2127, %v1344, inf
        %v3291 = vmin.f32 %v3289, %v3290
        %v3292 = vrot.slane %v3291, 4
        %v3293 = vmin.f32 %v3291, %v3292
        %v3294 = vrot.slane %v3293, 2
        %v3295 = vmin.f32 %v3293, %v3294
        %v3296 = vrot.slane %v3295, 1
        %v3297 = vmin.f32 %v3295, %v3296
        %v3298 = vsel %vm2127, %v1349, inf
        %v3299 = vsel %vm2127, %v1354, inf
        %v3300 = vmin.f32 %v3298, %v3299
        %v3301 = vrot.slane %v3300, 4
        %v3302 = vmin.f32 %v3300, %v3301
        %v3303 = vrot.slane %v3302, 2
        %v3304 = vmin.f32 %v3302, %v3303
        %v3305 = vrot.slane %v3304, 1
        %v3306 = vmin.f32 %v3304, %v3305
        %v3307 = vsel %vm2127, %v1359, inf
        %v3308 = vsel %vm2127, %v1364, inf
        %v3309 = vmin.f32 %v3307, %v3308
        %v3310 = vrot.slane %v3309, 4
        %v3311 = vmin.f32 %v3309, %v3310
        %v3312 = vrot.slane %v3311, 2
        %v3313 = vmin.f32 %v3311, %v3312
        %v3314 = vrot.slane %v3313, 1
        %v3315 = vmin.f32 %v3313, %v3314
        %v3316 = vsel %vm2127, %v1369, inf
        %v3317 = vsel %vm2127, %v1374, inf
        %v3318 = vmin.f32 %v3316, %v3317
        %v3319 = vrot.slane %v3318, 4
        %v3320 = vmin.f32 %v3318, %v3319
        %v3321 = vrot.slane %v3320, 2
        %v3322 = vmin.f32 %v3320, %v3321
        %v3323 = vrot.slane %v3322, 1
        %v3324 = vmin.f32 %v3322, %v3323
        %v3325 = vsel %vm2127, %v1379, inf
        %v3326 = vsel %vm2127, %v1384, inf
        %v3327 = vmin.f32 %v3325, %v3326
        %v3328 = vrot.slane %v3327, 4
        %v3329 = vmin.f32 %v3327, %v3328
        %v3330 = vrot.slane %v3329, 2
        %v3331 = vmin.f32 %v3329, %v3330
        %v3332 = vrot.slane %v3331, 1
        %v3333 = vmin.f32 %v3331, %v3332
        %v3334 = vsel %vm2127, %v1389, inf
        %v3335 = vsel %vm2127, %v1394, inf
        %v3336 = vmin.f32 %v3334, %v3335
        %v3337 = vrot.slane %v3336, 4
        %v3338 = vmin.f32 %v3336, %v3337
        %v3339 = vrot.slane %v3338, 2
        %v3340 = vmin.f32 %v3338, %v3339
        %v3341 = vrot.slane %v3340, 1
        %v3342 = vmin.f32 %v3340, %v3341
        %v3343 = vsel %vm2127, %v1399, inf
        %v3344 = vsel %vm2127, %v1404, inf
        %v3345 = vmin.f32 %v3343, %v3344
        %v3346 = vrot.slane %v3345, 4
        %v3347 = vmin.f32 %v3345, %v3346
        %v3348 = vrot.slane %v3347, 2
        %v3349 = vmin.f32 %v3347, %v3348
        %v3350 = vrot.slane %v3349, 1
        %v3351 = vmin.f32 %v3349, %v3350
        %v3352 = vsel %vm2127, %v1409, inf
        %v3353 = vsel %vm2127, %v1414, inf
        %v3354 = vmin.f32 %v3352, %v3353
        %v3355 = vrot.slane %v3354, 4
        %v3356 = vmin.f32 %v3354, %v3355
        %v3357 = vrot.slane %v3356, 2
        %v3358 = vmin.f32 %v3356, %v3357
        %v3359 = vrot.slane %v3358, 1
        %v3360 = vmin.f32 %v3358, %v3359
        %v3361 = vsel %vm2127, %v1419, inf
        %v3362 = vsel %vm2127, %v1424, inf
        %v3363 = vmin.f32 %v3361, %v3362
        %v3364 = vrot.slane %v3363, 4
        %v3365 = vmin.f32 %v3363, %v3364
        %v3366 = vrot.slane %v3365, 2
        %v3367 = vmin.f32 %v3365, %v3366
        %v3368 = vrot.slane %v3367, 1
        %v3369 = vmin.f32 %v3367, %v3368
        %v3370 = vsel %vm2127, %v1429, inf
        %v3371 = vsel %vm2127, %v1434, inf
        %v3372 = vmin.f32 %v3370, %v3371
        %v3373 = vrot.slane %v3372, 4
        %v3374 = vmin.f32 %v3372, %v3373
        %v3375 = vrot.slane %v3374, 2
        %v3376 = vmin.f32 %v3374, %v3375
        %v3377 = vrot.slane %v3376, 1
        %v3378 = vmin.f32 %v3376, %v3377
        %v3379 = vsel %vm2127, %v1439, inf
        %v3380 = vsel %vm2127, %v1444, inf
        %v3381 = vmin.f32 %v3379, %v3380
        %v3382 = vrot.slane %v3381, 4
        %v3383 = vmin.f32 %v3381, %v3382
        %v3384 = vrot.slane %v3383, 2
        %v3385 = vmin.f32 %v3383, %v3384
        %v3386 = vrot.slane %v3385, 1
        %v3387 = vmin.f32 %v3385, %v3386
        %v3388 = vsel %vm2127, %v1449, inf
        %v3389 = vsel %vm2127, %v1454, inf
        %v3390 = vmin.f32 %v3388, %v3389
        %v3391 = vrot.slane %v3390, 4
        %v3392 = vmin.f32 %v3390, %v3391
        %v3393 = vrot.slane %v3392, 2
        %v3394 = vmin.f32 %v3392, %v3393
        %v3395 = vrot.slane %v3394, 1
        %v3396 = vmin.f32 %v3394, %v3395
        %v3397 = vsel %vm2127, %v1459, inf
        %v3398 = vsel %vm2127, %v1464, inf
        %v3399 = vmin.f32 %v3397, %v3398
        %v3400 = vrot.slane %v3399, 4
        %v3401 = vmin.f32 %v3399, %v3400
        %v3402 = vrot.slane %v3401, 2
        %v3403 = vmin.f32 %v3401, %v3402
        %v3404 = vrot.slane %v3403, 1
        %v3405 = vmin.f32 %v3403, %v3404
        %v3406 = vsel %vm2127, %v1469, inf
        %v3407 = vsel %vm2127, %v1474, inf
        %v3408 = vmin.f32 %v3406, %v3407
        %v3409 = vrot.slane %v3408, 4
        %v3410 = vmin.f32 %v3408, %v3409
        %v3411 = vrot.slane %v3410, 2
        %v3412 = vmin.f32 %v3410, %v3411
        %v3413 = vrot.slane %v3412, 1
        %v3414 = vmin.f32 %v3412, %v3413
        %v3415 = vsel %vm2127, %v1479, inf
        %v3416 = vsel %vm2127, %v1484, inf
        %v3417 = vmin.f32 %v3415, %v3416
        %v3418 = vrot.slane %v3417, 4
        %v3419 = vmin.f32 %v3417, %v3418
        %v3420 = vrot.slane %v3419, 2
        %v3421 = vmin.f32 %v3419, %v3420
        %v3422 = vrot.slane %v3421, 1
        %v3423 = vmin.f32 %v3421, %v3422
        %v3424 = vsel %vm2127, %v1489, inf
        %v3425 = vsel %vm2127, %v1494, inf
        %v3426 = vmin.f32 %v3424, %v3425
        %v3427 = vrot.slane %v3426, 4
        %v3428 = vmin.f32 %v3426, %v3427
        %v3429 = vrot.slane %v3428, 2
        %v3430 = vmin.f32 %v3428, %v3429
        %v3431 = vrot.slane %v3430, 1
        %v3432 = vmin.f32 %v3430, %v3431
        %v3433 = vsel %vm2127, %v1499, inf
        %v3434 = vsel %vm2127, %v1504, inf
        %v3435 = vmin.f32 %v3433, %v3434
        %v3436 = vrot.slane %v3435, 4
        %v3437 = vmin.f32 %v3435, %v3436
        %v3438 = vrot.slane %v3437, 2
        %v3439 = vmin.f32 %v3437, %v3438
        %v3440 = vrot.slane %v3439, 1
        %v3441 = vmin.f32 %v3439, %v3440
        %v3442 = vsel %vm2127, %v1509, inf
        %v3443 = vsel %vm2127, %v1514, inf
        %v3444 = vmin.f32 %v3442, %v3443
        %v3445 = vrot.slane %v3444, 4
        %v3446 = vmin.f32 %v3444, %v3445
        %v3447 = vrot.slane %v3446, 2
        %v3448 = vmin.f32 %v3446, %v3447
        %v3449 = vrot.slane %v3448, 1
        %v3450 = vmin.f32 %v3448, %v3449
        %v3451 = vsel %vm2127, %v1519, inf
        %v3452 = vsel %vm2127, %v1524, inf
        %v3453 = vmin.f32 %v3451, %v3452
        %v3454 = vrot.slane %v3453, 4
        %v3455 = vmin.f32 %v3453, %v3454
        %v3456 = vrot.slane %v3455, 2
        %v3457 = vmin.f32 %v3455, %v3456
        %v3458 = vrot.slane %v3457, 1
        %v3459 = vmin.f32 %v3457, %v3458
        %v3460 = vsel %vm2127, %v1529, inf
        %v3461 = vsel %vm2127, %v1534, inf
        %v3462 = vmin.f32 %v3460, %v3461
        %v3463 = vrot.slane %v3462, 4
        %v3464 = vmin.f32 %v3462, %v3463
        %v3465 = vrot.slane %v3464, 2
        %v3466 = vmin.f32 %v3464, %v3465
        %v3467 = vrot.slane %v3466, 1
        %v3468 = vmin.f32 %v3466, %v3467
        %v3469 = vsel %vm2127, %v1539, inf
        %v3470 = vsel %vm2127, %v1544, inf
        %v3471 = vmin.f32 %v3469, %v3470
        %v3472 = vrot.slane %v3471, 4
        %v3473 = vmin.f32 %v3471, %v3472
        %v3474 = vrot.slane %v3473, 2
        %v3475 = vmin.f32 %v3473, %v3474
        %v3476 = vrot.slane %v3475, 1
        %v3477 = vmin.f32 %v3475, %v3476
        %v3478 = vsel %vm2127, %v1549, inf
        %v3479 = vsel %vm2127, %v1554, inf
        %v3480 = vmin.f32 %v3478, %v3479
        %v3481 = vrot.slane %v3480, 4
        %v3482 = vmin.f32 %v3480, %v3481
        %v3483 = vrot.slane %v3482, 2
        %v3484 = vmin.f32 %v3482, %v3483
        %v3485 = vrot.slane %v3484, 1
        %v3486 = vmin.f32 %v3484, %v3485
        %v3487 = vsel %vm2127, %v1559, inf
        %v3488 = vsel %vm2127, %v1564, inf
        %v3489 = vmin.f32 %v3487, %v3488
        %v3490 = vrot.slane %v3489, 4
        %v3491 = vmin.f32 %v3489, %v3490
        %v3492 = vrot.slane %v3491, 2
        %v3493 = vmin.f32 %v3491, %v3492
        %v3494 = vrot.slane %v3493, 1
        %v3495 = vmin.f32 %v3493, %v3494
        %v3496 = vsel %vm2127, %v1569, inf
        %v3497 = vsel %vm2127, %v1574, inf
        %v3498 = vmin.f32 %v3496, %v3497
        %v3499 = vrot.slane %v3498, 4
        %v3500 = vmin.f32 %v3498, %v3499
        %v3501 = vrot.slane %v3500, 2
        %v3502 = vmin.f32 %v3500, %v3501
        %v3503 = vrot.slane %v3502, 1
        %v3504 = vmin.f32 %v3502, %v3503
        %v3505 = vsel %vm2127, %v1579, inf
        %v3506 = vsel %vm2127, %v1584, inf
        %v3507 = vmin.f32 %v3505, %v3506
        %v3508 = vrot.slane %v3507, 4
        %v3509 = vmin.f32 %v3507, %v3508
        %v3510 = vrot.slane %v3509, 2
        %v3511 = vmin.f32 %v3509, %v3510
        %v3512 = vrot.slane %v3511, 1
        %v3513 = vmin.f32 %v3511, %v3512
        %v3514 = vsel %vm2127, %v1589, inf
        %v3515 = vsel %vm2127, %v1594, inf
        %v3516 = vmin.f32 %v3514, %v3515
        %v3517 = vrot.slane %v3516, 4
        %v3518 = vmin.f32 %v3516, %v3517
        %v3519 = vrot.slane %v3518, 2
        %v3520 = vmin.f32 %v3518, %v3519
        %v3521 = vrot.slane %v3520, 1
        %v3522 = vmin.f32 %v3520, %v3521
        %v3523 = vsel %vm2127, %v1599, inf
        %v3524 = vsel %vm2127, %v1604, inf
        %v3525 = vmin.f32 %v3523, %v3524
        %v3526 = vrot.slane %v3525, 4
        %v3527 = vmin.f32 %v3525, %v3526
        %v3528 = vrot.slane %v3527, 2
        %v3529 = vmin.f32 %v3527, %v3528
        %v3530 = vrot.slane %v3529, 1
        %v3531 = vmin.f32 %v3529, %v3530
        %v3532 = vsel %vm2127, %v1609, inf
        %v3533 = vsel %vm2127, %v1614, inf
        %v3534 = vmin.f32 %v3532, %v3533
        %v3535 = vrot.slane %v3534, 4
        %v3536 = vmin.f32 %v3534, %v3535
        %v3537 = vrot.slane %v3536, 2
        %v3538 = vmin.f32 %v3536, %v3537
        %v3539 = vrot.slane %v3538, 1
        %v3540 = vmin.f32 %v3538, %v3539
        %v3541 = vsel %vm2127, %v1619, inf
        %v3542 = vsel %vm2127, %v1624, inf
        %v3543 = vmin.f32 %v3541, %v3542
        %v3544 = vrot.slane %v3543, 4
        %v3545 = vmin.f32 %v3543, %v3544
        %v3546 = vrot.slane %v3545, 2
        %v3547 = vmin.f32 %v3545, %v3546
        %v3548 = vrot.slane %v3547, 1
        %v3549 = vmin.f32 %v3547, %v3548
        %v3550 = vsel %vm2127, %v1629, inf
        %v3551 = vsel %vm2127, %v1634, inf
        %v3552 = vmin.f32 %v3550, %v3551
        %v3553 = vrot.slane %v3552, 4
        %v3554 = vmin.f32 %v3552, %v3553
        %v3555 = vrot.slane %v3554, 2
        %v3556 = vmin.f32 %v3554, %v3555
        %v3557 = vrot.slane %v3556, 1
        %v3558 = vmin.f32 %v3556, %v3557
        %v3559 = vsel %vm2127, %v1639, inf
        %v3560 = vsel %vm2127, %v1644, inf
        %v3561 = vmin.f32 %v3559, %v3560
        %v3562 = vrot.slane %v3561, 4
        %v3563 = vmin.f32 %v3561, %v3562
        %v3564 = vrot.slane %v3563, 2
        %v3565 = vmin.f32 %v3563, %v3564
        %v3566 = vrot.slane %v3565, 1
        %v3567 = vmin.f32 %v3565, %v3566
        %v3568 = vsel %vm2127, %v1649, inf
        %v3569 = vsel %vm2127, %v1654, inf
        %v3570 = vmin.f32 %v3568, %v3569
        %v3571 = vrot.slane %v3570, 4
        %v3572 = vmin.f32 %v3570, %v3571
        %v3573 = vrot.slane %v3572, 2
        %v3574 = vmin.f32 %v3572, %v3573
        %v3575 = vrot.slane %v3574, 1
        %v3576 = vmin.f32 %v3574, %v3575
        %v3577 = vsel %vm2127, %v1659, inf
        %v3578 = vsel %vm2127, %v1664, inf
        %v3579 = vmin.f32 %v3577, %v3578
        %v3580 = vrot.slane %v3579, 4
        %v3581 = vmin.f32 %v3579, %v3580
        %v3582 = vrot.slane %v3581, 2
        %v3583 = vmin.f32 %v3581, %v3582
        %v3584 = vrot.slane %v3583, 1
        %v3585 = vmin.f32 %v3583, %v3584
        %v3586 = vsel %vm2127, %v1669, inf
        %v3587 = vsel %vm2127, %v1674, inf
        %v3588 = vmin.f32 %v3586, %v3587
        %v3589 = vrot.slane %v3588, 4
        %v3590 = vmin.f32 %v3588, %v3589
        %v3591 = vrot.slane %v3590, 2
        %v3592 = vmin.f32 %v3590, %v3591
        %v3593 = vrot.slane %v3592, 1
        %v3594 = vmin.f32 %v3592, %v3593
        %v3595 = vsel %vm2127, %v1679, inf
        %v3596 = vsel %vm2127, %v1684, inf
        %v3597 = vmin.f32 %v3595, %v3596
        %v3598 = vrot.slane %v3597, 4
        %v3599 = vmin.f32 %v3597, %v3598
        %v3600 = vrot.slane %v3599, 2
        %v3601 = vmin.f32 %v3599, %v3600
        %v3602 = vrot.slane %v3601, 1
        %v3603 = vmin.f32 %v3601, %v3602
        %v3604 = vsel %vm2127, %v1689, inf
        %v3605 = vsel %vm2127, %v1694, inf
        %v3606 = vmin.f32 %v3604, %v3605
        %v3607 = vrot.slane %v3606, 4
        %v3608 = vmin.f32 %v3606, %v3607
        %v3609 = vrot.slane %v3608, 2
        %v3610 = vmin.f32 %v3608, %v3609
        %v3611 = vrot.slane %v3610, 1
        %v3612 = vmin.f32 %v3610, %v3611
        %v3613 = vsel %vm2127, %v1699, inf
        %v3614 = vsel %vm2127, %v1704, inf
        %v3615 = vmin.f32 %v3613, %v3614
        %v3616 = vrot.slane %v3615, 4
        %v3617 = vmin.f32 %v3615, %v3616
        %v3618 = vrot.slane %v3617, 2
        %v3619 = vmin.f32 %v3617, %v3618
        %v3620 = vrot.slane %v3619, 1
        %v3621 = vmin.f32 %v3619, %v3620
        %v3622 = vsel %vm2127, %v1709, inf
        %v3623 = vsel %vm2127, %v1714, inf
        %v3624 = vmin.f32 %v3622, %v3623
        %v3625 = vrot.slane %v3624, 4
        %v3626 = vmin.f32 %v3624, %v3625
        %v3627 = vrot.slane %v3626, 2
        %v3628 = vmin.f32 %v3626, %v3627
        %v3629 = vrot.slane %v3628, 1
        %v3630 = vmin.f32 %v3628, %v3629
        %v3631 = vsel %vm2127, %v1719, inf
        %v3632 = vsel %vm2127, %v1724, inf
        %v3633 = vmin.f32 %v3631, %v3632
        %v3634 = vrot.slane %v3633, 4
        %v3635 = vmin.f32 %v3633, %v3634
        %v3636 = vrot.slane %v3635, 2
        %v3637 = vmin.f32 %v3635, %v3636
        %v3638 = vrot.slane %v3637, 1
        %v3639 = vmin.f32 %v3637, %v3638
        %v3640 = vsel %vm2127, %v1729, inf
        %v3641 = vsel %vm2127, %v1734, inf
        %v3642 = vmin.f32 %v3640, %v3641
        %v3643 = vrot.slane %v3642, 4
        %v3644 = vmin.f32 %v3642, %v3643
        %v3645 = vrot.slane %v3644, 2
        %v3646 = vmin.f32 %v3644, %v3645
        %v3647 = vrot.slane %v3646, 1
        %v3648 = vmin.f32 %v3646, %v3647
        %v3649 = vsel %vm2127, %v1739, inf
        %v3650 = vsel %vm2127, %v1744, inf
        %v3651 = vmin.f32 %v3649, %v3650
        %v3652 = vrot.slane %v3651, 4
        %v3653 = vmin.f32 %v3651, %v3652
        %v3654 = vrot.slane %v3653, 2
        %v3655 = vmin.f32 %v3653, %v3654
        %v3656 = vrot.slane %v3655, 1
        %v3657 = vmin.f32 %v3655, %v3656
        %v3658 = vsel %vm2127, %v1749, inf
        %v3659 = vsel %vm2127, %v1754, inf
        %v3660 = vmin.f32 %v3658, %v3659
        %v3661 = vrot.slane %v3660, 4
        %v3662 = vmin.f32 %v3660, %v3661
        %v3663 = vrot.slane %v3662, 2
        %v3664 = vmin.f32 %v3662, %v3663
        %v3665 = vrot.slane %v3664, 1
        %v3666 = vmin.f32 %v3664, %v3665
        %v3667 = vsel %vm2127, %v1759, inf
        %v3668 = vsel %vm2127, %v1764, inf
        %v3669 = vmin.f32 %v3667, %v3668
        %v3670 = vrot.slane %v3669, 4
        %v3671 = vmin.f32 %v3669, %v3670
        %v3672 = vrot.slane %v3671, 2
        %v3673 = vmin.f32 %v3671, %v3672
        %v3674 = vrot.slane %v3673, 1
        %v3675 = vmin.f32 %v3673, %v3674
        %v3676 = vsel %vm2127, %v1769, inf
        %v3677 = vsel %vm2127, %v1774, inf
        %v3678 = vmin.f32 %v3676, %v3677
        %v3679 = vrot.slane %v3678, 4
        %v3680 = vmin.f32 %v3678, %v3679
        %v3681 = vrot.slane %v3680, 2
        %v3682 = vmin.f32 %v3680, %v3681
        %v3683 = vrot.slane %v3682, 1
        %v3684 = vmin.f32 %v3682, %v3683
        %v3685 = vsel %vm2127, %v1779, inf
        %v3686 = vsel %vm2127, %v1784, inf
        %v3687 = vmin.f32 %v3685, %v3686
        %v3688 = vrot.slane %v3687, 4
        %v3689 = vmin.f32 %v3687, %v3688
        %v3690 = vrot.slane %v3689, 2
        %v3691 = vmin.f32 %v3689, %v3690
        %v3692 = vrot.slane %v3691, 1
        %v3693 = vmin.f32 %v3691, %v3692
        %v3694 = vsel %vm2127, %v1789, inf
        %v3695 = vsel %vm2127, %v1794, inf
        %v3696 = vmin.f32 %v3694, %v3695
        %v3697 = vrot.slane %v3696, 4
        %v3698 = vmin.f32 %v3696, %v3697
        %v3699 = vrot.slane %v3698, 2
        %v3700 = vmin.f32 %v3698, %v3699
        %v3701 = vrot.slane %v3700, 1
        %v3702 = vmin.f32 %v3700, %v3701
        %v3703 = vsel %vm2127, %v1799, inf
        %v3704 = vsel %vm2127, %v1804, inf
        %v3705 = vmin.f32 %v3703, %v3704
        %v3706 = vrot.slane %v3705, 4
        %v3707 = vmin.f32 %v3705, %v3706
        %v3708 = vrot.slane %v3707, 2
        %v3709 = vmin.f32 %v3707, %v3708
        %v3710 = vrot.slane %v3709, 1
        %v3711 = vmin.f32 %v3709, %v3710
        %v3712 = vsel %vm2127, %v1809, inf
        %v3713 = vsel %vm2127, %v1814, inf
        %v3714 = vmin.f32 %v3712, %v3713
        %v3715 = vrot.slane %v3714, 4
        %v3716 = vmin.f32 %v3714, %v3715
        %v3717 = vrot.slane %v3716, 2
        %v3718 = vmin.f32 %v3716, %v3717
        %v3719 = vrot.slane %v3718, 1
        %v3720 = vmin.f32 %v3718, %v3719
        %v3721 = vsel %vm2127, %v1819, inf
        %v3722 = vsel %vm2127, %v1824, inf
        %v3723 = vmin.f32 %v3721, %v3722
        %v3724 = vrot.slane %v3723, 4
        %v3725 = vmin.f32 %v3723, %v3724
        %v3726 = vrot.slane %v3725, 2
        %v3727 = vmin.f32 %v3725, %v3726
        %v3728 = vrot.slane %v3727, 1
        %v3729 = vmin.f32 %v3727, %v3728
        %v3730 = vsel %vm2127, %v1829, inf
        %v3731 = vsel %vm2127, %v1834, inf
        %v3732 = vmin.f32 %v3730, %v3731
        %v3733 = vrot.slane %v3732, 4
        %v3734 = vmin.f32 %v3732, %v3733
        %v3735 = vrot.slane %v3734, 2
        %v3736 = vmin.f32 %v3734, %v3735
        %v3737 = vrot.slane %v3736, 1
        %v3738 = vmin.f32 %v3736, %v3737
        %v3739 = vsel %vm2127, %v1839, inf
        %v3740 = vsel %vm2127, %v1844, inf
        %v3741 = vmin.f32 %v3739, %v3740
        %v3742 = vrot.slane %v3741, 4
        %v3743 = vmin.f32 %v3741, %v3742
        %v3744 = vrot.slane %v3743, 2
        %v3745 = vmin.f32 %v3743, %v3744
        %v3746 = vrot.slane %v3745, 1
        %v3747 = vmin.f32 %v3745, %v3746
        %v3748 = vsel %vm2127, %v1849, inf
        %v3749 = vsel %vm2127, %v1854, inf
        %v3750 = vmin.f32 %v3748, %v3749
        %v3751 = vrot.slane %v3750, 4
        %v3752 = vmin.f32 %v3750, %v3751
        %v3753 = vrot.slane %v3752, 2
        %v3754 = vmin.f32 %v3752, %v3753
        %v3755 = vrot.slane %v3754, 1
        %v3756 = vmin.f32 %v3754, %v3755
        %v3757 = vsel %vm2127, %v1859, inf
        %v3758 = vsel %vm2127, %v1864, inf
        %v3759 = vmin.f32 %v3757, %v3758
        %v3760 = vrot.slane %v3759, 4
        %v3761 = vmin.f32 %v3759, %v3760
        %v3762 = vrot.slane %v3761, 2
        %v3763 = vmin.f32 %v3761, %v3762
        %v3764 = vrot.slane %v3763, 1
        %v3765 = vmin.f32 %v3763, %v3764
        %v3766 = vsel %vm2127, %v1869, inf
        %v3767 = vsel %vm2127, %v1874, inf
        %v3768 = vmin.f32 %v3766, %v3767
        %v3769 = vrot.slane %v3768, 4
        %v3770 = vmin.f32 %v3768, %v3769
        %v3771 = vrot.slane %v3770, 2
        %v3772 = vmin.f32 %v3770, %v3771
        %v3773 = vrot.slane %v3772, 1
        %v3774 = vmin.f32 %v3772, %v3773
        %v3775 = vsel %vm2127, %v1879, inf
        %v3776 = vsel %vm2127, %v1884, inf
        %v3777 = vmin.f32 %v3775, %v3776
        %v3778 = vrot.slane %v3777, 4
        %v3779 = vmin.f32 %v3777, %v3778
        %v3780 = vrot.slane %v3779, 2
        %v3781 = vmin.f32 %v3779, %v3780
        %v3782 = vrot.slane %v3781, 1
        %v3783 = vmin.f32 %v3781, %v3782
        %v3784 = vsel %vm2127, %v1889, inf
        %v3785 = vsel %vm2127, %v1894, inf
        %v3786 = vmin.f32 %v3784, %v3785
        %v3787 = vrot.slane %v3786, 4
        %v3788 = vmin.f32 %v3786, %v3787
        %v3789 = vrot.slane %v3788, 2
        %v3790 = vmin.f32 %v3788, %v3789
        %v3791 = vrot.slane %v3790, 1
        %v3792 = vmin.f32 %v3790, %v3791
        %v3793 = vsel %vm2127, %v1899, inf
        %v3794 = vsel %vm2127, %v1904, inf
        %v3795 = vmin.f32 %v3793, %v3794
        %v3796 = vrot.slane %v3795, 4
        %v3797 = vmin.f32 %v3795, %v3796
        %v3798 = vrot.slane %v3797, 2
        %v3799 = vmin.f32 %v3797, %v3798
        %v3800 = vrot.slane %v3799, 1
        %v3801 = vmin.f32 %v3799, %v3800
        %v3802 = vsel %vm2127, %v1909, inf
        %v3803 = vsel %vm2127, %v1914, inf
        %v3804 = vmin.f32 %v3802, %v3803
        %v3805 = vrot.slane %v3804, 4
        %v3806 = vmin.f32 %v3804, %v3805
        %v3807 = vrot.slane %v3806, 2
        %v3808 = vmin.f32 %v3806, %v3807
        %v3809 = vrot.slane %v3808, 1
        %v3810 = vmin.f32 %v3808, %v3809
        %v3811 = vsel %vm2127, %v1919, inf
        %v3812 = vsel %vm2127, %v1924, inf
        %v3813 = vmin.f32 %v3811, %v3812
        %v3814 = vrot.slane %v3813, 4
        %v3815 = vmin.f32 %v3813, %v3814
        %v3816 = vrot.slane %v3815, 2
        %v3817 = vmin.f32 %v3815, %v3816
        %v3818 = vrot.slane %v3817, 1
        %v3819 = vmin.f32 %v3817, %v3818
        %v3820 = vsel %vm2127, %v1929, inf
        %v3821 = vsel %vm2127, %v1934, inf
        %v3822 = vmin.f32 %v3820, %v3821
        %v3823 = vrot.slane %v3822, 4
        %v3824 = vmin.f32 %v3822, %v3823
        %v3825 = vrot.slane %v3824, 2
        %v3826 = vmin.f32 %v3824, %v3825
        %v3827 = vrot.slane %v3826, 1
        %v3828 = vmin.f32 %v3826, %v3827
        %v3829 = vsel %vm2127, %v1939, inf
        %v3830 = vsel %vm2127, %v1944, inf
        %v3831 = vmin.f32 %v3829, %v3830
        %v3832 = vrot.slane %v3831, 4
        %v3833 = vmin.f32 %v3831, %v3832
        %v3834 = vrot.slane %v3833, 2
        %v3835 = vmin.f32 %v3833, %v3834
        %v3836 = vrot.slane %v3835, 1
        %v3837 = vmin.f32 %v3835, %v3836
        %v3838 = vsel %vm2127, %v1949, inf
        %v3839 = vsel %vm2127, %v1954, inf
        %v3840 = vmin.f32 %v3838, %v3839
        %v3841 = vrot.slane %v3840, 4
        %v3842 = vmin.f32 %v3840, %v3841
        %v3843 = vrot.slane %v3842, 2
        %v3844 = vmin.f32 %v3842, %v3843
        %v3845 = vrot.slane %v3844, 1
        %v3846 = vmin.f32 %v3844, %v3845
        %v3847 = vsel %vm2127, %v1959, inf
        %v3848 = vsel %vm2127, %v1964, inf
        %v3849 = vmin.f32 %v3847, %v3848
        %v3850 = vrot.slane %v3849, 4
        %v3851 = vmin.f32 %v3849, %v3850
        %v3852 = vrot.slane %v3851, 2
        %v3853 = vmin.f32 %v3851, %v3852
        %v3854 = vrot.slane %v3853, 1
        %v3855 = vmin.f32 %v3853, %v3854
        %v3856 = vsel %vm2127, %v1969, inf
        %v3857 = vsel %vm2127, %v1974, inf
        %v3858 = vmin.f32 %v3856, %v3857
        %v3859 = vrot.slane %v3858, 4
        %v3860 = vmin.f32 %v3858, %v3859
        %v3861 = vrot.slane %v3860, 2
        %v3862 = vmin.f32 %v3860, %v3861
        %v3863 = vrot.slane %v3862, 1
        %v3864 = vmin.f32 %v3862, %v3863
        %v3865 = vsel %vm2127, %v1979, inf
        %v3866 = vsel %vm2127, %v1984, inf
        %v3867 = vmin.f32 %v3865, %v3866
        %v3868 = vrot.slane %v3867, 4
        %v3869 = vmin.f32 %v3867, %v3868
        %v3870 = vrot.slane %v3869, 2
        %v3871 = vmin.f32 %v3869, %v3870
        %v3872 = vrot.slane %v3871, 1
        %v3873 = vmin.f32 %v3871, %v3872
        %v3874 = vsel %vm2127, %v1989, inf
        %v3875 = vsel %vm2127, %v1994, inf
        %v3876 = vmin.f32 %v3874, %v3875
        %v3877 = vrot.slane %v3876, 4
        %v3878 = vmin.f32 %v3876, %v3877
        %v3879 = vrot.slane %v3878, 2
        %v3880 = vmin.f32 %v3878, %v3879
        %v3881 = vrot.slane %v3880, 1
        %v3882 = vmin.f32 %v3880, %v3881
        %v3883 = vsel %vm2127, %v1999, inf
        %v3884 = vsel %vm2127, %v2004, inf
        %v3885 = vmin.f32 %v3883, %v3884
        %v3886 = vrot.slane %v3885, 4
        %v3887 = vmin.f32 %v3885, %v3886
        %v3888 = vrot.slane %v3887, 2
        %v3889 = vmin.f32 %v3887, %v3888
        %v3890 = vrot.slane %v3889, 1
        %v3891 = vmin.f32 %v3889, %v3890
        %v3892 = vsel %vm2127, %v2009, inf
        %v3893 = vsel %vm2127, %v2014, inf
        %v3894 = vmin.f32 %v3892, %v3893
        %v3895 = vrot.slane %v3894, 4
        %v3896 = vmin.f32 %v3894, %v3895
        %v3897 = vrot.slane %v3896, 2
        %v3898 = vmin.f32 %v3896, %v3897
        %v3899 = vrot.slane %v3898, 1
        %v3900 = vmin.f32 %v3898, %v3899
        %v3901 = vsel %vm2127, %v2019, inf
        %v3902 = vsel %vm2127, %v2024, inf
        %v3903 = vmin.f32 %v3901, %v3902
        %v3904 = vrot.slane %v3903, 4
        %v3905 = vmin.f32 %v3903, %v3904
        %v3906 = vrot.slane %v3905, 2
        %v3907 = vmin.f32 %v3905, %v3906
        %v3908 = vrot.slane %v3907, 1
        %v3909 = vmin.f32 %v3907, %v3908
        %v3910 = vsel %vm2127, %v2029, inf
        %v3911 = vsel %vm2127, %v2034, inf
        %v3912 = vmin.f32 %v3910, %v3911
        %v3913 = vrot.slane %v3912, 4
        %v3914 = vmin.f32 %v3912, %v3913
        %v3915 = vrot.slane %v3914, 2
        %v3916 = vmin.f32 %v3914, %v3915
        %v3917 = vrot.slane %v3916, 1
        %v3918 = vmin.f32 %v3916, %v3917
        %v3919 = vsel %vm2127, %v2039, inf
        %v3920 = vsel %vm2127, %v2044, inf
        %v3921 = vmin.f32 %v3919, %v3920
        %v3922 = vrot.slane %v3921, 4
        %v3923 = vmin.f32 %v3921, %v3922
        %v3924 = vrot.slane %v3923, 2
        %v3925 = vmin.f32 %v3923, %v3924
        %v3926 = vrot.slane %v3925, 1
        %v3927 = vmin.f32 %v3925, %v3926
        %v3928 = vsel %vm2127, %v2049, inf
        %v3929 = vsel %vm2127, %v2054, inf
        %v3930 = vmin.f32 %v3928, %v3929
        %v3931 = vrot.slane %v3930, 4
        %v3932 = vmin.f32 %v3930, %v3931
        %v3933 = vrot.slane %v3932, 2
        %v3934 = vmin.f32 %v3932, %v3933
        %v3935 = vrot.slane %v3934, 1
        %v3936 = vmin.f32 %v3934, %v3935
        %v3937 = vsel %vm2127, %v2059, inf
        %v3938 = vsel %vm2127, %v2064, inf
        %v3939 = vmin.f32 %v3937, %v3938
        %v3940 = vrot.slane %v3939, 4
        %v3941 = vmin.f32 %v3939, %v3940
        %v3942 = vrot.slane %v3941, 2
        %v3943 = vmin.f32 %v3941, %v3942
        %v3944 = vrot.slane %v3943, 1
        %v3945 = vmin.f32 %v3943, %v3944
        %v3946 = vsel %vm2127, %v2069, inf
        %v3947 = vsel %vm2127, %v2074, inf
        %v3948 = vmin.f32 %v3946, %v3947
        %v3949 = vrot.slane %v3948, 4
        %v3950 = vmin.f32 %v3948, %v3949
        %v3951 = vrot.slane %v3950, 2
        %v3952 = vmin.f32 %v3950, %v3951
        %v3953 = vrot.slane %v3952, 1
        %v3954 = vmin.f32 %v3952, %v3953
        %v3955 = vsel %vm2127, %v2079, inf
        %v3956 = vsel %vm2127, %v2084, inf
        %v3957 = vmin.f32 %v3955, %v3956
        %v3958 = vrot.slane %v3957, 4
        %v3959 = vmin.f32 %v3957, %v3958
        %v3960 = vrot.slane %v3959, 2
        %v3961 = vmin.f32 %v3959, %v3960
        %v3962 = vrot.slane %v3961, 1
        %v3963 = vmin.f32 %v3961, %v3962
        %v3964 = vsel %vm2127, %v2089, inf
        %v3965 = vsel %vm2127, %v2094, inf
        %v3966 = vmin.f32 %v3964, %v3965
        %v3967 = vrot.slane %v3966, 4
        %v3968 = vmin.f32 %v3966, %v3967
        %v3969 = vrot.slane %v3968, 2
        %v3970 = vmin.f32 %v3968, %v3969
        %v3971 = vrot.slane %v3970, 1
        %v3972 = vmin.f32 %v3970, %v3971
        %v3973 = vsel %vm2127, %v2099, inf
        %v3974 = vsel %vm2127, %v2104, inf
        %v3975 = vmin.f32 %v3973, %v3974
        %v3976 = vrot.slane %v3975, 4
        %v3977 = vmin.f32 %v3975, %v3976
        %v3978 = vrot.slane %v3977, 2
        %v3979 = vmin.f32 %v3977, %v3978
        %v3980 = vrot.slane %v3979, 1
        %v3981 = vmin.f32 %v3979, %v3980
        %v3982 = vsel %vm2127, %v2109, inf
        %v3983 = vsel %vm2127, %v2114, inf
        %v3984 = vmin.f32 %v3982, %v3983
        %v3985 = vrot.slane %v3984, 4
        %v3986 = vmin.f32 %v3984, %v3985
        %v3987 = vrot.slane %v3986, 2
        %v3988 = vmin.f32 %v3986, %v3987
        %v3989 = vrot.slane %v3988, 1
        %v3990 = vmin.f32 %v3988, %v3989
        %v3991 = vsel %vm2127, %v2119, inf
        %v3992 = vsel %vm2127, %v2124, inf
        %v3993 = vmin.f32 %v3991, %v3992
        %v3994 = vrot.slane %v3993, 4
        %v3995 = vmin.f32 %v3993, %v3994
        %v3996 = vrot.slane %v3995, 2
        %v3997 = vmin.f32 %v3995, %v3996
        %v3998 = vrot.slane %v3997, 1
        %v3999 = vmin.f32 %v3997, %v3998
        %vm4104 = vcmask 1041409
        %v4105 = vsel %vm4104, %v2145, %v2136
        %vm4106 = vcmask 1042434
        %v4107 = vsel %vm4106, %v2154, %v4105
        %vm4108 = vcmask 1043459
        %v4109 = vsel %vm4108, %v2163, %v4107
        %vm4110 = vcmask 1044484
        %v4111 = vsel %vm4110, %v2172, %v4109
        %vm4112 = vcmask 1045509
        %v4113 = vsel %vm4112, %v2181, %v4111
        %vm4114 = vcmask 1046534
        %v4115 = vsel %vm4114, %v2190, %v4113
        %vm4116 = vcmask 1047559
        %v4117 = vsel %vm4116, %v2199, %v4115
        %v4118 = vsel %vm4104, %v2217, %v2208
        %v4119 = vsel %vm4106, %v2226, %v4118
        %v4120 = vsel %vm4108, %v2235, %v4119
        %v4121 = vsel %vm4110, %v2244, %v4120
        %v4122 = vsel %vm4112, %v2253, %v4121
        %v4123 = vsel %vm4114, %v2262, %v4122
        %v4124 = vsel %vm4116, %v2271, %v4123
        %v4125 = vsel %vm4104, %v2289, %v2280
        %v4126 = vsel %vm4106, %v2298, %v4125
        %v4127 = vsel %vm4108, %v2307, %v4126
        %v4128 = vsel %vm4110, %v2316, %v4127
        %v4129 = vsel %vm4112, %v2325, %v4128
        %v4130 = vsel %vm4114, %v2334, %v4129
        %v4131 = vsel %vm4116, %v2343, %v4130
        %v4132 = vsel %vm4104, %v2361, %v2352
        %v4133 = vsel %vm4106, %v2370, %v4132
        %v4134 = vsel %vm4108, %v2379, %v4133
        %v4135 = vsel %vm4110, %v2388, %v4134
        %v4136 = vsel %vm4112, %v2397, %v4135
        %v4137 = vsel %vm4114, %v2406, %v4136
        %v4138 = vsel %vm4116, %v2415, %v4137
        %v4139 = vsel %vm4104, %v2433, %v2424
        %v4140 = vsel %vm4106, %v2442, %v4139
        %v4141 = vsel %vm4108, %v2451, %v4140
        %v4142 = vsel %vm4110, %v2460, %v4141
        %v4143 = vsel %vm4112, %v2469, %v4142
        %v4144 = vsel %vm4114, %v2478, %v4143
        %v4145 = vsel %vm4116, %v2487, %v4144
        %v4146 = vsel %vm4104, %v2505, %v2496
        %v4147 = vsel %vm4106, %v2514, %v4146
        %v4148 = vsel %vm4108, %v2523, %v4147
        %v4149 = vsel %vm4110, %v2532, %v4148
        %v4150 = vsel %vm4112, %v2541, %v4149
        %v4151 = vsel %vm4114, %v2550, %v4150
        %v4152 = vsel %vm4116, %v2559, %v4151
        %v4153 = vsel %vm4104, %v2577, %v2568
        %v4154 = vsel %vm4106, %v2586, %v4153
        %v4155 = vsel %vm4108, %v2595, %v4154
        %v4156 = vsel %vm4110, %v2604, %v4155
        %v4157 = vsel %vm4112, %v2613, %v4156
        %v4158 = vsel %vm4114, %v2622, %v4157
        %v4159 = vsel %vm4116, %v2631, %v4158
        %v4160 = vsel %vm4104, %v2649, %v2640
        %v4161 = vsel %vm4106, %v2658, %v4160
        %v4162 = vsel %vm4108, %v2667, %v4161
        %v4163 = vsel %vm4110, %v2676, %v4162
        %v4164 = vsel %vm4112, %v2685, %v4163
        %v4165 = vsel %vm4114, %v2694, %v4164
        %v4166 = vsel %vm4116, %v2703, %v4165
        %v4167 = vsel %vm4104, %v2721, %v2712
        %v4168 = vsel %vm4106, %v2730, %v4167
        %v4169 = vsel %vm4108, %v2739, %v4168
        %v4170 = vsel %vm4110, %v2748, %v4169
        %v4171 = vsel %vm4112, %v2757, %v4170
        %v4172 = vsel %vm4114, %v2766, %v4171
        %v4173 = vsel %vm4116, %v2775, %v4172
        %v4174 = vsel %vm4104, %v2793, %v2784
        %v4175 = vsel %vm4106, %v2802, %v4174
        %v4176 = vsel %vm4108, %v2811, %v4175
        %v4177 = vsel %vm4110, %v2820, %v4176
        %v4178 = vsel %vm4112, %v2829, %v4177
        %v4179 = vsel %vm4114, %v2838, %v4178
        %v4180 = vsel %vm4116, %v2847, %v4179
        %v4181 = vsel %vm4104, %v2865, %v2856
        %v4182 = vsel %vm4106, %v2874, %v4181
        %v4183 = vsel %vm4108, %v2883, %v4182
        %v4184 = vsel %vm4110, %v2892, %v4183
        %v4185 = vsel %vm4112, %v2901, %v4184
        %v4186 = vsel %vm4114, %v2910, %v4185
        %v4187 = vsel %vm4116, %v2919, %v4186
        %v4188 = vsel %vm4104, %v2937, %v2928
        %v4189 = vsel %vm4106, %v2946, %v4188
        %v4190 = vsel %vm4108, %v2955, %v4189
        %v4191 = vsel %vm4110, %v2964, %v4190
        %v4192 = vsel %vm4112, %v2973, %v4191
        %v4193 = vsel %vm4114, %v2982, %v4192
        %v4194 = vsel %vm4116, %v2991, %v4193
        %v4195 = vsel %vm4104, %v3009, %v3000
        %v4196 = vsel %vm4106, %v3018, %v4195
        %v4197 = vsel %vm4108, %v3027, %v4196
        %v4198 = vsel %vm4110, %v3036, %v4197
        %v4199 = vsel %vm4112, %v3045, %v4198
        %v4200 = vsel %vm4114, %v3054, %v4199
        %v4201 = vsel %vm4116, %v3063, %v4200
        %v4319 = vsel %vm4104, %v3081, %v3072
        %v4320 = vsel %vm4106, %v3090, %v4319
        %v4321 = vsel %vm4108, %v3099, %v4320
        %v4322 = vsel %vm4110, %v3108, %v4321
        %v4323 = vsel %vm4112, %v3117, %v4322
        %v4324 = vsel %vm4114, %v3126, %v4323
        %v4325 = vsel %vm4116, %v3135, %v4324
        %v4326 = vsel %vm4104, %v3153, %v3144
        %v4327 = vsel %vm4106, %v3162, %v4326
        %v4328 = vsel %vm4108, %v3171, %v4327
        %v4329 = vsel %vm4110, %v3180, %v4328
        %v4330 = vsel %vm4112, %v3189, %v4329
        %v4331 = vsel %vm4114, %v3198, %v4330
        %v4332 = vsel %vm4116, %v3207, %v4331
        %v4333 = vsel %vm4104, %v3225, %v3216
        %v4334 = vsel %vm4106, %v3234, %v4333
        %v4335 = vsel %vm4108, %v3243, %v4334
        %v4336 = vsel %vm4110, %v3252, %v4335
        %v4337 = vsel %vm4112, %v3261, %v4336
        %v4338 = vsel %vm4114, %v3270, %v4337
        %v4339 = vsel %vm4116, %v3279, %v4338
        %v4340 = vsel %vm4104, %v3297, %v3288
        %v4341 = vsel %vm4106, %v3306, %v4340
        %v4342 = vsel %vm4108, %v3315, %v4341
        %v4343 = vsel %vm4110, %v3324, %v4342
        %v4344 = vsel %vm4112, %v3333, %v4343
        %v4345 = vsel %vm4114, %v3342, %v4344
        %v4346 = vsel %vm4116, %v3351, %v4345
        %v4347 = vsel %vm4104, %v3369, %v3360
        %v4348 = vsel %vm4106, %v3378, %v4347
        %v4349 = vsel %vm4108, %v3387, %v4348
        %v4350 = vsel %vm4110, %v3396, %v4349
        %v4351 = vsel %vm4112, %v3405, %v4350
        %v4352 = vsel %vm4114, %v3414, %v4351
        %v4353 = vsel %vm4116, %v3423, %v4352
        %v4354 = vsel %vm4104, %v3441, %v3432
        %v4355 = vsel %vm4106, %v3450, %v4354
        %v4356 = vsel %vm4108, %v3459, %v4355
        %v4357 = vsel %vm4110, %v3468, %v4356
        %v4358 = vsel %vm4112, %v3477, %v4357
        %v4359 = vsel %vm4114, %v3486, %v4358
        %v4360 = vsel %vm4116, %v3495, %v4359
        %v4361 = vsel %vm4104, %v3513, %v3504
        %v4362 = vsel %vm4106, %v3522, %v4361
        %v4363 = vsel %vm4108, %v3531, %v4362
        %v4364 = vsel %vm4110, %v3540, %v4363
        %v4365 = vsel %vm4112, %v3549, %v4364
        %v4366 = vsel %vm4114, %v3558, %v4365
        %v4367 = vsel %vm4116, %v3567, %v4366
        %v4368 = vsel %vm4104, %v3585, %v3576
        %v4369 = vsel %vm4106, %v3594, %v4368
        %v4370 = vsel %vm4108, %v3603, %v4369
        %v4371 = vsel %vm4110, %v3612, %v4370
        %v4372 = vsel %vm4112, %v3621, %v4371
        %v4373 = vsel %vm4114, %v3630, %v4372
        %v4374 = vsel %vm4116, %v3639, %v4373
        %v4375 = vsel %vm4104, %v3657, %v3648
        %v4376 = vsel %vm4106, %v3666, %v4375
        %v4377 = vsel %vm4108, %v3675, %v4376
        %v4378 = vsel %vm4110, %v3684, %v4377
        %v4379 = vsel %vm4112, %v3693, %v4378
        %v4380 = vsel %vm4114, %v3702, %v4379
        %v4381 = vsel %vm4116, %v3711, %v4380
        %v4382 = vsel %vm4104, %v3729, %v3720
        %v4383 = vsel %vm4106, %v3738, %v4382
        %v4384 = vsel %vm4108, %v3747, %v4383
        %v4385 = vsel %vm4110, %v3756, %v4384
        %v4386 = vsel %vm4112, %v3765, %v4385
        %v4387 = vsel %vm4114, %v3774, %v4386
        %v4388 = vsel %vm4116, %v3783, %v4387
        %v4389 = vsel %vm4104, %v3801, %v3792
        %v4390 = vsel %vm4106, %v3810, %v4389
        %v4391 = vsel %vm4108, %v3819, %v4390
        %v4392 = vsel %vm4110, %v3828, %v4391
        %v4393 = vsel %vm4112, %v3837, %v4392
        %v4394 = vsel %vm4114, %v3846, %v4393
        %v4395 = vsel %vm4116, %v3855, %v4394
        %v4396 = vsel %vm4104, %v3873, %v3864
        %v4397 = vsel %vm4106, %v3882, %v4396
        %v4398 = vsel %vm4108, %v3891, %v4397
        %v4399 = vsel %vm4110, %v3900, %v4398
        %v4400 = vsel %vm4112, %v3909, %v4399
        %v4401 = vsel %vm4114, %v3918, %v4400
        %v4402 = vsel %vm4116, %v3927, %v4401
        %v4403 = vsel %vm4104, %v3945, %v3936
        %v4404 = vsel %vm4106, %v3954, %v4403
        %v4405 = vsel %vm4108, %v3963, %v4404
        %v4406 = vsel %vm4110, %v3972, %v4405
        %v4407 = vsel %vm4112, %v3981, %v4406
        %v4408 = vsel %vm4114, %v3990, %v4407
        %v4409 = vsel %vm4116, %v3999, %v4408
        %4410 = vrot.lane.b32.xlu0 %v4325, 64
        %v4411 = vpop.permute.xlu0 %4410
        %4412 = vrot.lane.b32.xlu0 %v4332, 64
        %v4413 = vpop.permute.xlu0 %4412
        %4414 = vrot.lane.b32.xlu0 %v4339, 64
        %v4415 = vpop.permute.xlu0 %4414
        %4416 = vrot.lane.b32.xlu0 %v4346, 64
        %v4417 = vpop.permute.xlu0 %4416
        %4418 = vrot.lane.b32.xlu0 %v4353, 64
        %v4419 = vpop.permute.xlu0 %4418
        %4420 = vrot.lane.b32.xlu0 %v4360, 64
        %v4421 = vpop.permute.xlu0 %4420
        %4422 = vrot.lane.b32.xlu0 %v4367, 64
        %v4423 = vpop.permute.xlu0 %4422
        %4424 = vrot.lane.b32.xlu0 %v4374, 64
        %v4425 = vpop.permute.xlu0 %4424
        %4426 = vrot.lane.b32.xlu0 %v4381, 64
        %v4427 = vpop.permute.xlu0 %4426
        %4428 = vrot.lane.b32.xlu0 %v4388, 64
        %v4429 = vpop.permute.xlu0 %4428
        %4430 = vrot.lane.b32.xlu0 %v4395, 64
        %v4431 = vpop.permute.xlu0 %4430
        %4432 = vrot.lane.b32.xlu0 %v4402, 64
        %v4433 = vpop.permute.xlu0 %4432
        %4434 = vrot.lane.b32.xlu0 %v4409, 64
        %v4435 = vpop.permute.xlu0 %4434
        %v4449 = vsel %vm2127, %v4117, %v4411
        %v4450 = vsel %vm2127, %v4124, %v4413
        %v4451 = vsel %vm2127, %v4131, %v4415
        %v4452 = vsel %vm2127, %v4138, %v4417
        %v4453 = vsel %vm2127, %v4145, %v4419
        %v4454 = vsel %vm2127, %v4152, %v4421
        %v4455 = vsel %vm2127, %v4159, %v4423
        %v4456 = vsel %vm2127, %v4166, %v4425
        %v4457 = vsel %vm2127, %v4173, %v4427
        %v4458 = vsel %vm2127, %v4180, %v4429
        %v4459 = vsel %vm2127, %v4187, %v4431
        %v4460 = vsel %vm2127, %v4194, %v4433
        %v4461 = vsel %vm2127, %v4201, %v4435
        %4462 = vst [vmem:[%s170] sm:$0xff] %v4449
        %4463 = vst [vmem:[%s170 + $0x8] sm:$0xff] %v4450
        %4464 = vst [vmem:[%s170 + $0x10] sm:$0xff] %v4451
        %4465 = vst [vmem:[%s170 + $0x18] sm:$0xff] %v4452
        %4466 = vst [vmem:[%s170 + $0x20] sm:$0xff] %v4453
        %4467 = vst [vmem:[%s170 + $0x28] sm:$0xff] %v4454
        %4468 = vst [vmem:[%s170 + $0x30] sm:$0xff] %v4455
        %4469 = vst [vmem:[%s170 + $0x38] sm:$0xff] %v4456
        %4470 = vst [vmem:[%s170 + $0x40] sm:$0xff] %v4457
        %4471 = vst [vmem:[%s170 + $0x48] sm:$0xff] %v4458
        %4472 = vst [vmem:[%s170 + $0x50] sm:$0xff] %v4459
        %4473 = vst [vmem:[%s170 + $0x58] sm:$0xff] %v4460
        %4474 = vst [vmem:[%s170 + $0x60] sm:$0xff] %v4461
        %v4475 = vsel %vm2127, %v1089, 0.0
        %v4476 = vsel %vm2127, %v1094, 0.0
        %v4477 = vadd.f32 %v4475, %v4476
        %v4478 = vsel %vm2127, %v1099, 0.0
        %v4479 = vadd.f32 %v4477, %v4478
        %v4480 = vsel %vm2127, %v1104, 0.0
        %v4481 = vadd.f32 %v4479, %v4480
        %v4482 = vsel %vm2127, %v1109, 0.0
        %v4483 = vadd.f32 %v4481, %v4482
        %v4484 = vsel %vm2127, %v1114, 0.0
        %v4485 = vadd.f32 %v4483, %v4484
        %v4486 = vsel %vm2127, %v1119, 0.0
        %v4487 = vadd.f32 %v4485, %v4486
        %v4488 = vsel %vm2127, %v1124, 0.0
        %v4489 = vadd.f32 %v4487, %v4488
        %v4490 = vsel %vm2127, %v1129, 0.0
        %v4491 = vadd.f32 %v4489, %v4490
        %v4492 = vsel %vm2127, %v1134, 0.0
        %v4493 = vadd.f32 %v4491, %v4492
        %v4494 = vsel %vm2127, %v1139, 0.0
        %v4495 = vadd.f32 %v4493, %v4494
        %v4496 = vsel %vm2127, %v1144, 0.0
        %v4497 = vadd.f32 %v4495, %v4496
        %v4498 = vsel %vm2127, %v1149, 0.0
        %v4499 = vadd.f32 %v4497, %v4498
        %v4500 = vsel %vm2127, %v1154, 0.0
        %v4501 = vadd.f32 %v4499, %v4500
        %v4502 = vsel %vm2127, %v1159, 0.0
        %v4503 = vadd.f32 %v4501, %v4502
        %v4504 = vsel %vm2127, %v1164, 0.0
        %v4505 = vadd.f32 %v4503, %v4504
        %v4506 = vsel %vm2127, %v1169, 0.0
        %v4507 = vadd.f32 %v4505, %v4506
        %v4508 = vsel %vm2127, %v1174, 0.0
        %v4509 = vadd.f32 %v4507, %v4508
        %v4510 = vsel %vm2127, %v1179, 0.0
        %v4511 = vadd.f32 %v4509, %v4510
        %v4512 = vsel %vm2127, %v1184, 0.0
        %v4513 = vadd.f32 %v4511, %v4512
        %v4514 = vsel %vm2127, %v1189, 0.0
        %v4515 = vadd.f32 %v4513, %v4514
        %v4516 = vsel %vm2127, %v1194, 0.0
        %v4517 = vadd.f32 %v4515, %v4516
        %v4518 = vsel %vm2127, %v1199, 0.0
        %v4519 = vadd.f32 %v4517, %v4518
        %v4520 = vsel %vm2127, %v1204, 0.0
        %v4521 = vadd.f32 %v4519, %v4520
        %v4522 = vsel %vm2127, %v1209, 0.0
        %v4523 = vadd.f32 %v4521, %v4522
        %v4524 = vsel %vm2127, %v1214, 0.0
        %v4525 = vadd.f32 %v4523, %v4524
        %v4526 = vsel %vm2127, %v1219, 0.0
        %v4527 = vadd.f32 %v4525, %v4526
        %v4528 = vsel %vm2127, %v1224, 0.0
        %v4529 = vadd.f32 %v4527, %v4528
        %v4530 = vsel %vm2127, %v1229, 0.0
        %v4531 = vadd.f32 %v4529, %v4530
        %v4532 = vsel %vm2127, %v1234, 0.0
        %v4533 = vadd.f32 %v4531, %v4532
        %v4534 = vsel %vm2127, %v1239, 0.0
        %v4535 = vadd.f32 %v4533, %v4534
        %v4536 = vsel %vm2127, %v1244, 0.0
        %v4537 = vadd.f32 %v4535, %v4536
        %v4538 = vsel %vm2127, %v1249, 0.0
        %v4539 = vadd.f32 %v4537, %v4538
        %v4540 = vsel %vm2127, %v1254, 0.0
        %v4541 = vadd.f32 %v4539, %v4540
        %v4542 = vsel %vm2127, %v1259, 0.0
        %v4543 = vadd.f32 %v4541, %v4542
        %v4544 = vsel %vm2127, %v1264, 0.0
        %v4545 = vadd.f32 %v4543, %v4544
        %v4546 = vsel %vm2127, %v1269, 0.0
        %v4547 = vadd.f32 %v4545, %v4546
        %v4548 = vsel %vm2127, %v1274, 0.0
        %v4549 = vadd.f32 %v4547, %v4548
        %v4550 = vsel %vm2127, %v1279, 0.0
        %v4551 = vadd.f32 %v4549, %v4550
        %v4552 = vsel %vm2127, %v1284, 0.0
        %v4553 = vadd.f32 %v4551, %v4552
        %v4554 = vsel %vm2127, %v1289, 0.0
        %v4555 = vadd.f32 %v4553, %v4554
        %v4556 = vsel %vm2127, %v1294, 0.0
        %v4557 = vadd.f32 %v4555, %v4556
        %v4558 = vsel %vm2127, %v1299, 0.0
        %v4559 = vadd.f32 %v4557, %v4558
        %v4560 = vsel %vm2127, %v1304, 0.0
        %v4561 = vadd.f32 %v4559, %v4560
        %v4562 = vsel %vm2127, %v1309, 0.0
        %v4563 = vadd.f32 %v4561, %v4562
        %v4564 = vsel %vm2127, %v1314, 0.0
        %v4565 = vadd.f32 %v4563, %v4564
        %v4566 = vsel %vm2127, %v1319, 0.0
        %v4567 = vadd.f32 %v4565, %v4566
        %v4568 = vsel %vm2127, %v1324, 0.0
        %v4569 = vadd.f32 %v4567, %v4568
        %v4570 = vsel %vm2127, %v1329, 0.0
        %v4571 = vadd.f32 %v4569, %v4570
        %v4572 = vsel %vm2127, %v1334, 0.0
        %v4573 = vadd.f32 %v4571, %v4572
        %v4574 = vsel %vm2127, %v1339, 0.0
        %v4575 = vadd.f32 %v4573, %v4574
        %v4576 = vsel %vm2127, %v1344, 0.0
        %v4577 = vadd.f32 %v4575, %v4576
        %v4578 = vsel %vm2127, %v1349, 0.0
        %v4579 = vadd.f32 %v4577, %v4578
        %v4580 = vsel %vm2127, %v1354, 0.0
        %v4581 = vadd.f32 %v4579, %v4580
        %v4582 = vsel %vm2127, %v1359, 0.0
        %v4583 = vadd.f32 %v4581, %v4582
        %v4584 = vsel %vm2127, %v1364, 0.0
        %v4585 = vadd.f32 %v4583, %v4584
        %v4586 = vsel %vm2127, %v1369, 0.0
        %v4587 = vadd.f32 %v4585, %v4586
        %v4588 = vsel %vm2127, %v1374, 0.0
        %v4589 = vadd.f32 %v4587, %v4588
        %v4590 = vsel %vm2127, %v1379, 0.0
        %v4591 = vadd.f32 %v4589, %v4590
        %v4592 = vsel %vm2127, %v1384, 0.0
        %v4593 = vadd.f32 %v4591, %v4592
        %v4594 = vsel %vm2127, %v1389, 0.0
        %v4595 = vadd.f32 %v4593, %v4594
        %v4596 = vsel %vm2127, %v1394, 0.0
        %v4597 = vadd.f32 %v4595, %v4596
        %v4598 = vsel %vm2127, %v1399, 0.0
        %v4599 = vadd.f32 %v4597, %v4598
        %v4600 = vsel %vm2127, %v1404, 0.0
        %v4601 = vadd.f32 %v4599, %v4600
        %v4602 = vsel %vm2127, %v1409, 0.0
        %v4603 = vadd.f32 %v4601, %v4602
        %v4604 = vsel %vm2127, %v1414, 0.0
        %v4605 = vadd.f32 %v4603, %v4604
        %v4606 = vsel %vm2127, %v1419, 0.0
        %v4607 = vadd.f32 %v4605, %v4606
        %v4608 = vsel %vm2127, %v1424, 0.0
        %v4609 = vadd.f32 %v4607, %v4608
        %v4610 = vsel %vm2127, %v1429, 0.0
        %v4611 = vadd.f32 %v4609, %v4610
        %v4612 = vsel %vm2127, %v1434, 0.0
        %v4613 = vadd.f32 %v4611, %v4612
        %v4614 = vsel %vm2127, %v1439, 0.0
        %v4615 = vadd.f32 %v4613, %v4614
        %v4616 = vsel %vm2127, %v1444, 0.0
        %v4617 = vadd.f32 %v4615, %v4616
        %v4618 = vsel %vm2127, %v1449, 0.0
        %v4619 = vadd.f32 %v4617, %v4618
        %v4620 = vsel %vm2127, %v1454, 0.0
        %v4621 = vadd.f32 %v4619, %v4620
        %v4622 = vsel %vm2127, %v1459, 0.0
        %v4623 = vadd.f32 %v4621, %v4622
        %v4624 = vsel %vm2127, %v1464, 0.0
        %v4625 = vadd.f32 %v4623, %v4624
        %v4626 = vsel %vm2127, %v1469, 0.0
        %v4627 = vadd.f32 %v4625, %v4626
        %v4628 = vsel %vm2127, %v1474, 0.0
        %v4629 = vadd.f32 %v4627, %v4628
        %v4630 = vsel %vm2127, %v1479, 0.0
        %v4631 = vadd.f32 %v4629, %v4630
        %v4632 = vsel %vm2127, %v1484, 0.0
        %v4633 = vadd.f32 %v4631, %v4632
        %v4634 = vsel %vm2127, %v1489, 0.0
        %v4635 = vadd.f32 %v4633, %v4634
        %v4636 = vsel %vm2127, %v1494, 0.0
        %v4637 = vadd.f32 %v4635, %v4636
        %v4638 = vsel %vm2127, %v1499, 0.0
        %v4639 = vadd.f32 %v4637, %v4638
        %v4640 = vsel %vm2127, %v1504, 0.0
        %v4641 = vadd.f32 %v4639, %v4640
        %v4642 = vsel %vm2127, %v1509, 0.0
        %v4643 = vadd.f32 %v4641, %v4642
        %v4644 = vsel %vm2127, %v1514, 0.0
        %v4645 = vadd.f32 %v4643, %v4644
        %v4646 = vsel %vm2127, %v1519, 0.0
        %v4647 = vadd.f32 %v4645, %v4646
        %v4648 = vsel %vm2127, %v1524, 0.0
        %v4649 = vadd.f32 %v4647, %v4648
        %v4650 = vsel %vm2127, %v1529, 0.0
        %v4651 = vadd.f32 %v4649, %v4650
        %v4652 = vsel %vm2127, %v1534, 0.0
        %v4653 = vadd.f32 %v4651, %v4652
        %v4654 = vsel %vm2127, %v1539, 0.0
        %v4655 = vadd.f32 %v4653, %v4654
        %v4656 = vsel %vm2127, %v1544, 0.0
        %v4657 = vadd.f32 %v4655, %v4656
        %v4658 = vsel %vm2127, %v1549, 0.0
        %v4659 = vadd.f32 %v4657, %v4658
        %v4660 = vsel %vm2127, %v1554, 0.0
        %v4661 = vadd.f32 %v4659, %v4660
        %v4662 = vsel %vm2127, %v1559, 0.0
        %v4663 = vadd.f32 %v4661, %v4662
        %v4664 = vsel %vm2127, %v1564, 0.0
        %v4665 = vadd.f32 %v4663, %v4664
        %v4666 = vsel %vm2127, %v1569, 0.0
        %v4667 = vadd.f32 %v4665, %v4666
        %v4668 = vsel %vm2127, %v1574, 0.0
        %v4669 = vadd.f32 %v4667, %v4668
        %v4670 = vsel %vm2127, %v1579, 0.0
        %v4671 = vadd.f32 %v4669, %v4670
        %v4672 = vsel %vm2127, %v1584, 0.0
        %v4673 = vadd.f32 %v4671, %v4672
        %v4674 = vsel %vm2127, %v1589, 0.0
        %v4675 = vadd.f32 %v4673, %v4674
        %v4676 = vsel %vm2127, %v1594, 0.0
        %v4677 = vadd.f32 %v4675, %v4676
        %v4678 = vsel %vm2127, %v1599, 0.0
        %v4679 = vadd.f32 %v4677, %v4678
        %v4680 = vsel %vm2127, %v1604, 0.0
        %v4681 = vadd.f32 %v4679, %v4680
        %v4682 = vsel %vm2127, %v1609, 0.0
        %v4683 = vadd.f32 %v4681, %v4682
        %v4684 = vsel %vm2127, %v1614, 0.0
        %v4685 = vadd.f32 %v4683, %v4684
        %v4686 = vsel %vm2127, %v1619, 0.0
        %v4687 = vadd.f32 %v4685, %v4686
        %v4688 = vsel %vm2127, %v1624, 0.0
        %v4689 = vadd.f32 %v4687, %v4688
        %v4690 = vsel %vm2127, %v1629, 0.0
        %v4691 = vadd.f32 %v4689, %v4690
        %v4692 = vsel %vm2127, %v1634, 0.0
        %v4693 = vadd.f32 %v4691, %v4692
        %v4694 = vsel %vm2127, %v1639, 0.0
        %v4695 = vadd.f32 %v4693, %v4694
        %v4696 = vsel %vm2127, %v1644, 0.0
        %v4697 = vadd.f32 %v4695, %v4696
        %v4698 = vsel %vm2127, %v1649, 0.0
        %v4699 = vadd.f32 %v4697, %v4698
        %v4700 = vsel %vm2127, %v1654, 0.0
        %v4701 = vadd.f32 %v4699, %v4700
        %v4702 = vsel %vm2127, %v1659, 0.0
        %v4703 = vadd.f32 %v4701, %v4702
        %v4704 = vsel %vm2127, %v1664, 0.0
        %v4705 = vadd.f32 %v4703, %v4704
        %v4706 = vsel %vm2127, %v1669, 0.0
        %v4707 = vadd.f32 %v4705, %v4706
        %v4708 = vsel %vm2127, %v1674, 0.0
        %v4709 = vadd.f32 %v4707, %v4708
        %v4710 = vsel %vm2127, %v1679, 0.0
        %v4711 = vadd.f32 %v4709, %v4710
        %v4712 = vsel %vm2127, %v1684, 0.0
        %v4713 = vadd.f32 %v4711, %v4712
        %v4714 = vsel %vm2127, %v1689, 0.0
        %v4715 = vadd.f32 %v4713, %v4714
        %v4716 = vsel %vm2127, %v1694, 0.0
        %v4717 = vadd.f32 %v4715, %v4716
        %v4718 = vsel %vm2127, %v1699, 0.0
        %v4719 = vadd.f32 %v4717, %v4718
        %v4720 = vsel %vm2127, %v1704, 0.0
        %v4721 = vadd.f32 %v4719, %v4720
        %v4722 = vsel %vm2127, %v1709, 0.0
        %v4723 = vadd.f32 %v4721, %v4722
        %v4724 = vsel %vm2127, %v1714, 0.0
        %v4725 = vadd.f32 %v4723, %v4724
        %v4726 = vsel %vm2127, %v1719, 0.0
        %v4727 = vadd.f32 %v4725, %v4726
        %v4728 = vsel %vm2127, %v1724, 0.0
        %v4729 = vadd.f32 %v4727, %v4728
        %v4730 = vsel %vm2127, %v1729, 0.0
        %v4731 = vadd.f32 %v4729, %v4730
        %v4732 = vsel %vm2127, %v1734, 0.0
        %v4733 = vadd.f32 %v4731, %v4732
        %v4734 = vsel %vm2127, %v1739, 0.0
        %v4735 = vadd.f32 %v4733, %v4734
        %v4736 = vsel %vm2127, %v1744, 0.0
        %v4737 = vadd.f32 %v4735, %v4736
        %v4738 = vsel %vm2127, %v1749, 0.0
        %v4739 = vadd.f32 %v4737, %v4738
        %v4740 = vsel %vm2127, %v1754, 0.0
        %v4741 = vadd.f32 %v4739, %v4740
        %v4742 = vsel %vm2127, %v1759, 0.0
        %v4743 = vadd.f32 %v4741, %v4742
        %v4744 = vsel %vm2127, %v1764, 0.0
        %v4745 = vadd.f32 %v4743, %v4744
        %v4746 = vsel %vm2127, %v1769, 0.0
        %v4747 = vadd.f32 %v4745, %v4746
        %v4748 = vsel %vm2127, %v1774, 0.0
        %v4749 = vadd.f32 %v4747, %v4748
        %v4750 = vsel %vm2127, %v1779, 0.0
        %v4751 = vadd.f32 %v4749, %v4750
        %v4752 = vsel %vm2127, %v1784, 0.0
        %v4753 = vadd.f32 %v4751, %v4752
        %v4754 = vsel %vm2127, %v1789, 0.0
        %v4755 = vadd.f32 %v4753, %v4754
        %v4756 = vsel %vm2127, %v1794, 0.0
        %v4757 = vadd.f32 %v4755, %v4756
        %v4758 = vsel %vm2127, %v1799, 0.0
        %v4759 = vadd.f32 %v4757, %v4758
        %v4760 = vsel %vm2127, %v1804, 0.0
        %v4761 = vadd.f32 %v4759, %v4760
        %v4762 = vsel %vm2127, %v1809, 0.0
        %v4763 = vadd.f32 %v4761, %v4762
        %v4764 = vsel %vm2127, %v1814, 0.0
        %v4765 = vadd.f32 %v4763, %v4764
        %v4766 = vsel %vm2127, %v1819, 0.0
        %v4767 = vadd.f32 %v4765, %v4766
        %v4768 = vsel %vm2127, %v1824, 0.0
        %v4769 = vadd.f32 %v4767, %v4768
        %v4770 = vsel %vm2127, %v1829, 0.0
        %v4771 = vadd.f32 %v4769, %v4770
        %v4772 = vsel %vm2127, %v1834, 0.0
        %v4773 = vadd.f32 %v4771, %v4772
        %v4774 = vsel %vm2127, %v1839, 0.0
        %v4775 = vadd.f32 %v4773, %v4774
        %v4776 = vsel %vm2127, %v1844, 0.0
        %v4777 = vadd.f32 %v4775, %v4776
        %v4778 = vsel %vm2127, %v1849, 0.0
        %v4779 = vadd.f32 %v4777, %v4778
        %v4780 = vsel %vm2127, %v1854, 0.0
        %v4781 = vadd.f32 %v4779, %v4780
        %v4782 = vsel %vm2127, %v1859, 0.0
        %v4783 = vadd.f32 %v4781, %v4782
        %v4784 = vsel %vm2127, %v1864, 0.0
        %v4785 = vadd.f32 %v4783, %v4784
        %v4786 = vsel %vm2127, %v1869, 0.0
        %v4787 = vadd.f32 %v4785, %v4786
        %v4788 = vsel %vm2127, %v1874, 0.0
        %v4789 = vadd.f32 %v4787, %v4788
        %v4790 = vsel %vm2127, %v1879, 0.0
        %v4791 = vadd.f32 %v4789, %v4790
        %v4792 = vsel %vm2127, %v1884, 0.0
        %v4793 = vadd.f32 %v4791, %v4792
        %v4794 = vsel %vm2127, %v1889, 0.0
        %v4795 = vadd.f32 %v4793, %v4794
        %v4796 = vsel %vm2127, %v1894, 0.0
        %v4797 = vadd.f32 %v4795, %v4796
        %v4798 = vsel %vm2127, %v1899, 0.0
        %v4799 = vadd.f32 %v4797, %v4798
        %v4800 = vsel %vm2127, %v1904, 0.0
        %v4801 = vadd.f32 %v4799, %v4800
        %v4802 = vsel %vm2127, %v1909, 0.0
        %v4803 = vadd.f32 %v4801, %v4802
        %v4804 = vsel %vm2127, %v1914, 0.0
        %v4805 = vadd.f32 %v4803, %v4804
        %v4806 = vsel %vm2127, %v1919, 0.0
        %v4807 = vadd.f32 %v4805, %v4806
        %v4808 = vsel %vm2127, %v1924, 0.0
        %v4809 = vadd.f32 %v4807, %v4808
        %v4810 = vsel %vm2127, %v1929, 0.0
        %v4811 = vadd.f32 %v4809, %v4810
        %v4812 = vsel %vm2127, %v1934, 0.0
        %v4813 = vadd.f32 %v4811, %v4812
        %v4814 = vsel %vm2127, %v1939, 0.0
        %v4815 = vadd.f32 %v4813, %v4814
        %v4816 = vsel %vm2127, %v1944, 0.0
        %v4817 = vadd.f32 %v4815, %v4816
        %v4818 = vsel %vm2127, %v1949, 0.0
        %v4819 = vadd.f32 %v4817, %v4818
        %v4820 = vsel %vm2127, %v1954, 0.0
        %v4821 = vadd.f32 %v4819, %v4820
        %v4822 = vsel %vm2127, %v1959, 0.0
        %v4823 = vadd.f32 %v4821, %v4822
        %v4824 = vsel %vm2127, %v1964, 0.0
        %v4825 = vadd.f32 %v4823, %v4824
        %v4826 = vsel %vm2127, %v1969, 0.0
        %v4827 = vadd.f32 %v4825, %v4826
        %v4828 = vsel %vm2127, %v1974, 0.0
        %v4829 = vadd.f32 %v4827, %v4828
        %v4830 = vsel %vm2127, %v1979, 0.0
        %v4831 = vadd.f32 %v4829, %v4830
        %v4832 = vsel %vm2127, %v1984, 0.0
        %v4833 = vadd.f32 %v4831, %v4832
        %v4834 = vsel %vm2127, %v1989, 0.0
        %v4835 = vadd.f32 %v4833, %v4834
        %v4836 = vsel %vm2127, %v1994, 0.0
        %v4837 = vadd.f32 %v4835, %v4836
        %v4838 = vsel %vm2127, %v1999, 0.0
        %v4839 = vadd.f32 %v4837, %v4838
        %v4840 = vsel %vm2127, %v2004, 0.0
        %v4841 = vadd.f32 %v4839, %v4840
        %v4842 = vsel %vm2127, %v2009, 0.0
        %v4843 = vadd.f32 %v4841, %v4842
        %v4844 = vsel %vm2127, %v2014, 0.0
        %v4845 = vadd.f32 %v4843, %v4844
        %v4846 = vsel %vm2127, %v2019, 0.0
        %v4847 = vadd.f32 %v4845, %v4846
        %v4848 = vsel %vm2127, %v2024, 0.0
        %v4849 = vadd.f32 %v4847, %v4848
        %v4850 = vsel %vm2127, %v2029, 0.0
        %v4851 = vadd.f32 %v4849, %v4850
        %v4852 = vsel %vm2127, %v2034, 0.0
        %v4853 = vadd.f32 %v4851, %v4852
        %v4854 = vsel %vm2127, %v2039, 0.0
        %v4855 = vadd.f32 %v4853, %v4854
        %v4856 = vsel %vm2127, %v2044, 0.0
        %v4857 = vadd.f32 %v4855, %v4856
        %v4858 = vsel %vm2127, %v2049, 0.0
        %v4859 = vadd.f32 %v4857, %v4858
        %v4860 = vsel %vm2127, %v2054, 0.0
        %v4861 = vadd.f32 %v4859, %v4860
        %v4862 = vsel %vm2127, %v2059, 0.0
        %v4863 = vadd.f32 %v4861, %v4862
        %v4864 = vsel %vm2127, %v2064, 0.0
        %v4865 = vadd.f32 %v4863, %v4864
        %v4866 = vsel %vm2127, %v2069, 0.0
        %v4867 = vadd.f32 %v4865, %v4866
        %v4868 = vsel %vm2127, %v2074, 0.0
        %v4869 = vadd.f32 %v4867, %v4868
        %v4870 = vsel %vm2127, %v2079, 0.0
        %v4871 = vadd.f32 %v4869, %v4870
        %v4872 = vsel %vm2127, %v2084, 0.0
        %v4873 = vadd.f32 %v4871, %v4872
        %v4874 = vsel %vm2127, %v2089, 0.0
        %v4875 = vadd.f32 %v4873, %v4874
        %v4876 = vsel %vm2127, %v2094, 0.0
        %v4877 = vadd.f32 %v4875, %v4876
        %v4878 = vsel %vm2127, %v2099, 0.0
        %v4879 = vadd.f32 %v4877, %v4878
        %v4880 = vsel %vm2127, %v2104, 0.0
        %v4881 = vadd.f32 %v4879, %v4880
        %v4882 = vsel %vm2127, %v2109, 0.0
        %v4883 = vadd.f32 %v4881, %v4882
        %v4884 = vsel %vm2127, %v2114, 0.0
        %v4885 = vadd.f32 %v4883, %v4884
        %v4886 = vsel %vm2127, %v2119, 0.0
        %v4887 = vadd.f32 %v4885, %v4886
        %v4888 = vsel %vm2127, %v2124, 0.0
        %v4889 = vadd.f32 %v4887, %v4888
        %v4890 = vrot.slane %v4889, 4
        %v4891 = vadd.f32 %v4889, %v4890
        %v4892 = vrot.slane %v4891, 2
        %v4893 = vadd.f32 %v4891, %v4892
        %v4894 = vrot.slane %v4893, 1
        %v4895 = vadd.f32 %v4893, %v4894
        %v4896 = vmul.f32 %v1089, %v1089
        %v4897 = vmul.f32 %v1094, %v1094
        %v4898 = vmul.f32 %v1099, %v1099
        %v4899 = vmul.f32 %v1104, %v1104
        %v4900 = vmul.f32 %v1109, %v1109
        %v4901 = vmul.f32 %v1114, %v1114
        %v4902 = vmul.f32 %v1119, %v1119
        %v4903 = vmul.f32 %v1124, %v1124
        %v4904 = vmul.f32 %v1129, %v1129
        %v4905 = vmul.f32 %v1134, %v1134
        %v4906 = vmul.f32 %v1139, %v1139
        %v4907 = vmul.f32 %v1144, %v1144
        %v4908 = vmul.f32 %v1149, %v1149
        %v4909 = vmul.f32 %v1154, %v1154
        %v4910 = vmul.f32 %v1159, %v1159
        %v4911 = vmul.f32 %v1164, %v1164
        %v4912 = vmul.f32 %v1169, %v1169
        %v4913 = vmul.f32 %v1174, %v1174
        %v4914 = vmul.f32 %v1179, %v1179
        %v4915 = vmul.f32 %v1184, %v1184
        %v4916 = vmul.f32 %v1189, %v1189
        %v4917 = vmul.f32 %v1194, %v1194
        %v4918 = vmul.f32 %v1199, %v1199
        %v4919 = vmul.f32 %v1204, %v1204
        %v4920 = vmul.f32 %v1209, %v1209
        %v4921 = vmul.f32 %v1214, %v1214
        %v4922 = vmul.f32 %v1219, %v1219
        %v4923 = vmul.f32 %v1224, %v1224
        %v4924 = vmul.f32 %v1229, %v1229
        %v4925 = vmul.f32 %v1234, %v1234
        %v4926 = vmul.f32 %v1239, %v1239
        %v4927 = vmul.f32 %v1244, %v1244
        %v4928 = vmul.f32 %v1249, %v1249
        %v4929 = vmul.f32 %v1254, %v1254
        %v4930 = vmul.f32 %v1259, %v1259
        %v4931 = vmul.f32 %v1264, %v1264
        %v4932 = vmul.f32 %v1269, %v1269
        %v4933 = vmul.f32 %v1274, %v1274
        %v4934 = vmul.f32 %v1279, %v1279
        %v4935 = vmul.f32 %v1284, %v1284
        %v4936 = vmul.f32 %v1289, %v1289
        %v4937 = vmul.f32 %v1294, %v1294
        %v4938 = vmul.f32 %v1299, %v1299
        %v4939 = vmul.f32 %v1304, %v1304
        %v4940 = vmul.f32 %v1309, %v1309
        %v4941 = vmul.f32 %v1314, %v1314
        %v4942 = vmul.f32 %v1319, %v1319
        %v4943 = vmul.f32 %v1324, %v1324
        %v4944 = vmul.f32 %v1329, %v1329
        %v4945 = vmul.f32 %v1334, %v1334
        %v4946 = vmul.f32 %v1339, %v1339
        %v4947 = vmul.f32 %v1344, %v1344
        %v4948 = vmul.f32 %v1349, %v1349
        %v4949 = vmul.f32 %v1354, %v1354
        %v4950 = vmul.f32 %v1359, %v1359
        %v4951 = vmul.f32 %v1364, %v1364
        %v4952 = vmul.f32 %v1369, %v1369
        %v4953 = vmul.f32 %v1374, %v1374
        %v4954 = vmul.f32 %v1379, %v1379
        %v4955 = vmul.f32 %v1384, %v1384
        %v4956 = vmul.f32 %v1389, %v1389
        %v4957 = vmul.f32 %v1394, %v1394
        %v4958 = vmul.f32 %v1399, %v1399
        %v4959 = vmul.f32 %v1404, %v1404
        %v4960 = vmul.f32 %v1409, %v1409
        %v4961 = vmul.f32 %v1414, %v1414
        %v4962 = vmul.f32 %v1419, %v1419
        %v4963 = vmul.f32 %v1424, %v1424
        %v4964 = vmul.f32 %v1429, %v1429
        %v4965 = vmul.f32 %v1434, %v1434
        %v4966 = vmul.f32 %v1439, %v1439
        %v4967 = vmul.f32 %v1444, %v1444
        %v4968 = vmul.f32 %v1449, %v1449
        %v4969 = vmul.f32 %v1454, %v1454
        %v4970 = vmul.f32 %v1459, %v1459
        %v4971 = vmul.f32 %v1464, %v1464
        %v4972 = vmul.f32 %v1469, %v1469
        %v4973 = vmul.f32 %v1474, %v1474
        %v4974 = vmul.f32 %v1479, %v1479
        %v4975 = vmul.f32 %v1484, %v1484
        %v4976 = vmul.f32 %v1489, %v1489
        %v4977 = vmul.f32 %v1494, %v1494
        %v4978 = vmul.f32 %v1499, %v1499
        %v4979 = vmul.f32 %v1504, %v1504
        %v4980 = vmul.f32 %v1509, %v1509
        %v4981 = vmul.f32 %v1514, %v1514
        %v4982 = vmul.f32 %v1519, %v1519
        %v4983 = vmul.f32 %v1524, %v1524
        %v4984 = vmul.f32 %v1529, %v1529
        %v4985 = vmul.f32 %v1534, %v1534
        %v4986 = vmul.f32 %v1539, %v1539
        %v4987 = vmul.f32 %v1544, %v1544
        %v4988 = vmul.f32 %v1549, %v1549
        %v4989 = vmul.f32 %v1554, %v1554
        %v4990 = vmul.f32 %v1559, %v1559
        %v4991 = vmul.f32 %v1564, %v1564
        %v4992 = vmul.f32 %v1569, %v1569
        %v4993 = vmul.f32 %v1574, %v1574
        %v4994 = vmul.f32 %v1579, %v1579
        %v4995 = vmul.f32 %v1584, %v1584
        %v4996 = vmul.f32 %v1589, %v1589
        %v4997 = vmul.f32 %v1594, %v1594
        %v4998 = vmul.f32 %v1599, %v1599
        %v4999 = vmul.f32 %v1604, %v1604
        %v5000 = vmul.f32 %v1609, %v1609
        %v5001 = vmul.f32 %v1614, %v1614
        %v5002 = vmul.f32 %v1619, %v1619
        %v5003 = vmul.f32 %v1624, %v1624
        %v5004 = vmul.f32 %v1629, %v1629
        %v5005 = vmul.f32 %v1634, %v1634
        %v5006 = vmul.f32 %v1639, %v1639
        %v5007 = vmul.f32 %v1644, %v1644
        %v5008 = vmul.f32 %v1649, %v1649
        %v5009 = vmul.f32 %v1654, %v1654
        %v5010 = vmul.f32 %v1659, %v1659
        %v5011 = vmul.f32 %v1664, %v1664
        %v5012 = vmul.f32 %v1669, %v1669
        %v5013 = vmul.f32 %v1674, %v1674
        %v5014 = vmul.f32 %v1679, %v1679
        %v5015 = vmul.f32 %v1684, %v1684
        %v5016 = vmul.f32 %v1689, %v1689
        %v5017 = vmul.f32 %v1694, %v1694
        %v5018 = vmul.f32 %v1699, %v1699
        %v5019 = vmul.f32 %v1704, %v1704
        %v5020 = vmul.f32 %v1709, %v1709
        %v5021 = vmul.f32 %v1714, %v1714
        %v5022 = vmul.f32 %v1719, %v1719
        %v5023 = vmul.f32 %v1724, %v1724
        %v5024 = vmul.f32 %v1729, %v1729
        %v5025 = vmul.f32 %v1734, %v1734
        %v5026 = vmul.f32 %v1739, %v1739
        %v5027 = vmul.f32 %v1744, %v1744
        %v5028 = vmul.f32 %v1749, %v1749
        %v5029 = vmul.f32 %v1754, %v1754
        %v5030 = vmul.f32 %v1759, %v1759
        %v5031 = vmul.f32 %v1764, %v1764
        %v5032 = vmul.f32 %v1769, %v1769
        %v5033 = vmul.f32 %v1774, %v1774
        %v5034 = vmul.f32 %v1779, %v1779
        %v5035 = vmul.f32 %v1784, %v1784
        %v5036 = vmul.f32 %v1789, %v1789
        %v5037 = vmul.f32 %v1794, %v1794
        %v5038 = vmul.f32 %v1799, %v1799
        %v5039 = vmul.f32 %v1804, %v1804
        %v5040 = vmul.f32 %v1809, %v1809
        %v5041 = vmul.f32 %v1814, %v1814
        %v5042 = vmul.f32 %v1819, %v1819
        %v5043 = vmul.f32 %v1824, %v1824
        %v5044 = vmul.f32 %v1829, %v1829
        %v5045 = vmul.f32 %v1834, %v1834
        %v5046 = vmul.f32 %v1839, %v1839
        %v5047 = vmul.f32 %v1844, %v1844
        %v5048 = vmul.f32 %v1849, %v1849
        %v5049 = vmul.f32 %v1854, %v1854
        %v5050 = vmul.f32 %v1859, %v1859
        %v5051 = vmul.f32 %v1864, %v1864
        %v5052 = vmul.f32 %v1869, %v1869
        %v5053 = vmul.f32 %v1874, %v1874
        %v5054 = vmul.f32 %v1879, %v1879
        %v5055 = vmul.f32 %v1884, %v1884
        %v5056 = vmul.f32 %v1889, %v1889
        %v5057 = vmul.f32 %v1894, %v1894
        %v5058 = vmul.f32 %v1899, %v1899
        %v5059 = vmul.f32 %v1904, %v1904
        %v5060 = vmul.f32 %v1909, %v1909
        %v5061 = vmul.f32 %v1914, %v1914
        %v5062 = vmul.f32 %v1919, %v1919
        %v5063 = vmul.f32 %v1924, %v1924
        %v5064 = vmul.f32 %v1929, %v1929
        %v5065 = vmul.f32 %v1934, %v1934
        %v5066 = vmul.f32 %v1939, %v1939
        %v5067 = vmul.f32 %v1944, %v1944
        %v5068 = vmul.f32 %v1949, %v1949
        %v5069 = vmul.f32 %v1954, %v1954
        %v5070 = vmul.f32 %v1959, %v1959
        %v5071 = vmul.f32 %v1964, %v1964
        %v5072 = vmul.f32 %v1969, %v1969
        %v5073 = vmul.f32 %v1974, %v1974
        %v5074 = vmul.f32 %v1979, %v1979
        %v5075 = vmul.f32 %v1984, %v1984
        %v5076 = vmul.f32 %v1989, %v1989
        %v5077 = vmul.f32 %v1994, %v1994
        %v5078 = vmul.f32 %v1999, %v1999
        %v5079 = vmul.f32 %v2004, %v2004
        %v5080 = vmul.f32 %v2009, %v2009
        %v5081 = vmul.f32 %v2014, %v2014
        %v5082 = vmul.f32 %v2019, %v2019
        %v5083 = vmul.f32 %v2024, %v2024
        %v5084 = vmul.f32 %v2029, %v2029
        %v5085 = vmul.f32 %v2034, %v2034
        %v5086 = vmul.f32 %v2039, %v2039
        %v5087 = vmul.f32 %v2044, %v2044
        %v5088 = vmul.f32 %v2049, %v2049
        %v5089 = vmul.f32 %v2054, %v2054
        %v5090 = vmul.f32 %v2059, %v2059
        %v5091 = vmul.f32 %v2064, %v2064
        %v5092 = vmul.f32 %v2069, %v2069
        %v5093 = vmul.f32 %v2074, %v2074
        %v5094 = vmul.f32 %v2079, %v2079
        %v5095 = vmul.f32 %v2084, %v2084
        %v5096 = vmul.f32 %v2089, %v2089
        %v5097 = vmul.f32 %v2094, %v2094
        %v5098 = vmul.f32 %v2099, %v2099
        %v5099 = vmul.f32 %v2104, %v2104
        %v5100 = vmul.f32 %v2109, %v2109
        %v5101 = vmul.f32 %v2114, %v2114
        %v5102 = vmul.f32 %v2119, %v2119
        %v5103 = vmul.f32 %v2124, %v2124
        %v5104 = vsel %vm2127, %v4896, 0.0
        %v5105 = vsel %vm2127, %v4897, 0.0
        %v5106 = vadd.f32 %v5104, %v5105
        %v5107 = vsel %vm2127, %v4898, 0.0
        %v5108 = vadd.f32 %v5106, %v5107
        %v5109 = vsel %vm2127, %v4899, 0.0
        %v5110 = vadd.f32 %v5108, %v5109
        %v5111 = vsel %vm2127, %v4900, 0.0
        %v5112 = vadd.f32 %v5110, %v5111
        %v5113 = vsel %vm2127, %v4901, 0.0
        %v5114 = vadd.f32 %v5112, %v5113
        %v5115 = vsel %vm2127, %v4902, 0.0
        %v5116 = vadd.f32 %v5114, %v5115
        %v5117 = vsel %vm2127, %v4903, 0.0
        %v5118 = vadd.f32 %v5116, %v5117
        %v5119 = vsel %vm2127, %v4904, 0.0
        %v5120 = vadd.f32 %v5118, %v5119
        %v5121 = vsel %vm2127, %v4905, 0.0
        %v5122 = vadd.f32 %v5120, %v5121
        %v5123 = vsel %vm2127, %v4906, 0.0
        %v5124 = vadd.f32 %v5122, %v5123
        %v5125 = vsel %vm2127, %v4907, 0.0
        %v5126 = vadd.f32 %v5124, %v5125
        %v5127 = vsel %vm2127, %v4908, 0.0
        %v5128 = vadd.f32 %v5126, %v5127
        %v5129 = vsel %vm2127, %v4909, 0.0
        %v5130 = vadd.f32 %v5128, %v5129
        %v5131 = vsel %vm2127, %v4910, 0.0
        %v5132 = vadd.f32 %v5130, %v5131
        %v5133 = vsel %vm2127, %v4911, 0.0
        %v5134 = vadd.f32 %v5132, %v5133
        %v5135 = vsel %vm2127, %v4912, 0.0
        %v5136 = vadd.f32 %v5134, %v5135
        %v5137 = vsel %vm2127, %v4913, 0.0
        %v5138 = vadd.f32 %v5136, %v5137
        %v5139 = vsel %vm2127, %v4914, 0.0
        %v5140 = vadd.f32 %v5138, %v5139
        %v5141 = vsel %vm2127, %v4915, 0.0
        %v5142 = vadd.f32 %v5140, %v5141
        %v5143 = vsel %vm2127, %v4916, 0.0
        %v5144 = vadd.f32 %v5142, %v5143
        %v5145 = vsel %vm2127, %v4917, 0.0
        %v5146 = vadd.f32 %v5144, %v5145
        %v5147 = vsel %vm2127, %v4918, 0.0
        %v5148 = vadd.f32 %v5146, %v5147
        %v5149 = vsel %vm2127, %v4919, 0.0
        %v5150 = vadd.f32 %v5148, %v5149
        %v5151 = vsel %vm2127, %v4920, 0.0
        %v5152 = vadd.f32 %v5150, %v5151
        %v5153 = vsel %vm2127, %v4921, 0.0
        %v5154 = vadd.f32 %v5152, %v5153
        %v5155 = vsel %vm2127, %v4922, 0.0
        %v5156 = vadd.f32 %v5154, %v5155
        %v5157 = vsel %vm2127, %v4923, 0.0
        %v5158 = vadd.f32 %v5156, %v5157
        %v5159 = vsel %vm2127, %v4924, 0.0
        %v5160 = vadd.f32 %v5158, %v5159
        %v5161 = vsel %vm2127, %v4925, 0.0
        %v5162 = vadd.f32 %v5160, %v5161
        %v5163 = vsel %vm2127, %v4926, 0.0
        %v5164 = vadd.f32 %v5162, %v5163
        %v5165 = vsel %vm2127, %v4927, 0.0
        %v5166 = vadd.f32 %v5164, %v5165
        %v5167 = vsel %vm2127, %v4928, 0.0
        %v5168 = vadd.f32 %v5166, %v5167
        %v5169 = vsel %vm2127, %v4929, 0.0
        %v5170 = vadd.f32 %v5168, %v5169
        %v5171 = vsel %vm2127, %v4930, 0.0
        %v5172 = vadd.f32 %v5170, %v5171
        %v5173 = vsel %vm2127, %v4931, 0.0
        %v5174 = vadd.f32 %v5172, %v5173
        %v5175 = vsel %vm2127, %v4932, 0.0
        %v5176 = vadd.f32 %v5174, %v5175
        %v5177 = vsel %vm2127, %v4933, 0.0
        %v5178 = vadd.f32 %v5176, %v5177
        %v5179 = vsel %vm2127, %v4934, 0.0
        %v5180 = vadd.f32 %v5178, %v5179
        %v5181 = vsel %vm2127, %v4935, 0.0
        %v5182 = vadd.f32 %v5180, %v5181
        %v5183 = vsel %vm2127, %v4936, 0.0
        %v5184 = vadd.f32 %v5182, %v5183
        %v5185 = vsel %vm2127, %v4937, 0.0
        %v5186 = vadd.f32 %v5184, %v5185
        %v5187 = vsel %vm2127, %v4938, 0.0
        %v5188 = vadd.f32 %v5186, %v5187
        %v5189 = vsel %vm2127, %v4939, 0.0
        %v5190 = vadd.f32 %v5188, %v5189
        %v5191 = vsel %vm2127, %v4940, 0.0
        %v5192 = vadd.f32 %v5190, %v5191
        %v5193 = vsel %vm2127, %v4941, 0.0
        %v5194 = vadd.f32 %v5192, %v5193
        %v5195 = vsel %vm2127, %v4942, 0.0
        %v5196 = vadd.f32 %v5194, %v5195
        %v5197 = vsel %vm2127, %v4943, 0.0
        %v5198 = vadd.f32 %v5196, %v5197
        %v5199 = vsel %vm2127, %v4944, 0.0
        %v5200 = vadd.f32 %v5198, %v5199
        %v5201 = vsel %vm2127, %v4945, 0.0
        %v5202 = vadd.f32 %v5200, %v5201
        %v5203 = vsel %vm2127, %v4946, 0.0
        %v5204 = vadd.f32 %v5202, %v5203
        %v5205 = vsel %vm2127, %v4947, 0.0
        %v5206 = vadd.f32 %v5204, %v5205
        %v5207 = vsel %vm2127, %v4948, 0.0
        %v5208 = vadd.f32 %v5206, %v5207
        %v5209 = vsel %vm2127, %v4949, 0.0
        %v5210 = vadd.f32 %v5208, %v5209
        %v5211 = vsel %vm2127, %v4950, 0.0
        %v5212 = vadd.f32 %v5210, %v5211
        %v5213 = vsel %vm2127, %v4951, 0.0
        %v5214 = vadd.f32 %v5212, %v5213
        %v5215 = vsel %vm2127, %v4952, 0.0
        %v5216 = vadd.f32 %v5214, %v5215
        %v5217 = vsel %vm2127, %v4953, 0.0
        %v5218 = vadd.f32 %v5216, %v5217
        %v5219 = vsel %vm2127, %v4954, 0.0
        %v5220 = vadd.f32 %v5218, %v5219
        %v5221 = vsel %vm2127, %v4955, 0.0
        %v5222 = vadd.f32 %v5220, %v5221
        %v5223 = vsel %vm2127, %v4956, 0.0
        %v5224 = vadd.f32 %v5222, %v5223
        %v5225 = vsel %vm2127, %v4957, 0.0
        %v5226 = vadd.f32 %v5224, %v5225
        %v5227 = vsel %vm2127, %v4958, 0.0
        %v5228 = vadd.f32 %v5226, %v5227
        %v5229 = vsel %vm2127, %v4959, 0.0
        %v5230 = vadd.f32 %v5228, %v5229
        %v5231 = vsel %vm2127, %v4960, 0.0
        %v5232 = vadd.f32 %v5230, %v5231
        %v5233 = vsel %vm2127, %v4961, 0.0
        %v5234 = vadd.f32 %v5232, %v5233
        %v5235 = vsel %vm2127, %v4962, 0.0
        %v5236 = vadd.f32 %v5234, %v5235
        %v5237 = vsel %vm2127, %v4963, 0.0
        %v5238 = vadd.f32 %v5236, %v5237
        %v5239 = vsel %vm2127, %v4964, 0.0
        %v5240 = vadd.f32 %v5238, %v5239
        %v5241 = vsel %vm2127, %v4965, 0.0
        %v5242 = vadd.f32 %v5240, %v5241
        %v5243 = vsel %vm2127, %v4966, 0.0
        %v5244 = vadd.f32 %v5242, %v5243
        %v5245 = vsel %vm2127, %v4967, 0.0
        %v5246 = vadd.f32 %v5244, %v5245
        %v5247 = vsel %vm2127, %v4968, 0.0
        %v5248 = vadd.f32 %v5246, %v5247
        %v5249 = vsel %vm2127, %v4969, 0.0
        %v5250 = vadd.f32 %v5248, %v5249
        %v5251 = vsel %vm2127, %v4970, 0.0
        %v5252 = vadd.f32 %v5250, %v5251
        %v5253 = vsel %vm2127, %v4971, 0.0
        %v5254 = vadd.f32 %v5252, %v5253
        %v5255 = vsel %vm2127, %v4972, 0.0
        %v5256 = vadd.f32 %v5254, %v5255
        %v5257 = vsel %vm2127, %v4973, 0.0
        %v5258 = vadd.f32 %v5256, %v5257
        %v5259 = vsel %vm2127, %v4974, 0.0
        %v5260 = vadd.f32 %v5258, %v5259
        %v5261 = vsel %vm2127, %v4975, 0.0
        %v5262 = vadd.f32 %v5260, %v5261
        %v5263 = vsel %vm2127, %v4976, 0.0
        %v5264 = vadd.f32 %v5262, %v5263
        %v5265 = vsel %vm2127, %v4977, 0.0
        %v5266 = vadd.f32 %v5264, %v5265
        %v5267 = vsel %vm2127, %v4978, 0.0
        %v5268 = vadd.f32 %v5266, %v5267
        %v5269 = vsel %vm2127, %v4979, 0.0
        %v5270 = vadd.f32 %v5268, %v5269
        %v5271 = vsel %vm2127, %v4980, 0.0
        %v5272 = vadd.f32 %v5270, %v5271
        %v5273 = vsel %vm2127, %v4981, 0.0
        %v5274 = vadd.f32 %v5272, %v5273
        %v5275 = vsel %vm2127, %v4982, 0.0
        %v5276 = vadd.f32 %v5274, %v5275
        %v5277 = vsel %vm2127, %v4983, 0.0
        %v5278 = vadd.f32 %v5276, %v5277
        %v5279 = vsel %vm2127, %v4984, 0.0
        %v5280 = vadd.f32 %v5278, %v5279
        %v5281 = vsel %vm2127, %v4985, 0.0
        %v5282 = vadd.f32 %v5280, %v5281
        %v5283 = vsel %vm2127, %v4986, 0.0
        %v5284 = vadd.f32 %v5282, %v5283
        %v5285 = vsel %vm2127, %v4987, 0.0
        %v5286 = vadd.f32 %v5284, %v5285
        %v5287 = vsel %vm2127, %v4988, 0.0
        %v5288 = vadd.f32 %v5286, %v5287
        %v5289 = vsel %vm2127, %v4989, 0.0
        %v5290 = vadd.f32 %v5288, %v5289
        %v5291 = vsel %vm2127, %v4990, 0.0
        %v5292 = vadd.f32 %v5290, %v5291
        %v5293 = vsel %vm2127, %v4991, 0.0
        %v5294 = vadd.f32 %v5292, %v5293
        %v5295 = vsel %vm2127, %v4992, 0.0
        %v5296 = vadd.f32 %v5294, %v5295
        %v5297 = vsel %vm2127, %v4993, 0.0
        %v5298 = vadd.f32 %v5296, %v5297
        %v5299 = vsel %vm2127, %v4994, 0.0
        %v5300 = vadd.f32 %v5298, %v5299
        %v5301 = vsel %vm2127, %v4995, 0.0
        %v5302 = vadd.f32 %v5300, %v5301
        %v5303 = vsel %vm2127, %v4996, 0.0
        %v5304 = vadd.f32 %v5302, %v5303
        %v5305 = vsel %vm2127, %v4997, 0.0
        %v5306 = vadd.f32 %v5304, %v5305
        %v5307 = vsel %vm2127, %v4998, 0.0
        %v5308 = vadd.f32 %v5306, %v5307
        %v5309 = vsel %vm2127, %v4999, 0.0
        %v5310 = vadd.f32 %v5308, %v5309
        %v5311 = vsel %vm2127, %v5000, 0.0
        %v5312 = vadd.f32 %v5310, %v5311
        %v5313 = vsel %vm2127, %v5001, 0.0
        %v5314 = vadd.f32 %v5312, %v5313
        %v5315 = vsel %vm2127, %v5002, 0.0
        %v5316 = vadd.f32 %v5314, %v5315
        %v5317 = vsel %vm2127, %v5003, 0.0
        %v5318 = vadd.f32 %v5316, %v5317
        %v5319 = vsel %vm2127, %v5004, 0.0
        %v5320 = vadd.f32 %v5318, %v5319
        %v5321 = vsel %vm2127, %v5005, 0.0
        %v5322 = vadd.f32 %v5320, %v5321
        %v5323 = vsel %vm2127, %v5006, 0.0
        %v5324 = vadd.f32 %v5322, %v5323
        %v5325 = vsel %vm2127, %v5007, 0.0
        %v5326 = vadd.f32 %v5324, %v5325
        %v5327 = vsel %vm2127, %v5008, 0.0
        %v5328 = vadd.f32 %v5326, %v5327
        %v5329 = vsel %vm2127, %v5009, 0.0
        %v5330 = vadd.f32 %v5328, %v5329
        %v5331 = vsel %vm2127, %v5010, 0.0
        %v5332 = vadd.f32 %v5330, %v5331
        %v5333 = vsel %vm2127, %v5011, 0.0
        %v5334 = vadd.f32 %v5332, %v5333
        %v5335 = vsel %vm2127, %v5012, 0.0
        %v5336 = vadd.f32 %v5334, %v5335
        %v5337 = vsel %vm2127, %v5013, 0.0
        %v5338 = vadd.f32 %v5336, %v5337
        %v5339 = vsel %vm2127, %v5014, 0.0
        %v5340 = vadd.f32 %v5338, %v5339
        %v5341 = vsel %vm2127, %v5015, 0.0
        %v5342 = vadd.f32 %v5340, %v5341
        %v5343 = vsel %vm2127, %v5016, 0.0
        %v5344 = vadd.f32 %v5342, %v5343
        %v5345 = vsel %vm2127, %v5017, 0.0
        %v5346 = vadd.f32 %v5344, %v5345
        %v5347 = vsel %vm2127, %v5018, 0.0
        %v5348 = vadd.f32 %v5346, %v5347
        %v5349 = vsel %vm2127, %v5019, 0.0
        %v5350 = vadd.f32 %v5348, %v5349
        %v5351 = vsel %vm2127, %v5020, 0.0
        %v5352 = vadd.f32 %v5350, %v5351
        %v5353 = vsel %vm2127, %v5021, 0.0
        %v5354 = vadd.f32 %v5352, %v5353
        %v5355 = vsel %vm2127, %v5022, 0.0
        %v5356 = vadd.f32 %v5354, %v5355
        %v5357 = vsel %vm2127, %v5023, 0.0
        %v5358 = vadd.f32 %v5356, %v5357
        %v5359 = vsel %vm2127, %v5024, 0.0
        %v5360 = vadd.f32 %v5358, %v5359
        %v5361 = vsel %vm2127, %v5025, 0.0
        %v5362 = vadd.f32 %v5360, %v5361
        %v5363 = vsel %vm2127, %v5026, 0.0
        %v5364 = vadd.f32 %v5362, %v5363
        %v5365 = vsel %vm2127, %v5027, 0.0
        %v5366 = vadd.f32 %v5364, %v5365
        %v5367 = vsel %vm2127, %v5028, 0.0
        %v5368 = vadd.f32 %v5366, %v5367
        %v5369 = vsel %vm2127, %v5029, 0.0
        %v5370 = vadd.f32 %v5368, %v5369
        %v5371 = vsel %vm2127, %v5030, 0.0
        %v5372 = vadd.f32 %v5370, %v5371
        %v5373 = vsel %vm2127, %v5031, 0.0
        %v5374 = vadd.f32 %v5372, %v5373
        %v5375 = vsel %vm2127, %v5032, 0.0
        %v5376 = vadd.f32 %v5374, %v5375
        %v5377 = vsel %vm2127, %v5033, 0.0
        %v5378 = vadd.f32 %v5376, %v5377
        %v5379 = vsel %vm2127, %v5034, 0.0
        %v5380 = vadd.f32 %v5378, %v5379
        %v5381 = vsel %vm2127, %v5035, 0.0
        %v5382 = vadd.f32 %v5380, %v5381
        %v5383 = vsel %vm2127, %v5036, 0.0
        %v5384 = vadd.f32 %v5382, %v5383
        %v5385 = vsel %vm2127, %v5037, 0.0
        %v5386 = vadd.f32 %v5384, %v5385
        %v5387 = vsel %vm2127, %v5038, 0.0
        %v5388 = vadd.f32 %v5386, %v5387
        %v5389 = vsel %vm2127, %v5039, 0.0
        %v5390 = vadd.f32 %v5388, %v5389
        %v5391 = vsel %vm2127, %v5040, 0.0
        %v5392 = vadd.f32 %v5390, %v5391
        %v5393 = vsel %vm2127, %v5041, 0.0
        %v5394 = vadd.f32 %v5392, %v5393
        %v5395 = vsel %vm2127, %v5042, 0.0
        %v5396 = vadd.f32 %v5394, %v5395
        %v5397 = vsel %vm2127, %v5043, 0.0
        %v5398 = vadd.f32 %v5396, %v5397
        %v5399 = vsel %vm2127, %v5044, 0.0
        %v5400 = vadd.f32 %v5398, %v5399
        %v5401 = vsel %vm2127, %v5045, 0.0
        %v5402 = vadd.f32 %v5400, %v5401
        %v5403 = vsel %vm2127, %v5046, 0.0
        %v5404 = vadd.f32 %v5402, %v5403
        %v5405 = vsel %vm2127, %v5047, 0.0
        %v5406 = vadd.f32 %v5404, %v5405
        %v5407 = vsel %vm2127, %v5048, 0.0
        %v5408 = vadd.f32 %v5406, %v5407
        %v5409 = vsel %vm2127, %v5049, 0.0
        %v5410 = vadd.f32 %v5408, %v5409
        %v5411 = vsel %vm2127, %v5050, 0.0
        %v5412 = vadd.f32 %v5410, %v5411
        %v5413 = vsel %vm2127, %v5051, 0.0
        %v5414 = vadd.f32 %v5412, %v5413
        %v5415 = vsel %vm2127, %v5052, 0.0
        %v5416 = vadd.f32 %v5414, %v5415
        %v5417 = vsel %vm2127, %v5053, 0.0
        %v5418 = vadd.f32 %v5416, %v5417
        %v5419 = vsel %vm2127, %v5054, 0.0
        %v5420 = vadd.f32 %v5418, %v5419
        %v5421 = vsel %vm2127, %v5055, 0.0
        %v5422 = vadd.f32 %v5420, %v5421
        %v5423 = vsel %vm2127, %v5056, 0.0
        %v5424 = vadd.f32 %v5422, %v5423
        %v5425 = vsel %vm2127, %v5057, 0.0
        %v5426 = vadd.f32 %v5424, %v5425
        %v5427 = vsel %vm2127, %v5058, 0.0
        %v5428 = vadd.f32 %v5426, %v5427
        %v5429 = vsel %vm2127, %v5059, 0.0
        %v5430 = vadd.f32 %v5428, %v5429
        %v5431 = vsel %vm2127, %v5060, 0.0
        %v5432 = vadd.f32 %v5430, %v5431
        %v5433 = vsel %vm2127, %v5061, 0.0
        %v5434 = vadd.f32 %v5432, %v5433
        %v5435 = vsel %vm2127, %v5062, 0.0
        %v5436 = vadd.f32 %v5434, %v5435
        %v5437 = vsel %vm2127, %v5063, 0.0
        %v5438 = vadd.f32 %v5436, %v5437
        %v5439 = vsel %vm2127, %v5064, 0.0
        %v5440 = vadd.f32 %v5438, %v5439
        %v5441 = vsel %vm2127, %v5065, 0.0
        %v5442 = vadd.f32 %v5440, %v5441
        %v5443 = vsel %vm2127, %v5066, 0.0
        %v5444 = vadd.f32 %v5442, %v5443
        %v5445 = vsel %vm2127, %v5067, 0.0
        %v5446 = vadd.f32 %v5444, %v5445
        %v5447 = vsel %vm2127, %v5068, 0.0
        %v5448 = vadd.f32 %v5446, %v5447
        %v5449 = vsel %vm2127, %v5069, 0.0
        %v5450 = vadd.f32 %v5448, %v5449
        %v5451 = vsel %vm2127, %v5070, 0.0
        %v5452 = vadd.f32 %v5450, %v5451
        %v5453 = vsel %vm2127, %v5071, 0.0
        %v5454 = vadd.f32 %v5452, %v5453
        %v5455 = vsel %vm2127, %v5072, 0.0
        %v5456 = vadd.f32 %v5454, %v5455
        %v5457 = vsel %vm2127, %v5073, 0.0
        %v5458 = vadd.f32 %v5456, %v5457
        %v5459 = vsel %vm2127, %v5074, 0.0
        %v5460 = vadd.f32 %v5458, %v5459
        %v5461 = vsel %vm2127, %v5075, 0.0
        %v5462 = vadd.f32 %v5460, %v5461
        %v5463 = vsel %vm2127, %v5076, 0.0
        %v5464 = vadd.f32 %v5462, %v5463
        %v5465 = vsel %vm2127, %v5077, 0.0
        %v5466 = vadd.f32 %v5464, %v5465
        %v5467 = vsel %vm2127, %v5078, 0.0
        %v5468 = vadd.f32 %v5466, %v5467
        %v5469 = vsel %vm2127, %v5079, 0.0
        %v5470 = vadd.f32 %v5468, %v5469
        %v5471 = vsel %vm2127, %v5080, 0.0
        %v5472 = vadd.f32 %v5470, %v5471
        %v5473 = vsel %vm2127, %v5081, 0.0
        %v5474 = vadd.f32 %v5472, %v5473
        %v5475 = vsel %vm2127, %v5082, 0.0
        %v5476 = vadd.f32 %v5474, %v5475
        %v5477 = vsel %vm2127, %v5083, 0.0
        %v5478 = vadd.f32 %v5476, %v5477
        %v5479 = vsel %vm2127, %v5084, 0.0
        %v5480 = vadd.f32 %v5478, %v5479
        %v5481 = vsel %vm2127, %v5085, 0.0
        %v5482 = vadd.f32 %v5480, %v5481
        %v5483 = vsel %vm2127, %v5086, 0.0
        %v5484 = vadd.f32 %v5482, %v5483
        %v5485 = vsel %vm2127, %v5087, 0.0
        %v5486 = vadd.f32 %v5484, %v5485
        %v5487 = vsel %vm2127, %v5088, 0.0
        %v5488 = vadd.f32 %v5486, %v5487
        %v5489 = vsel %vm2127, %v5089, 0.0
        %v5490 = vadd.f32 %v5488, %v5489
        %v5491 = vsel %vm2127, %v5090, 0.0
        %v5492 = vadd.f32 %v5490, %v5491
        %v5493 = vsel %vm2127, %v5091, 0.0
        %v5494 = vadd.f32 %v5492, %v5493
        %v5495 = vsel %vm2127, %v5092, 0.0
        %v5496 = vadd.f32 %v5494, %v5495
        %v5497 = vsel %vm2127, %v5093, 0.0
        %v5498 = vadd.f32 %v5496, %v5497
        %v5499 = vsel %vm2127, %v5094, 0.0
        %v5500 = vadd.f32 %v5498, %v5499
        %v5501 = vsel %vm2127, %v5095, 0.0
        %v5502 = vadd.f32 %v5500, %v5501
        %v5503 = vsel %vm2127, %v5096, 0.0
        %v5504 = vadd.f32 %v5502, %v5503
        %v5505 = vsel %vm2127, %v5097, 0.0
        %v5506 = vadd.f32 %v5504, %v5505
        %v5507 = vsel %vm2127, %v5098, 0.0
        %v5508 = vadd.f32 %v5506, %v5507
        %v5509 = vsel %vm2127, %v5099, 0.0
        %v5510 = vadd.f32 %v5508, %v5509
        %v5511 = vsel %vm2127, %v5100, 0.0
        %v5512 = vadd.f32 %v5510, %v5511
        %v5513 = vsel %vm2127, %v5101, 0.0
        %v5514 = vadd.f32 %v5512, %v5513
        %v5515 = vsel %vm2127, %v5102, 0.0
        %v5516 = vadd.f32 %v5514, %v5515
        %v5517 = vsel %vm2127, %v5103, 0.0
        %v5518 = vadd.f32 %v5516, %v5517
        %v5519 = vrot.slane %v5518, 4
        %v5520 = vadd.f32 %v5518, %v5519
        %v5521 = vrot.slane %v5520, 2
        %v5522 = vadd.f32 %v5520, %v5521
        %v5523 = vrot.slane %v5522, 1
        %v5524 = vadd.f32 %v5522, %v5523
        %5526 = vrot.lane.b32.xlu0 %v5524, 64
        %v5527 = vpop.permute.xlu0 %5526
        %v5529 = vsel %vm2127, %v4895, %v5527
        %5530 = vst [vmem:[%s176] sm:$0x1] %v5529
        %s5531 = sand.u32 %s76, 1
        %s5532 = scalar_lea.sflag [#allocation3], %s5531
        %s5533 = sand.u32 %s76, 1
        %s5534 = smul.addr %s5533, 104
        %s5535 = scalar_lea.vmem [#allocation2], %s5534
        %s5536 = sand.u32 %s102, 1
        %s5537 = scalar_lea.sflag [#allocation5], %s5536
        %s5538 = sand.u32 %s102, 1
        %s5539 = scalar_lea.vmem [#allocation4], %s5538
        // Predicated region
        $region29: #{tpu_custom_call.1} parent=27 // pred_check
          %p5540 = pneg %p86
        $region30: #{tpu_custom_call.1} parent=27 // pred_check_branch
          %5542 = sbr.rel (%p5540) target = $region32
        $region31: #{tpu_custom_call.1} parent=27 // pred_region
          %s5543 = smul.u32 13, %s21
          %s5545 = ssub.s32 1664, 1664
          %5546 = vsyncadd %s5532, %s5545
          %s5547 = smul.addr %s5543, 128
          %s5548 = scalar_lea.hbm %s2, %s5547
          %s5549 = sshll.u32 %s5535, 4
          %s5550 = int_to_ptr.vmem [resolvable:$true] %s5549
          %5555 = dma.vmem_to_hbm [thread:$0]  %s5550, 1664, %s5548, %s5532, 128, 128, 8
        $region32: #{tpu_custom_call.1} parent=27 // pred_fallthru
          _
        // Predicated region
        $region33: #{tpu_custom_call.1} parent=27 // pred_check
          %p5556 = pneg %p112
        $region34: #{tpu_custom_call.1} parent=27 // pred_check_branch
          %5558 = sbr.rel (%p5556) target = $region36
        $region35: #{tpu_custom_call.1} parent=27 // pred_region
          %s5560 = ssub.s32 16, 16
          %5561 = vsyncadd %s5537, %s5560
          %s5562 = smul.addr %s21, 16
          %s5563 = scalar_lea.hbm %s3, %s5562
          %s5565 = sshll.u32 %s5539, 4
          %s5566 = int_to_ptr.vmem [resolvable:$true] %s5565
          %5568 = dma.vmem_to_hbm [thread:$0]  %s5566, 16, %s5563, %s5537
        $region36: #{tpu_custom_call.1} parent=27 // pred_fallthru
          _
      $region28: #{tpu_custom_call.1} parent=5 // pred_fallthru
        _
      %p5569 = scmp.le.s32.totalorder 2, %s16
      // Predicated region
      $region37: #{tpu_custom_call.1} parent=5 // pred_check
        %p5570 = pneg %p5569
      $region38: #{tpu_custom_call.1} parent=5 // pred_check_branch
        %5572 = sbr.rel (%p5570) target = $region40
      $region39: #{tpu_custom_call.1} parent=5 // pred_region
        %s5573 = ssub.s32 %s16, 2
        // Predicated region
        $region41: #{tpu_custom_call.1} parent=39 // pred_check
          %p5574 = pneg %p92
        $region42: #{tpu_custom_call.1} parent=39 // pred_check_branch
          %5576 = sbr.rel (%p5574) target = $region44
        $region43: #{tpu_custom_call.1} parent=39 // pred_region
          %s5577 = sand.u32 %s77, 1
          %s5578 = scalar_lea.sflag [#allocation3], %s5577
          %s5579 = sand.u32 %s77, 1
          %s5580 = smul.addr %s5579, 104
          %s5581 = scalar_lea.vmem [#allocation2], %s5580
          %5582 = dma.done %s5578, 1664
        $region44: #{tpu_custom_call.1} parent=39 // pred_fallthru
          _
        // Predicated region
        $region45: #{tpu_custom_call.1} parent=39 // pred_check
          %p5583 = pneg %p118
        $region46: #{tpu_custom_call.1} parent=39 // pred_check_branch
          %5585 = sbr.rel (%p5583) target = $region48
        $region47: #{tpu_custom_call.1} parent=39 // pred_region
          %s5586 = sand.u32 %s103, 1
          %s5587 = scalar_lea.sflag [#allocation5], %s5586
          %s5588 = sand.u32 %s103, 1
          %s5589 = scalar_lea.vmem [#allocation4], %s5588
          %5590 = dma.done %s5587, 16
        $region48: #{tpu_custom_call.1} parent=39 // pred_fallthru
          _
      $region40: #{tpu_custom_call.1} parent=5 // pred_fallthru
        _
    $region6: #{tpu_custom_call.1} parent=1 // loop_footer
      %s20 = sadd.s32 1, %s16
    $region7: #{tpu_custom_call.1} parent=1 // loop_footer_branch
      %15 = sbr.rel target = $region3
    $region8: #{tpu_custom_call.1} parent=1 // loop_exit
      _
    %5591 = vsyncpa [#allocation3], 1
    %s5592 = scalar_lea.sflag [#allocation3], 1
    %5593 = vsyncpa %s5592, 1
    %5594 = vsyncpa [#allocation5], 1
    %s5595 = scalar_lea.sflag [#allocation5], 1
    %5596 = vsyncpa %s5595, 1

</llo_original>
